<compile_context>
chip_gen: v7x
topology: tpu7x:2x2x1
jax: 0.10.0
libtpu: 0.0.40
codegen_flags: <defaults>
</compile_context>

<pallas_src>
import math
import jax
import jax.numpy as jnp
from jax.experimental import pallas as pl
from jax.experimental.pallas import tpu as pltpu

IN_FEATURES = 4096
OUT_FEATURES = 4096
TILE_N = 512  # 8 grid steps; even -> clean 2-TensorCore split on v7x


def linear_relu_kernel(x_ref, w_ref, o_ref):
    # x_ref: (M, K) f32, resident across the whole grid (constant index map).
    # w_ref: (K, tn) bf16 contiguous slab (pre-tiled at init).
    # Single-shot matmul over the full K dimension for this N tile.
    w = w_ref[...].astype(jnp.float32)  # VPU cast, fully hidden behind weight DMA
    y = jnp.dot(x_ref[...], w, preferred_element_type=jnp.float32)
    o_ref[...] = jnp.maximum(y, 0.0).astype(o_ref.dtype)  # fused ReLU


def linear_relu_2d(x2d, w_tiles):
    """x2d: (M, K) f32.  w_tiles: (N//tn, K, tn) bf16 (pre-tiled W^T)."""
    M, K = x2d.shape
    n_tiles, Kw, tn = w_tiles.shape
    assert K == Kw
    N = n_tiles * tn

    cost = pl.CostEstimate(
        flops=2 * M * K * N,
        transcendentals=0,
        bytes_accessed=2 * K * N + 4 * M * K + 4 * M * N,  # bf16 W, f32 x/out
    )

    return pl.pallas_call(
        linear_relu_kernel,
        out_shape=jax.ShapeDtypeStruct((M, N), x2d.dtype),
        grid_spec=pltpu.PrefetchScalarGridSpec(
            num_scalar_prefetch=0,
            grid=(n_tiles,),
            in_specs=[
                # x: full (M, K) block, constant index map -> stays resident.
                pl.BlockSpec((M, K), lambda j: (0, 0)),
                # W^T slab j: contiguous (K, tn) block, leading dim squeezed.
                pl.BlockSpec((None, K, tn), lambda j: (j, 0, 0)),
            ],
            out_specs=pl.BlockSpec((M, tn), lambda j: (0, j)),
        ),
        compiler_params=pltpu.CompilerParams(
            dimension_semantics=("parallel",),
            vmem_limit_bytes=40 << 20,
        ),
        cost_estimate=cost,
    )(x2d, w_tiles)


def init_linear_params(key, in_features, out_features, tn=TILE_N):
    """Deterministic init mimicking torch.nn.Linear(bias=False) defaults
    (kaiming-uniform weight, bound 1/sqrt(fan_in)).

    Returns:
      weight  : (N, K) f32 torch-layout weight (for inspection only)
      w_t     : (K, N) bf16 transposed weight (for the reference check)
      w_tiles : (N//tn, K, tn) bf16, pre-tiled so each grid step's slab is
                contiguous in HBM.  Transpose/cast happen ONCE at init; the
                traced forward never pays for them.
    """
    bound_w = 1.0 / math.sqrt(in_features)  # kaiming_uniform(a=sqrt(5)) bound
    weight = jax.random.uniform(
        key, (out_features, in_features), jnp.float32, -bound_w, bound_w
    )
    w_t = weight.T.astype(jnp.bfloat16)  # (K, N)
    n_tiles = out_features // tn
    w_tiles = jnp.asarray(
        w_t.reshape(in_features, n_tiles, tn).transpose(1, 0, 2)
    )  # (N//tn, K, tn)
    return weight, w_t, w_tiles


def linear_relu_module(x, w_tiles):
    """Full forward matching torch Linear_relu: x (..., 4096) -> (..., 4096)."""
    orig_shape = x.shape
    M = 1
    for d in orig_shape[:-1]:
        M *= d
    x2d = x.reshape(M, orig_shape[-1])
    y2d = linear_relu_2d(x2d, w_tiles)
    n_tiles, _, tn = w_tiles.shape
    return y2d.reshape(*orig_shape[:-1], n_tiles * tn)


if __name__ == "__main__":
    key = jax.random.PRNGKey(0)
    k_x, k_p = jax.random.split(key)

    # small batch/seq; hidden fixed at 4096 by the module definition
    batch, seq = 2, 8
    x = jax.random.normal(k_x, (batch, seq, IN_FEATURES), jnp.float32)

    weight, w_t, w_tiles = init_linear_params(k_p, IN_FEATURES, OUT_FEATURES)

    y = linear_relu_module(x, w_tiles)
    y = jax.block_until_ready(y)

    # Correctness check against plain-JAX reference using the SAME bf16 weight
    # (weight quantization is intentional; tolerance covers MXU bf16-pass
    # rounding differences between the kernel and the XLA reference dot).
    y_ref = jnp.maximum(x @ w_t.astype(jnp.float32), 0.0)
    assert y.shape == (batch, seq, OUT_FEATURES)
    assert jnp.allclose(y, y_ref, atol=2e-2, rtol=2e-2)

    print("KERNEL_OK")
</pallas_src>

<mosaic_0001>
module attributes {stable_mosaic.version = 11 : i64} {
  func.func @linear_relu_kernel(%arg0: i32, %arg1: memref<16x4096xf32, #tpu.memory_space<vmem>>, %arg2: memref<1x4096x512xbf16, #tpu.memory_space<vmem>>, %arg3: memref<16x512xf32, #tpu.memory_space<vmem>>) attributes {dimension_semantics = [#tpu.dimension_semantics<parallel>], iteration_bounds = array<i64: 8>, scalar_prefetch = 0 : i64, scratch_operands = 0 : i64, tpu.core_type = #tpu.core_type<tc>, window_params = [{pipeline_mode = #tpu.pipeline_mode<synchronous>, transform_indices = @transform_0, window_bounds = array<i64: 16, 4096>}, {transform_indices = @transform_1, window_bounds = array<i64: 1, 4096, 512>}, {transform_indices = @transform_2, window_bounds = array<i64: 16, 512>}]} {
    %c0 = arith.constant 0 : index
    %c0_0 = arith.constant 0 : index
    %c0_1 = arith.constant 0 : index
    %0 = vector.load %arg2[%c0, %c0_0, %c0_1] : memref<1x4096x512xbf16, #tpu.memory_space<vmem>>, vector<1x4096x512xbf16>
    %1 = vector.shape_cast %0 : vector<1x4096x512xbf16> to vector<4096x512xbf16>
    %2 = arith.extf %1 : vector<4096x512xbf16> to vector<4096x512xf32>
    %c0_2 = arith.constant 0 : index
    %c0_3 = arith.constant 0 : index
    %3 = vector.load %arg1[%c0_2, %c0_3] : memref<16x4096xf32, #tpu.memory_space<vmem>>, vector<16x4096xf32>
    %cst = arith.constant dense<0.000000e+00> : vector<16x512xf32>
    %4 = tpu.matmul %3, %2, %cst {dimension_numbers = #tpu.dot_dimension_numbers<[1], [0], [0], [1], [0, 0, 1, 1], [], []>} : vector<16x4096xf32>, vector<4096x512xf32>, vector<16x512xf32> -> vector<16x512xf32>
    %cst_4 = arith.constant 0.000000e+00 : f32
    %5 = vector.broadcast %cst_4 : f32 to vector<16x512xf32>
    %6 = arith.maximumf %4, %5 : vector<16x512xf32>
    %c0_5 = arith.constant 0 : index
    %c0_6 = arith.constant 0 : index
    %7 = vector.load %arg3[%c0_5, %c0_6] : memref<16x512xf32, #tpu.memory_space<vmem>>, vector<16x512xf32>
    tpu.vector_store %arg3[%c0_5, %c0_6], %6 {strides = array<i32>} : memref<16x512xf32, #tpu.memory_space<vmem>>, vector<16x512xf32>,
    return
  }
  func.func @transform_0(%arg0: i32) -> (i32, i32) {
    %c0_i32 = arith.constant 0 : i32
    %c0_i32_0 = arith.constant 0 : i32
    %c0_i32_1 = arith.constant 0 : i32
    return %c0_i32, %c0_i32_0 : i32, i32
  }
  func.func @transform_1(%arg0: i32) -> (i32, i32, i32) {
    %c0_i32 = arith.constant 0 : i32
    %c0_i32_0 = arith.constant 0 : i32
    %c0_i32_1 = arith.constant 0 : i32
    return %arg0, %c0_i32, %c0_i32_0 : i32, i32, i32
  }
  func.func @transform_2(%arg0: i32) -> (i32, i32) {
    %c0_i32 = arith.constant 0 : i32
    %c0_i32_0 = arith.constant 0 : i32
    return %c0_i32, %arg0 : i32, i32
  }
}

</mosaic_0001>

<llo_original>
// kernel: tpu_custom_call.1
$region0: #{tpu_custom_call.1}
  #allocation0 [shape = 'u32[]', space=smem, size = 0x4, offset = 0x4, fixed_abs, tag = 'smem constant byte address 0x4 - core index']
  #allocation1 [shape = 'u32[144,128]{1,0:T(1,128)}', space=vmem, size = 0x12000, scoped, tag = 'internal scratch']
  %s0 = inlined_call_operand.hbm [shape: f32[16,4096], index: 0, kind: input, shape index: {}]
  %s1 = inlined_call_operand.hbm [shape: bf16[8,4096,512], index: 1, kind: input, shape index: {}]
  %s2 = inlined_call_operand.hbm [shape: f32[16,4096], index: 2, kind: output, shape index: {}]
  %s3 = sld [smem:[#allocation0]]
  $region49: #{tpu_custom_call.1} parent=0
    _
  %s5 = ssub.s32 1, %s3
  %s6 = scalar_select 0, %s5, %s3
  $region1: #{tpu_custom_call.1} parent=0
    #allocation2 [shape = 'u8[262144]{0}', space=vmem, size = 0x40000, scoped, tag = 'input window, operand 0, single buffered']
    #allocation3 [shape = 's32[2]{0}', space=sflag, size = 0x8, scoped, tag = 'scoped memory for tpu_custom_call.1']
    #allocation4 [shape = 's32[2]{0}', space=sflag, size = 0x8, scoped, tag = 'scoped memory for tpu_custom_call.1']
    #allocation5 [shape = 'u8[8388608]{0}', space=vmem, size = 0x800000, scoped, tag = 'input window, operand 1']
    #allocation6 [shape = 's32[2]{0}', space=sflag, size = 0x8, scoped, tag = 'scoped memory for tpu_custom_call.1']
    #allocation7 [shape = 'u8[65536]{0}', space=vmem, size = 0x10000, scoped, tag = 'output window, operand 0']
    %7 = vsyncpa [#allocation3], 0
    %8 = vsyncpa [#allocation6], 0
    %s9 = scalar_lea.sflag [#allocation6], 1
    %10 = vsyncpa %s9, 0
    %11 = vsyncpa [#allocation4], 0
    %s12 = scalar_lea.sflag [#allocation4], 1
    %13 = vsyncpa %s12, 0
    loop: start=0, step=1, limit=10
    $region2: #{tpu_custom_call.1} parent=1 // loop_pre_header
      _
    $region3: #{tpu_custom_call.1} parent=1 // loop_header
      %s15 = sphi 0, %s19
      %p16 = scmp.ge.s32.totalorder %s15, 10
      %s23 = sphi 0, %s23
      %s25 = sphi 0, %s23
      %s26 = sphi 0, %s25
      %s40 = sphi 0, %s26
      %s46 = sphi 0, %s48
      %s49 = sphi 0, %s46
      %s50 = sphi 0, %s49
      %s66 = sphi 0, %s50
      %s72 = sphi 0, %s74
      %s75 = sphi 0, %s72
      %s76 = sphi 0, %s75
      %s92 = sphi 0, %s76
    $region4: #{tpu_custom_call.1} parent=1 // loop_header_branch
      %18 = sbr.rel (%p16) target = $region8
    $region5: #{tpu_custom_call.1} parent=1 // loop_body
      %s20 = ssub.s32 %s15, 1
      %s21 = ssub.s32 %s15, 2
      %s22 = sadd.s32 %s15, 1
      %s24 = sadd.s32 %s23, 1
      %p27 = scmp.eq.s32.totalorder %s15, 7
      %p28 = scmp.ne.s32.totalorder %s23, %s25
      %p29 = scmp.eq.s32.totalorder %s15, 0
      %p30 = por %p28, %p29
      %p31 = scmp.ne.s32.totalorder %s23, %s25
      %p32 = scmp.eq.s32.totalorder %s20, 7
      %p33 = por %p31, %p32
      %p34 = scmp.ne.s32.totalorder %s25, %s26
      %p35 = scmp.eq.s32.totalorder %s20, 0
      %p36 = por %p34, %p35
      %p37 = scmp.ne.s32.totalorder %s25, %s26
      %p38 = scmp.eq.s32.totalorder %s21, 7
      %p39 = por %p37, %p38
      %p41 = scmp.ne.s32.totalorder %s26, %s40
      %p42 = scmp.eq.s32.totalorder %s21, 0
      %p43 = por %p41, %p42
      %s44 = ssub.s32 %s15, %s22
      %p45 = scmp.eq.s32.totalorder %s44, 0
      %s47 = sadd.s32 %s46, 1
      %s48 = scalar_select %p45, %s46, %s47
      %p51 = pneg %p45
      %p52 = scmp.eq.s32.totalorder %s15, 7
      %p53 = por %p51, %p52
      %p54 = scmp.ne.s32.totalorder %s46, %s49
      %p55 = scmp.eq.s32.totalorder %s15, 0
      %p56 = por %p54, %p55
      %p57 = scmp.ne.s32.totalorder %s46, %s49
      %p58 = scmp.eq.s32.totalorder %s20, 7
      %p59 = por %p57, %p58
      %p60 = scmp.ne.s32.totalorder %s49, %s50
      %p61 = scmp.eq.s32.totalorder %s20, 0
      %p62 = por %p60, %p61
      %p63 = scmp.ne.s32.totalorder %s49, %s50
      %p64 = scmp.eq.s32.totalorder %s21, 7
      %p65 = por %p63, %p64
      %p67 = scmp.ne.s32.totalorder %s50, %s66
      %p68 = scmp.eq.s32.totalorder %s21, 0
      %p69 = por %p67, %p68
      %s70 = ssub.s32 %s15, %s22
      %p71 = scmp.eq.s32.totalorder %s70, 0
      %s73 = sadd.s32 %s72, 1
      %s74 = scalar_select %p71, %s72, %s73
      %p77 = pneg %p71
      %p78 = scmp.eq.s32.totalorder %s15, 7
      %p79 = por %p77, %p78
      %p80 = scmp.ne.s32.totalorder %s72, %s75
      %p81 = scmp.eq.s32.totalorder %s15, 0
      %p82 = por %p80, %p81
      %p83 = scmp.ne.s32.totalorder %s72, %s75
      %p84 = scmp.eq.s32.totalorder %s20, 7
      %p85 = por %p83, %p84
      %p86 = scmp.ne.s32.totalorder %s75, %s76
      %p87 = scmp.eq.s32.totalorder %s20, 0
      %p88 = por %p86, %p87
      %p89 = scmp.ne.s32.totalorder %s75, %s76
      %p90 = scmp.eq.s32.totalorder %s21, 7
      %p91 = por %p89, %p90
      %p93 = scmp.ne.s32.totalorder %s76, %s92
      %p94 = scmp.eq.s32.totalorder %s21, 0
      %p95 = por %p93, %p94
      %p96 = scmp.le.s32.totalorder 1, %s15
      %p97 = scmp.lt.s32.totalorder %s15, 9
      %p98 = pnand %p96, %p97
      %p99 = pneg %p98
      // Predicated region
      $region9: #{tpu_custom_call.1} parent=5 // pred_check
        _
      $region10: #{tpu_custom_call.1} parent=5 // pred_check_branch
        %101 = sbr.rel (%p98) target = $region12
      $region11: #{tpu_custom_call.1} parent=5 // pred_region
        %s102 = ssub.s32 %s15, 1
        // Predicated region
        $region13: #{tpu_custom_call.1} parent=11 // pred_check
          %p103 = pneg %p36
        $region14: #{tpu_custom_call.1} parent=11 // pred_check_branch
          %105 = sbr.rel (%p103) target = $region16
        $region15: #{tpu_custom_call.1} parent=11 // pred_region
          %s107 = ssub.s32 8192, 8192
          %108 = vsyncadd [#allocation3], %s107
          %s109 = sshll.u32 [#allocation2], 4
          %s110 = int_to_ptr.vmem [resolvable:$true] %s109
          %115 = dma.hbm_to_vmem [thread:$0]  %s0, 8192, %s110, [#allocation3], 4096, 4096, 256
        $region16: #{tpu_custom_call.1} parent=11 // pred_fallthru
          _
      $region12: #{tpu_custom_call.1} parent=5 // pred_fallthru
        _
      %p116 = scmp.lt.s32.totalorder %s15, 8
      // Predicated region
      $region17: #{tpu_custom_call.1} parent=5 // pred_check
        %p117 = pneg %p116
      $region18: #{tpu_custom_call.1} parent=5 // pred_check_branch
        %119 = sbr.rel (%p117) target = $region20
      $region19: #{tpu_custom_call.1} parent=5 // pred_region
        // Predicated region
        $region21: #{tpu_custom_call.1} parent=19 // pred_check
          %p120 = pneg %p56
        $region22: #{tpu_custom_call.1} parent=19 // pred_check_branch
          %122 = sbr.rel (%p120) target = $region24
        $region23: #{tpu_custom_call.1} parent=19 // pred_region
          %s123 = sand.u32 %s46, 1
          %s124 = scalar_lea.sflag [#allocation6], %s123
          %s125 = sand.u32 %s46, 1
          %s126 = smul.addr %s125, 8192
          %s127 = scalar_lea.vmem [#allocation5], %s126
          %s129 = ssub.s32 131072, 131072
          %130 = vsyncadd %s124, %s129
          %s131 = smul.addr %s15, 2048
          %s132 = smul.addr %s131, 64
          %s133 = scalar_lea.hbm %s1, %s132
          %s134 = sshll.u32 %s127, 4
          %s135 = int_to_ptr.vmem [resolvable:$true] %s134
          %140 = dma.hbm_to_vmem [thread:$0]  %s133, 131072, %s135, %s124, 256, 256, 16
        $region24: #{tpu_custom_call.1} parent=19 // pred_fallthru
          _
      $region20: #{tpu_custom_call.1} parent=5 // pred_fallthru
        _
      %p141 = scmp.le.s32.totalorder 1, %s15
      %p142 = scmp.lt.s32.totalorder %s15, 9
      %p143 = pnand %p141, %p142
      %p144 = pneg %p143
      // Predicated region
      $region25: #{tpu_custom_call.1} parent=5 // pred_check
        _
      $region26: #{tpu_custom_call.1} parent=5 // pred_check_branch
        %146 = sbr.rel (%p143) target = $region28
      $region27: #{tpu_custom_call.1} parent=5 // pred_region
        %s147 = ssub.s32 %s15, 1
        // Predicated region
        $region29: #{tpu_custom_call.1} parent=27 // pred_check
          %p148 = pneg %p36
        $region30: #{tpu_custom_call.1} parent=27 // pred_check_branch
          %150 = sbr.rel (%p148) target = $region32
        $region31: #{tpu_custom_call.1} parent=27 // pred_region
          %151 = dma.done [#allocation3], 8192
        $region32: #{tpu_custom_call.1} parent=27 // pred_fallthru
          _
        %s152 = sand.u32 %s49, 1
        %s153 = scalar_lea.sflag [#allocation6], %s152
        %s154 = sand.u32 %s49, 1
        %s155 = smul.addr %s154, 8192
        %s156 = scalar_lea.vmem [#allocation5], %s155
        // Predicated region
        $region33: #{tpu_custom_call.1} parent=27 // pred_check
          %p157 = pneg %p62
        $region34: #{tpu_custom_call.1} parent=27 // pred_check_branch
          %159 = sbr.rel (%p157) target = $region36
        $region35: #{tpu_custom_call.1} parent=27 // pred_region
          %160 = dma.done %s153, 131072
        $region36: #{tpu_custom_call.1} parent=27 // pred_fallthru
          _
        %p161 = pneg %p36
        %p162 = pneg %p33
        %s163 = sand.u32 %s49, 1
        %s164 = scalar_lea.sflag [#allocation6], %s163
        %s165 = sand.u32 %s49, 1
        %s166 = smul.addr %s165, 8192
        %s167 = scalar_lea.vmem [#allocation5], %s166
        %p168 = pneg %p62
        %p169 = pneg %p59
        %p170 = pneg %p88
        %p171 = pneg %p85
        %s172 = sand.u32 %s75, 1
        %s173 = scalar_lea.sflag [#allocation4], %s172
        %s174 = sand.u32 %s75, 1
        %s175 = smul.addr %s174, 64
        %s176 = scalar_lea.vmem [#allocation7], %s175
        %s177 = smul.u32 4, %s20
        %v178 = vld [vmem:[%s156] sm:$0xff]
        %v179 = vld [vmem:[%s156 + $0x8] sm:$0xff]
        %v180 = vld [vmem:[%s156 + $0x10] sm:$0xff]
        %v181 = vld [vmem:[%s156 + $0x18] sm:$0xff]
        %v182 = vld [vmem:[%s156 + $0x20] sm:$0xff]
        %v183 = vld [vmem:[%s156 + $0x28] sm:$0xff]
        %v184 = vld [vmem:[%s156 + $0x30] sm:$0xff]
        %v185 = vld [vmem:[%s156 + $0x38] sm:$0xff]
        %v186 = vld [vmem:[%s156 + $0x40] sm:$0xff]
        %v187 = vld [vmem:[%s156 + $0x48] sm:$0xff]
        %v188 = vld [vmem:[%s156 + $0x50] sm:$0xff]
        %v189 = vld [vmem:[%s156 + $0x58] sm:$0xff]
        %v190 = vld [vmem:[%s156 + $0x60] sm:$0xff]
        %v191 = vld [vmem:[%s156 + $0x68] sm:$0xff]
        %v192 = vld [vmem:[%s156 + $0x70] sm:$0xff]
        %v193 = vld [vmem:[%s156 + $0x78] sm:$0xff]
        %v194 = vld [vmem:[%s156 + $0x80] sm:$0xff]
        %v195 = vld [vmem:[%s156 + $0x88] sm:$0xff]
        %v196 = vld [vmem:[%s156 + $0x90] sm:$0xff]
        %v197 = vld [vmem:[%s156 + $0x98] sm:$0xff]
        %v198 = vld [vmem:[%s156 + $0xa0] sm:$0xff]
        %v199 = vld [vmem:[%s156 + $0xa8] sm:$0xff]
        %v200 = vld [vmem:[%s156 + $0xb0] sm:$0xff]
        %v201 = vld [vmem:[%s156 + $0xb8] sm:$0xff]
        %v202 = vld [vmem:[%s156 + $0xc0] sm:$0xff]
        %v203 = vld [vmem:[%s156 + $0xc8] sm:$0xff]
        %v204 = vld [vmem:[%s156 + $0xd0] sm:$0xff]
        %v205 = vld [vmem:[%s156 + $0xd8] sm:$0xff]
        %v206 = vld [vmem:[%s156 + $0xe0] sm:$0xff]
        %v207 = vld [vmem:[%s156 + $0xe8] sm:$0xff]
        %v208 = vld [vmem:[%s156 + $0xf0] sm:$0xff]
        %v209 = vld [vmem:[%s156 + $0xf8] sm:$0xff]
        %v210 = vld [vmem:[%s156 + $0x100] sm:$0xff]
        %v211 = vld [vmem:[%s156 + $0x108] sm:$0xff]
        %v212 = vld [vmem:[%s156 + $0x110] sm:$0xff]
        %v213 = vld [vmem:[%s156 + $0x118] sm:$0xff]
        %v214 = vld [vmem:[%s156 + $0x120] sm:$0xff]
        %v215 = vld [vmem:[%s156 + $0x128] sm:$0xff]
        %v216 = vld [vmem:[%s156 + $0x130] sm:$0xff]
        %v217 = vld [vmem:[%s156 + $0x138] sm:$0xff]
        %v218 = vld [vmem:[%s156 + $0x140] sm:$0xff]
        %v219 = vld [vmem:[%s156 + $0x148] sm:$0xff]
        %v220 = vld [vmem:[%s156 + $0x150] sm:$0xff]
        %v221 = vld [vmem:[%s156 + $0x158] sm:$0xff]
        %v222 = vld [vmem:[%s156 + $0x160] sm:$0xff]
        %v223 = vld [vmem:[%s156 + $0x168] sm:$0xff]
        %v224 = vld [vmem:[%s156 + $0x170] sm:$0xff]
        %v225 = vld [vmem:[%s156 + $0x178] sm:$0xff]
        %v226 = vld [vmem:[%s156 + $0x180] sm:$0xff]
        %v227 = vld [vmem:[%s156 + $0x188] sm:$0xff]
        %v228 = vld [vmem:[%s156 + $0x190] sm:$0xff]
        %v229 = vld [vmem:[%s156 + $0x198] sm:$0xff]
        %v230 = vld [vmem:[%s156 + $0x1a0] sm:$0xff]
        %v231 = vld [vmem:[%s156 + $0x1a8] sm:$0xff]
        %v232 = vld [vmem:[%s156 + $0x1b0] sm:$0xff]
        %v233 = vld [vmem:[%s156 + $0x1b8] sm:$0xff]
        %v234 = vld [vmem:[%s156 + $0x1c0] sm:$0xff]
        %v235 = vld [vmem:[%s156 + $0x1c8] sm:$0xff]
        %v236 = vld [vmem:[%s156 + $0x1d0] sm:$0xff]
        %v237 = vld [vmem:[%s156 + $0x1d8] sm:$0xff]
        %v238 = vld [vmem:[%s156 + $0x1e0] sm:$0xff]
        %v239 = vld [vmem:[%s156 + $0x1e8] sm:$0xff]
        %v240 = vld [vmem:[%s156 + $0x1f0] sm:$0xff]
        %v241 = vld [vmem:[%s156 + $0x1f8] sm:$0xff]
        %v242 = vld [vmem:[%s156 + $0x200] sm:$0xff]
        %v243 = vld [vmem:[%s156 + $0x208] sm:$0xff]
        %v244 = vld [vmem:[%s156 + $0x210] sm:$0xff]
        %v245 = vld [vmem:[%s156 + $0x218] sm:$0xff]
        %v246 = vld [vmem:[%s156 + $0x220] sm:$0xff]
        %v247 = vld [vmem:[%s156 + $0x228] sm:$0xff]
        %v248 = vld [vmem:[%s156 + $0x230] sm:$0xff]
        %v249 = vld [vmem:[%s156 + $0x238] sm:$0xff]
        %v250 = vld [vmem:[%s156 + $0x240] sm:$0xff]
        %v251 = vld [vmem:[%s156 + $0x248] sm:$0xff]
        %v252 = vld [vmem:[%s156 + $0x250] sm:$0xff]
        %v253 = vld [vmem:[%s156 + $0x258] sm:$0xff]
        %v254 = vld [vmem:[%s156 + $0x260] sm:$0xff]
        %v255 = vld [vmem:[%s156 + $0x268] sm:$0xff]
        %v256 = vld [vmem:[%s156 + $0x270] sm:$0xff]
        %v257 = vld [vmem:[%s156 + $0x278] sm:$0xff]
        %v258 = vld [vmem:[%s156 + $0x280] sm:$0xff]
        %v259 = vld [vmem:[%s156 + $0x288] sm:$0xff]
        %v260 = vld [vmem:[%s156 + $0x290] sm:$0xff]
        %v261 = vld [vmem:[%s156 + $0x298] sm:$0xff]
        %v262 = vld [vmem:[%s156 + $0x2a0] sm:$0xff]
        %v263 = vld [vmem:[%s156 + $0x2a8] sm:$0xff]
        %v264 = vld [vmem:[%s156 + $0x2b0] sm:$0xff]
        %v265 = vld [vmem:[%s156 + $0x2b8] sm:$0xff]
        %v266 = vld [vmem:[%s156 + $0x2c0] sm:$0xff]
        %v267 = vld [vmem:[%s156 + $0x2c8] sm:$0xff]
        %v268 = vld [vmem:[%s156 + $0x2d0] sm:$0xff]
        %v269 = vld [vmem:[%s156 + $0x2d8] sm:$0xff]
        %v270 = vld [vmem:[%s156 + $0x2e0] sm:$0xff]
        %v271 = vld [vmem:[%s156 + $0x2e8] sm:$0xff]
        %v272 = vld [vmem:[%s156 + $0x2f0] sm:$0xff]
        %v273 = vld [vmem:[%s156 + $0x2f8] sm:$0xff]
        %v274 = vld [vmem:[%s156 + $0x300] sm:$0xff]
        %v275 = vld [vmem:[%s156 + $0x308] sm:$0xff]
        %v276 = vld [vmem:[%s156 + $0x310] sm:$0xff]
        %v277 = vld [vmem:[%s156 + $0x318] sm:$0xff]
        %v278 = vld [vmem:[%s156 + $0x320] sm:$0xff]
        %v279 = vld [vmem:[%s156 + $0x328] sm:$0xff]
        %v280 = vld [vmem:[%s156 + $0x330] sm:$0xff]
        %v281 = vld [vmem:[%s156 + $0x338] sm:$0xff]
        %v282 = vld [vmem:[%s156 + $0x340] sm:$0xff]
        %v283 = vld [vmem:[%s156 + $0x348] sm:$0xff]
        %v284 = vld [vmem:[%s156 + $0x350] sm:$0xff]
        %v285 = vld [vmem:[%s156 + $0x358] sm:$0xff]
        %v286 = vld [vmem:[%s156 + $0x360] sm:$0xff]
        %v287 = vld [vmem:[%s156 + $0x368] sm:$0xff]
        %v288 = vld [vmem:[%s156 + $0x370] sm:$0xff]
        %v289 = vld [vmem:[%s156 + $0x378] sm:$0xff]
        %v290 = vld [vmem:[%s156 + $0x380] sm:$0xff]
        %v291 = vld [vmem:[%s156 + $0x388] sm:$0xff]
        %v292 = vld [vmem:[%s156 + $0x390] sm:$0xff]
        %v293 = vld [vmem:[%s156 + $0x398] sm:$0xff]
        %v294 = vld [vmem:[%s156 + $0x3a0] sm:$0xff]
        %v295 = vld [vmem:[%s156 + $0x3a8] sm:$0xff]
        %v296 = vld [vmem:[%s156 + $0x3b0] sm:$0xff]
        %v297 = vld [vmem:[%s156 + $0x3b8] sm:$0xff]
        %v298 = vld [vmem:[%s156 + $0x3c0] sm:$0xff]
        %v299 = vld [vmem:[%s156 + $0x3c8] sm:$0xff]
        %v300 = vld [vmem:[%s156 + $0x3d0] sm:$0xff]
        %v301 = vld [vmem:[%s156 + $0x3d8] sm:$0xff]
        %v302 = vld [vmem:[%s156 + $0x3e0] sm:$0xff]
        %v303 = vld [vmem:[%s156 + $0x3e8] sm:$0xff]
        %v304 = vld [vmem:[%s156 + $0x3f0] sm:$0xff]
        %v305 = vld [vmem:[%s156 + $0x3f8] sm:$0xff]
        %v306 = vld [vmem:[%s156 + $0x400] sm:$0xff]
        %v307 = vld [vmem:[%s156 + $0x408] sm:$0xff]
        %v308 = vld [vmem:[%s156 + $0x410] sm:$0xff]
        %v309 = vld [vmem:[%s156 + $0x418] sm:$0xff]
        %v310 = vld [vmem:[%s156 + $0x420] sm:$0xff]
        %v311 = vld [vmem:[%s156 + $0x428] sm:$0xff]
        %v312 = vld [vmem:[%s156 + $0x430] sm:$0xff]
        %v313 = vld [vmem:[%s156 + $0x438] sm:$0xff]
        %v314 = vld [vmem:[%s156 + $0x440] sm:$0xff]
        %v315 = vld [vmem:[%s156 + $0x448] sm:$0xff]
        %v316 = vld [vmem:[%s156 + $0x450] sm:$0xff]
        %v317 = vld [vmem:[%s156 + $0x458] sm:$0xff]
        %v318 = vld [vmem:[%s156 + $0x460] sm:$0xff]
        %v319 = vld [vmem:[%s156 + $0x468] sm:$0xff]
        %v320 = vld [vmem:[%s156 + $0x470] sm:$0xff]
        %v321 = vld [vmem:[%s156 + $0x478] sm:$0xff]
        %v322 = vld [vmem:[%s156 + $0x480] sm:$0xff]
        %v323 = vld [vmem:[%s156 + $0x488] sm:$0xff]
        %v324 = vld [vmem:[%s156 + $0x490] sm:$0xff]
        %v325 = vld [vmem:[%s156 + $0x498] sm:$0xff]
        %v326 = vld [vmem:[%s156 + $0x4a0] sm:$0xff]
        %v327 = vld [vmem:[%s156 + $0x4a8] sm:$0xff]
        %v328 = vld [vmem:[%s156 + $0x4b0] sm:$0xff]
        %v329 = vld [vmem:[%s156 + $0x4b8] sm:$0xff]
        %v330 = vld [vmem:[%s156 + $0x4c0] sm:$0xff]
        %v331 = vld [vmem:[%s156 + $0x4c8] sm:$0xff]
        %v332 = vld [vmem:[%s156 + $0x4d0] sm:$0xff]
        %v333 = vld [vmem:[%s156 + $0x4d8] sm:$0xff]
        %v334 = vld [vmem:[%s156 + $0x4e0] sm:$0xff]
        %v335 = vld [vmem:[%s156 + $0x4e8] sm:$0xff]
        %v336 = vld [vmem:[%s156 + $0x4f0] sm:$0xff]
        %v337 = vld [vmem:[%s156 + $0x4f8] sm:$0xff]
        %v338 = vld [vmem:[%s156 + $0x500] sm:$0xff]
        %v339 = vld [vmem:[%s156 + $0x508] sm:$0xff]
        %v340 = vld [vmem:[%s156 + $0x510] sm:$0xff]
        %v341 = vld [vmem:[%s156 + $0x518] sm:$0xff]
        %v342 = vld [vmem:[%s156 + $0x520] sm:$0xff]
        %v343 = vld [vmem:[%s156 + $0x528] sm:$0xff]
        %v344 = vld [vmem:[%s156 + $0x530] sm:$0xff]
        %v345 = vld [vmem:[%s156 + $0x538] sm:$0xff]
        %v346 = vld [vmem:[%s156 + $0x540] sm:$0xff]
        %v347 = vld [vmem:[%s156 + $0x548] sm:$0xff]
        %v348 = vld [vmem:[%s156 + $0x550] sm:$0xff]
        %v349 = vld [vmem:[%s156 + $0x558] sm:$0xff]
        %v350 = vld [vmem:[%s156 + $0x560] sm:$0xff]
        %v351 = vld [vmem:[%s156 + $0x568] sm:$0xff]
        %v352 = vld [vmem:[%s156 + $0x570] sm:$0xff]
        %v353 = vld [vmem:[%s156 + $0x578] sm:$0xff]
        %v354 = vld [vmem:[%s156 + $0x580] sm:$0xff]
        %v355 = vld [vmem:[%s156 + $0x588] sm:$0xff]
        %v356 = vld [vmem:[%s156 + $0x590] sm:$0xff]
        %v357 = vld [vmem:[%s156 + $0x598] sm:$0xff]
        %v358 = vld [vmem:[%s156 + $0x5a0] sm:$0xff]
        %v359 = vld [vmem:[%s156 + $0x5a8] sm:$0xff]
        %v360 = vld [vmem:[%s156 + $0x5b0] sm:$0xff]
        %v361 = vld [vmem:[%s156 + $0x5b8] sm:$0xff]
        %v362 = vld [vmem:[%s156 + $0x5c0] sm:$0xff]
        %v363 = vld [vmem:[%s156 + $0x5c8] sm:$0xff]
        %v364 = vld [vmem:[%s156 + $0x5d0] sm:$0xff]
        %v365 = vld [vmem:[%s156 + $0x5d8] sm:$0xff]
        %v366 = vld [vmem:[%s156 + $0x5e0] sm:$0xff]
        %v367 = vld [vmem:[%s156 + $0x5e8] sm:$0xff]
        %v368 = vld [vmem:[%s156 + $0x5f0] sm:$0xff]
        %v369 = vld [vmem:[%s156 + $0x5f8] sm:$0xff]
        %v370 = vld [vmem:[%s156 + $0x600] sm:$0xff]
        %v371 = vld [vmem:[%s156 + $0x608] sm:$0xff]
        %v372 = vld [vmem:[%s156 + $0x610] sm:$0xff]
        %v373 = vld [vmem:[%s156 + $0x618] sm:$0xff]
        %v374 = vld [vmem:[%s156 + $0x620] sm:$0xff]
        %v375 = vld [vmem:[%s156 + $0x628] sm:$0xff]
        %v376 = vld [vmem:[%s156 + $0x630] sm:$0xff]
        %v377 = vld [vmem:[%s156 + $0x638] sm:$0xff]
        %v378 = vld [vmem:[%s156 + $0x640] sm:$0xff]
        %v379 = vld [vmem:[%s156 + $0x648] sm:$0xff]
        %v380 = vld [vmem:[%s156 + $0x650] sm:$0xff]
        %v381 = vld [vmem:[%s156 + $0x658] sm:$0xff]
        %v382 = vld [vmem:[%s156 + $0x660] sm:$0xff]
        %v383 = vld [vmem:[%s156 + $0x668] sm:$0xff]
        %v384 = vld [vmem:[%s156 + $0x670] sm:$0xff]
        %v385 = vld [vmem:[%s156 + $0x678] sm:$0xff]
        %v386 = vld [vmem:[%s156 + $0x680] sm:$0xff]
        %v387 = vld [vmem:[%s156 + $0x688] sm:$0xff]
        %v388 = vld [vmem:[%s156 + $0x690] sm:$0xff]
        %v389 = vld [vmem:[%s156 + $0x698] sm:$0xff]
        %v390 = vld [vmem:[%s156 + $0x6a0] sm:$0xff]
        %v391 = vld [vmem:[%s156 + $0x6a8] sm:$0xff]
        %v392 = vld [vmem:[%s156 + $0x6b0] sm:$0xff]
        %v393 = vld [vmem:[%s156 + $0x6b8] sm:$0xff]
        %v394 = vld [vmem:[%s156 + $0x6c0] sm:$0xff]
        %v395 = vld [vmem:[%s156 + $0x6c8] sm:$0xff]
        %v396 = vld [vmem:[%s156 + $0x6d0] sm:$0xff]
        %v397 = vld [vmem:[%s156 + $0x6d8] sm:$0xff]
        %v398 = vld [vmem:[%s156 + $0x6e0] sm:$0xff]
        %v399 = vld [vmem:[%s156 + $0x6e8] sm:$0xff]
        %v400 = vld [vmem:[%s156 + $0x6f0] sm:$0xff]
        %v401 = vld [vmem:[%s156 + $0x6f8] sm:$0xff]
        %v402 = vld [vmem:[%s156 + $0x700] sm:$0xff]
        %v403 = vld [vmem:[%s156 + $0x708] sm:$0xff]
        %v404 = vld [vmem:[%s156 + $0x710] sm:$0xff]
        %v405 = vld [vmem:[%s156 + $0x718] sm:$0xff]
        %v406 = vld [vmem:[%s156 + $0x720] sm:$0xff]
        %v407 = vld [vmem:[%s156 + $0x728] sm:$0xff]
        %v408 = vld [vmem:[%s156 + $0x730] sm:$0xff]
        %v409 = vld [vmem:[%s156 + $0x738] sm:$0xff]
        %v410 = vld [vmem:[%s156 + $0x740] sm:$0xff]
        %v411 = vld [vmem:[%s156 + $0x748] sm:$0xff]
        %v412 = vld [vmem:[%s156 + $0x750] sm:$0xff]
        %v413 = vld [vmem:[%s156 + $0x758] sm:$0xff]
        %v414 = vld [vmem:[%s156 + $0x760] sm:$0xff]
        %v415 = vld [vmem:[%s156 + $0x768] sm:$0xff]
        %v416 = vld [vmem:[%s156 + $0x770] sm:$0xff]
        %v417 = vld [vmem:[%s156 + $0x778] sm:$0xff]
        %v418 = vld [vmem:[%s156 + $0x780] sm:$0xff]
        %v419 = vld [vmem:[%s156 + $0x788] sm:$0xff]
        %v420 = vld [vmem:[%s156 + $0x790] sm:$0xff]
        %v421 = vld [vmem:[%s156 + $0x798] sm:$0xff]
        %v422 = vld [vmem:[%s156 + $0x7a0] sm:$0xff]
        %v423 = vld [vmem:[%s156 + $0x7a8] sm:$0xff]
        %v424 = vld [vmem:[%s156 + $0x7b0] sm:$0xff]
        %v425 = vld [vmem:[%s156 + $0x7b8] sm:$0xff]
        %v426 = vld [vmem:[%s156 + $0x7c0] sm:$0xff]
        %v427 = vld [vmem:[%s156 + $0x7c8] sm:$0xff]
        %v428 = vld [vmem:[%s156 + $0x7d0] sm:$0xff]
        %v429 = vld [vmem:[%s156 + $0x7d8] sm:$0xff]
        %v430 = vld [vmem:[%s156 + $0x7e0] sm:$0xff]
        %v431 = vld [vmem:[%s156 + $0x7e8] sm:$0xff]
        %v432 = vld [vmem:[%s156 + $0x7f0] sm:$0xff]
        %v433 = vld [vmem:[%s156 + $0x7f8] sm:$0xff]
        %v434 = vld [vmem:[%s156 + $0x800] sm:$0xff]
        %v435 = vld [vmem:[%s156 + $0x808] sm:$0xff]
        %v436 = vld [vmem:[%s156 + $0x810] sm:$0xff]
        %v437 = vld [vmem:[%s156 + $0x818] sm:$0xff]
        %v438 = vld [vmem:[%s156 + $0x820] sm:$0xff]
        %v439 = vld [vmem:[%s156 + $0x828] sm:$0xff]
        %v440 = vld [vmem:[%s156 + $0x830] sm:$0xff]
        %v441 = vld [vmem:[%s156 + $0x838] sm:$0xff]
        %v442 = vld [vmem:[%s156 + $0x840] sm:$0xff]
        %v443 = vld [vmem:[%s156 + $0x848] sm:$0xff]
        %v444 = vld [vmem:[%s156 + $0x850] sm:$0xff]
        %v445 = vld [vmem:[%s156 + $0x858] sm:$0xff]
        %v446 = vld [vmem:[%s156 + $0x860] sm:$0xff]
        %v447 = vld [vmem:[%s156 + $0x868] sm:$0xff]
        %v448 = vld [vmem:[%s156 + $0x870] sm:$0xff]
        %v449 = vld [vmem:[%s156 + $0x878] sm:$0xff]
        %v450 = vld [vmem:[%s156 + $0x880] sm:$0xff]
        %v451 = vld [vmem:[%s156 + $0x888] sm:$0xff]
        %v452 = vld [vmem:[%s156 + $0x890] sm:$0xff]
        %v453 = vld [vmem:[%s156 + $0x898] sm:$0xff]
        %v454 = vld [vmem:[%s156 + $0x8a0] sm:$0xff]
        %v455 = vld [vmem:[%s156 + $0x8a8] sm:$0xff]
        %v456 = vld [vmem:[%s156 + $0x8b0] sm:$0xff]
        %v457 = vld [vmem:[%s156 + $0x8b8] sm:$0xff]
        %v458 = vld [vmem:[%s156 + $0x8c0] sm:$0xff]
        %v459 = vld [vmem:[%s156 + $0x8c8] sm:$0xff]
        %v460 = vld [vmem:[%s156 + $0x8d0] sm:$0xff]
        %v461 = vld [vmem:[%s156 + $0x8d8] sm:$0xff]
        %v462 = vld [vmem:[%s156 + $0x8e0] sm:$0xff]
        %v463 = vld [vmem:[%s156 + $0x8e8] sm:$0xff]
        %v464 = vld [vmem:[%s156 + $0x8f0] sm:$0xff]
        %v465 = vld [vmem:[%s156 + $0x8f8] sm:$0xff]
        %v466 = vld [vmem:[%s156 + $0x900] sm:$0xff]
        %v467 = vld [vmem:[%s156 + $0x908] sm:$0xff]
        %v468 = vld [vmem:[%s156 + $0x910] sm:$0xff]
        %v469 = vld [vmem:[%s156 + $0x918] sm:$0xff]
        %v470 = vld [vmem:[%s156 + $0x920] sm:$0xff]
        %v471 = vld [vmem:[%s156 + $0x928] sm:$0xff]
        %v472 = vld [vmem:[%s156 + $0x930] sm:$0xff]
        %v473 = vld [vmem:[%s156 + $0x938] sm:$0xff]
        %v474 = vld [vmem:[%s156 + $0x940] sm:$0xff]
        %v475 = vld [vmem:[%s156 + $0x948] sm:$0xff]
        %v476 = vld [vmem:[%s156 + $0x950] sm:$0xff]
        %v477 = vld [vmem:[%s156 + $0x958] sm:$0xff]
        %v478 = vld [vmem:[%s156 + $0x960] sm:$0xff]
        %v479 = vld [vmem:[%s156 + $0x968] sm:$0xff]
        %v480 = vld [vmem:[%s156 + $0x970] sm:$0xff]
        %v481 = vld [vmem:[%s156 + $0x978] sm:$0xff]
        %v482 = vld [vmem:[%s156 + $0x980] sm:$0xff]
        %v483 = vld [vmem:[%s156 + $0x988] sm:$0xff]
        %v484 = vld [vmem:[%s156 + $0x990] sm:$0xff]
        %v485 = vld [vmem:[%s156 + $0x998] sm:$0xff]
        %v486 = vld [vmem:[%s156 + $0x9a0] sm:$0xff]
        %v487 = vld [vmem:[%s156 + $0x9a8] sm:$0xff]
        %v488 = vld [vmem:[%s156 + $0x9b0] sm:$0xff]
        %v489 = vld [vmem:[%s156 + $0x9b8] sm:$0xff]
        %v490 = vld [vmem:[%s156 + $0x9c0] sm:$0xff]
        %v491 = vld [vmem:[%s156 + $0x9c8] sm:$0xff]
        %v492 = vld [vmem:[%s156 + $0x9d0] sm:$0xff]
        %v493 = vld [vmem:[%s156 + $0x9d8] sm:$0xff]
        %v494 = vld [vmem:[%s156 + $0x9e0] sm:$0xff]
        %v495 = vld [vmem:[%s156 + $0x9e8] sm:$0xff]
        %v496 = vld [vmem:[%s156 + $0x9f0] sm:$0xff]
        %v497 = vld [vmem:[%s156 + $0x9f8] sm:$0xff]
        %v498 = vld [vmem:[%s156 + $0xa00] sm:$0xff]
        %v499 = vld [vmem:[%s156 + $0xa08] sm:$0xff]
        %v500 = vld [vmem:[%s156 + $0xa10] sm:$0xff]
        %v501 = vld [vmem:[%s156 + $0xa18] sm:$0xff]
        %v502 = vld [vmem:[%s156 + $0xa20] sm:$0xff]
        %v503 = vld [vmem:[%s156 + $0xa28] sm:$0xff]
        %v504 = vld [vmem:[%s156 + $0xa30] sm:$0xff]
        %v505 = vld [vmem:[%s156 + $0xa38] sm:$0xff]
        %v506 = vld [vmem:[%s156 + $0xa40] sm:$0xff]
        %v507 = vld [vmem:[%s156 + $0xa48] sm:$0xff]
        %v508 = vld [vmem:[%s156 + $0xa50] sm:$0xff]
        %v509 = vld [vmem:[%s156 + $0xa58] sm:$0xff]
        %v510 = vld [vmem:[%s156 + $0xa60] sm:$0xff]
        %v511 = vld [vmem:[%s156 + $0xa68] sm:$0xff]
        %v512 = vld [vmem:[%s156 + $0xa70] sm:$0xff]
        %v513 = vld [vmem:[%s156 + $0xa78] sm:$0xff]
        %v514 = vld [vmem:[%s156 + $0xa80] sm:$0xff]
        %v515 = vld [vmem:[%s156 + $0xa88] sm:$0xff]
        %v516 = vld [vmem:[%s156 + $0xa90] sm:$0xff]
        %v517 = vld [vmem:[%s156 + $0xa98] sm:$0xff]
        %v518 = vld [vmem:[%s156 + $0xaa0] sm:$0xff]
        %v519 = vld [vmem:[%s156 + $0xaa8] sm:$0xff]
        %v520 = vld [vmem:[%s156 + $0xab0] sm:$0xff]
        %v521 = vld [vmem:[%s156 + $0xab8] sm:$0xff]
        %v522 = vld [vmem:[%s156 + $0xac0] sm:$0xff]
        %v523 = vld [vmem:[%s156 + $0xac8] sm:$0xff]
        %v524 = vld [vmem:[%s156 + $0xad0] sm:$0xff]
        %v525 = vld [vmem:[%s156 + $0xad8] sm:$0xff]
        %v526 = vld [vmem:[%s156 + $0xae0] sm:$0xff]
        %v527 = vld [vmem:[%s156 + $0xae8] sm:$0xff]
        %v528 = vld [vmem:[%s156 + $0xaf0] sm:$0xff]
        %v529 = vld [vmem:[%s156 + $0xaf8] sm:$0xff]
        %v530 = vld [vmem:[%s156 + $0xb00] sm:$0xff]
        %v531 = vld [vmem:[%s156 + $0xb08] sm:$0xff]
        %v532 = vld [vmem:[%s156 + $0xb10] sm:$0xff]
        %v533 = vld [vmem:[%s156 + $0xb18] sm:$0xff]
        %v534 = vld [vmem:[%s156 + $0xb20] sm:$0xff]
        %v535 = vld [vmem:[%s156 + $0xb28] sm:$0xff]
        %v536 = vld [vmem:[%s156 + $0xb30] sm:$0xff]
        %v537 = vld [vmem:[%s156 + $0xb38] sm:$0xff]
        %v538 = vld [vmem:[%s156 + $0xb40] sm:$0xff]
        %v539 = vld [vmem:[%s156 + $0xb48] sm:$0xff]
        %v540 = vld [vmem:[%s156 + $0xb50] sm:$0xff]
        %v541 = vld [vmem:[%s156 + $0xb58] sm:$0xff]
        %v542 = vld [vmem:[%s156 + $0xb60] sm:$0xff]
        %v543 = vld [vmem:[%s156 + $0xb68] sm:$0xff]
        %v544 = vld [vmem:[%s156 + $0xb70] sm:$0xff]
        %v545 = vld [vmem:[%s156 + $0xb78] sm:$0xff]
        %v546 = vld [vmem:[%s156 + $0xb80] sm:$0xff]
        %v547 = vld [vmem:[%s156 + $0xb88] sm:$0xff]
        %v548 = vld [vmem:[%s156 + $0xb90] sm:$0xff]
        %v549 = vld [vmem:[%s156 + $0xb98] sm:$0xff]
        %v550 = vld [vmem:[%s156 + $0xba0] sm:$0xff]
        %v551 = vld [vmem:[%s156 + $0xba8] sm:$0xff]
        %v552 = vld [vmem:[%s156 + $0xbb0] sm:$0xff]
        %v553 = vld [vmem:[%s156 + $0xbb8] sm:$0xff]
        %v554 = vld [vmem:[%s156 + $0xbc0] sm:$0xff]
        %v555 = vld [vmem:[%s156 + $0xbc8] sm:$0xff]
        %v556 = vld [vmem:[%s156 + $0xbd0] sm:$0xff]
        %v557 = vld [vmem:[%s156 + $0xbd8] sm:$0xff]
        %v558 = vld [vmem:[%s156 + $0xbe0] sm:$0xff]
        %v559 = vld [vmem:[%s156 + $0xbe8] sm:$0xff]
        %v560 = vld [vmem:[%s156 + $0xbf0] sm:$0xff]
        %v561 = vld [vmem:[%s156 + $0xbf8] sm:$0xff]
        %v562 = vld [vmem:[%s156 + $0xc00] sm:$0xff]
        %v563 = vld [vmem:[%s156 + $0xc08] sm:$0xff]
        %v564 = vld [vmem:[%s156 + $0xc10] sm:$0xff]
        %v565 = vld [vmem:[%s156 + $0xc18] sm:$0xff]
        %v566 = vld [vmem:[%s156 + $0xc20] sm:$0xff]
        %v567 = vld [vmem:[%s156 + $0xc28] sm:$0xff]
        %v568 = vld [vmem:[%s156 + $0xc30] sm:$0xff]
        %v569 = vld [vmem:[%s156 + $0xc38] sm:$0xff]
        %v570 = vld [vmem:[%s156 + $0xc40] sm:$0xff]
        %v571 = vld [vmem:[%s156 + $0xc48] sm:$0xff]
        %v572 = vld [vmem:[%s156 + $0xc50] sm:$0xff]
        %v573 = vld [vmem:[%s156 + $0xc58] sm:$0xff]
        %v574 = vld [vmem:[%s156 + $0xc60] sm:$0xff]
        %v575 = vld [vmem:[%s156 + $0xc68] sm:$0xff]
        %v576 = vld [vmem:[%s156 + $0xc70] sm:$0xff]
        %v577 = vld [vmem:[%s156 + $0xc78] sm:$0xff]
        %v578 = vld [vmem:[%s156 + $0xc80] sm:$0xff]
        %v579 = vld [vmem:[%s156 + $0xc88] sm:$0xff]
        %v580 = vld [vmem:[%s156 + $0xc90] sm:$0xff]
        %v581 = vld [vmem:[%s156 + $0xc98] sm:$0xff]
        %v582 = vld [vmem:[%s156 + $0xca0] sm:$0xff]
        %v583 = vld [vmem:[%s156 + $0xca8] sm:$0xff]
        %v584 = vld [vmem:[%s156 + $0xcb0] sm:$0xff]
        %v585 = vld [vmem:[%s156 + $0xcb8] sm:$0xff]
        %v586 = vld [vmem:[%s156 + $0xcc0] sm:$0xff]
        %v587 = vld [vmem:[%s156 + $0xcc8] sm:$0xff]
        %v588 = vld [vmem:[%s156 + $0xcd0] sm:$0xff]
        %v589 = vld [vmem:[%s156 + $0xcd8] sm:$0xff]
        %v590 = vld [vmem:[%s156 + $0xce0] sm:$0xff]
        %v591 = vld [vmem:[%s156 + $0xce8] sm:$0xff]
        %v592 = vld [vmem:[%s156 + $0xcf0] sm:$0xff]
        %v593 = vld [vmem:[%s156 + $0xcf8] sm:$0xff]
        %v594 = vld [vmem:[%s156 + $0xd00] sm:$0xff]
        %v595 = vld [vmem:[%s156 + $0xd08] sm:$0xff]
        %v596 = vld [vmem:[%s156 + $0xd10] sm:$0xff]
        %v597 = vld [vmem:[%s156 + $0xd18] sm:$0xff]
        %v598 = vld [vmem:[%s156 + $0xd20] sm:$0xff]
        %v599 = vld [vmem:[%s156 + $0xd28] sm:$0xff]
        %v600 = vld [vmem:[%s156 + $0xd30] sm:$0xff]
        %v601 = vld [vmem:[%s156 + $0xd38] sm:$0xff]
        %v602 = vld [vmem:[%s156 + $0xd40] sm:$0xff]
        %v603 = vld [vmem:[%s156 + $0xd48] sm:$0xff]
        %v604 = vld [vmem:[%s156 + $0xd50] sm:$0xff]
        %v605 = vld [vmem:[%s156 + $0xd58] sm:$0xff]
        %v606 = vld [vmem:[%s156 + $0xd60] sm:$0xff]
        %v607 = vld [vmem:[%s156 + $0xd68] sm:$0xff]
        %v608 = vld [vmem:[%s156 + $0xd70] sm:$0xff]
        %v609 = vld [vmem:[%s156 + $0xd78] sm:$0xff]
        %v610 = vld [vmem:[%s156 + $0xd80] sm:$0xff]
        %v611 = vld [vmem:[%s156 + $0xd88] sm:$0xff]
        %v612 = vld [vmem:[%s156 + $0xd90] sm:$0xff]
        %v613 = vld [vmem:[%s156 + $0xd98] sm:$0xff]
        %v614 = vld [vmem:[%s156 + $0xda0] sm:$0xff]
        %v615 = vld [vmem:[%s156 + $0xda8] sm:$0xff]
        %v616 = vld [vmem:[%s156 + $0xdb0] sm:$0xff]
        %v617 = vld [vmem:[%s156 + $0xdb8] sm:$0xff]
        %v618 = vld [vmem:[%s156 + $0xdc0] sm:$0xff]
        %v619 = vld [vmem:[%s156 + $0xdc8] sm:$0xff]
        %v620 = vld [vmem:[%s156 + $0xdd0] sm:$0xff]
        %v621 = vld [vmem:[%s156 + $0xdd8] sm:$0xff]
        %v622 = vld [vmem:[%s156 + $0xde0] sm:$0xff]
        %v623 = vld [vmem:[%s156 + $0xde8] sm:$0xff]
        %v624 = vld [vmem:[%s156 + $0xdf0] sm:$0xff]
        %v625 = vld [vmem:[%s156 + $0xdf8] sm:$0xff]
        %v626 = vld [vmem:[%s156 + $0xe00] sm:$0xff]
        %v627 = vld [vmem:[%s156 + $0xe08] sm:$0xff]
        %v628 = vld [vmem:[%s156 + $0xe10] sm:$0xff]
        %v629 = vld [vmem:[%s156 + $0xe18] sm:$0xff]
        %v630 = vld [vmem:[%s156 + $0xe20] sm:$0xff]
        %v631 = vld [vmem:[%s156 + $0xe28] sm:$0xff]
        %v632 = vld [vmem:[%s156 + $0xe30] sm:$0xff]
        %v633 = vld [vmem:[%s156 + $0xe38] sm:$0xff]
        %v634 = vld [vmem:[%s156 + $0xe40] sm:$0xff]
        %v635 = vld [vmem:[%s156 + $0xe48] sm:$0xff]
        %v636 = vld [vmem:[%s156 + $0xe50] sm:$0xff]
        %v637 = vld [vmem:[%s156 + $0xe58] sm:$0xff]
        %v638 = vld [vmem:[%s156 + $0xe60] sm:$0xff]
        %v639 = vld [vmem:[%s156 + $0xe68] sm:$0xff]
        %v640 = vld [vmem:[%s156 + $0xe70] sm:$0xff]
        %v641 = vld [vmem:[%s156 + $0xe78] sm:$0xff]
        %v642 = vld [vmem:[%s156 + $0xe80] sm:$0xff]
        %v643 = vld [vmem:[%s156 + $0xe88] sm:$0xff]
        %v644 = vld [vmem:[%s156 + $0xe90] sm:$0xff]
        %v645 = vld [vmem:[%s156 + $0xe98] sm:$0xff]
        %v646 = vld [vmem:[%s156 + $0xea0] sm:$0xff]
        %v647 = vld [vmem:[%s156 + $0xea8] sm:$0xff]
        %v648 = vld [vmem:[%s156 + $0xeb0] sm:$0xff]
        %v649 = vld [vmem:[%s156 + $0xeb8] sm:$0xff]
        %v650 = vld [vmem:[%s156 + $0xec0] sm:$0xff]
        %v651 = vld [vmem:[%s156 + $0xec8] sm:$0xff]
        %v652 = vld [vmem:[%s156 + $0xed0] sm:$0xff]
        %v653 = vld [vmem:[%s156 + $0xed8] sm:$0xff]
        %v654 = vld [vmem:[%s156 + $0xee0] sm:$0xff]
        %v655 = vld [vmem:[%s156 + $0xee8] sm:$0xff]
        %v656 = vld [vmem:[%s156 + $0xef0] sm:$0xff]
        %v657 = vld [vmem:[%s156 + $0xef8] sm:$0xff]
        %v658 = vld [vmem:[%s156 + $0xf00] sm:$0xff]
        %v659 = vld [vmem:[%s156 + $0xf08] sm:$0xff]
        %v660 = vld [vmem:[%s156 + $0xf10] sm:$0xff]
        %v661 = vld [vmem:[%s156 + $0xf18] sm:$0xff]
        %v662 = vld [vmem:[%s156 + $0xf20] sm:$0xff]
        %v663 = vld [vmem:[%s156 + $0xf28] sm:$0xff]
        %v664 = vld [vmem:[%s156 + $0xf30] sm:$0xff]
        %v665 = vld [vmem:[%s156 + $0xf38] sm:$0xff]
        %v666 = vld [vmem:[%s156 + $0xf40] sm:$0xff]
        %v667 = vld [vmem:[%s156 + $0xf48] sm:$0xff]
        %v668 = vld [vmem:[%s156 + $0xf50] sm:$0xff]
        %v669 = vld [vmem:[%s156 + $0xf58] sm:$0xff]
        %v670 = vld [vmem:[%s156 + $0xf60] sm:$0xff]
        %v671 = vld [vmem:[%s156 + $0xf68] sm:$0xff]
        %v672 = vld [vmem:[%s156 + $0xf70] sm:$0xff]
        %v673 = vld [vmem:[%s156 + $0xf78] sm:$0xff]
        %v674 = vld [vmem:[%s156 + $0xf80] sm:$0xff]
        %v675 = vld [vmem:[%s156 + $0xf88] sm:$0xff]
        %v676 = vld [vmem:[%s156 + $0xf90] sm:$0xff]
        %v677 = vld [vmem:[%s156 + $0xf98] sm:$0xff]
        %v678 = vld [vmem:[%s156 + $0xfa0] sm:$0xff]
        %v679 = vld [vmem:[%s156 + $0xfa8] sm:$0xff]
        %v680 = vld [vmem:[%s156 + $0xfb0] sm:$0xff]
        %v681 = vld [vmem:[%s156 + $0xfb8] sm:$0xff]
        %v682 = vld [vmem:[%s156 + $0xfc0] sm:$0xff]
        %v683 = vld [vmem:[%s156 + $0xfc8] sm:$0xff]
        %v684 = vld [vmem:[%s156 + $0xfd0] sm:$0xff]
        %v685 = vld [vmem:[%s156 + $0xfd8] sm:$0xff]
        %v686 = vld [vmem:[%s156 + $0xfe0] sm:$0xff]
        %v687 = vld [vmem:[%s156 + $0xfe8] sm:$0xff]
        %v688 = vld [vmem:[%s156 + $0xff0] sm:$0xff]
        %v689 = vld [vmem:[%s156 + $0xff8] sm:$0xff]
        %v690 = vld [vmem:[%s156 + $0x1000] sm:$0xff]
        %v691 = vld [vmem:[%s156 + $0x1008] sm:$0xff]
        %v692 = vld [vmem:[%s156 + $0x1010] sm:$0xff]
        %v693 = vld [vmem:[%s156 + $0x1018] sm:$0xff]
        %v694 = vld [vmem:[%s156 + $0x1020] sm:$0xff]
        %v695 = vld [vmem:[%s156 + $0x1028] sm:$0xff]
        %v696 = vld [vmem:[%s156 + $0x1030] sm:$0xff]
        %v697 = vld [vmem:[%s156 + $0x1038] sm:$0xff]
        %v698 = vld [vmem:[%s156 + $0x1040] sm:$0xff]
        %v699 = vld [vmem:[%s156 + $0x1048] sm:$0xff]
        %v700 = vld [vmem:[%s156 + $0x1050] sm:$0xff]
        %v701 = vld [vmem:[%s156 + $0x1058] sm:$0xff]
        %v702 = vld [vmem:[%s156 + $0x1060] sm:$0xff]
        %v703 = vld [vmem:[%s156 + $0x1068] sm:$0xff]
        %v704 = vld [vmem:[%s156 + $0x1070] sm:$0xff]
        %v705 = vld [vmem:[%s156 + $0x1078] sm:$0xff]
        %v706 = vld [vmem:[%s156 + $0x1080] sm:$0xff]
        %v707 = vld [vmem:[%s156 + $0x1088] sm:$0xff]
        %v708 = vld [vmem:[%s156 + $0x1090] sm:$0xff]
        %v709 = vld [vmem:[%s156 + $0x1098] sm:$0xff]
        %v710 = vld [vmem:[%s156 + $0x10a0] sm:$0xff]
        %v711 = vld [vmem:[%s156 + $0x10a8] sm:$0xff]
        %v712 = vld [vmem:[%s156 + $0x10b0] sm:$0xff]
        %v713 = vld [vmem:[%s156 + $0x10b8] sm:$0xff]
        %v714 = vld [vmem:[%s156 + $0x10c0] sm:$0xff]
        %v715 = vld [vmem:[%s156 + $0x10c8] sm:$0xff]
        %v716 = vld [vmem:[%s156 + $0x10d0] sm:$0xff]
        %v717 = vld [vmem:[%s156 + $0x10d8] sm:$0xff]
        %v718 = vld [vmem:[%s156 + $0x10e0] sm:$0xff]
        %v719 = vld [vmem:[%s156 + $0x10e8] sm:$0xff]
        %v720 = vld [vmem:[%s156 + $0x10f0] sm:$0xff]
        %v721 = vld [vmem:[%s156 + $0x10f8] sm:$0xff]
        %v722 = vld [vmem:[%s156 + $0x1100] sm:$0xff]
        %v723 = vld [vmem:[%s156 + $0x1108] sm:$0xff]
        %v724 = vld [vmem:[%s156 + $0x1110] sm:$0xff]
        %v725 = vld [vmem:[%s156 + $0x1118] sm:$0xff]
        %v726 = vld [vmem:[%s156 + $0x1120] sm:$0xff]
        %v727 = vld [vmem:[%s156 + $0x1128] sm:$0xff]
        %v728 = vld [vmem:[%s156 + $0x1130] sm:$0xff]
        %v729 = vld [vmem:[%s156 + $0x1138] sm:$0xff]
        %v730 = vld [vmem:[%s156 + $0x1140] sm:$0xff]
        %v731 = vld [vmem:[%s156 + $0x1148] sm:$0xff]
        %v732 = vld [vmem:[%s156 + $0x1150] sm:$0xff]
        %v733 = vld [vmem:[%s156 + $0x1158] sm:$0xff]
        %v734 = vld [vmem:[%s156 + $0x1160] sm:$0xff]
        %v735 = vld [vmem:[%s156 + $0x1168] sm:$0xff]
        %v736 = vld [vmem:[%s156 + $0x1170] sm:$0xff]
        %v737 = vld [vmem:[%s156 + $0x1178] sm:$0xff]
        %v738 = vld [vmem:[%s156 + $0x1180] sm:$0xff]
        %v739 = vld [vmem:[%s156 + $0x1188] sm:$0xff]
        %v740 = vld [vmem:[%s156 + $0x1190] sm:$0xff]
        %v741 = vld [vmem:[%s156 + $0x1198] sm:$0xff]
        %v742 = vld [vmem:[%s156 + $0x11a0] sm:$0xff]
        %v743 = vld [vmem:[%s156 + $0x11a8] sm:$0xff]
        %v744 = vld [vmem:[%s156 + $0x11b0] sm:$0xff]
        %v745 = vld [vmem:[%s156 + $0x11b8] sm:$0xff]
        %v746 = vld [vmem:[%s156 + $0x11c0] sm:$0xff]
        %v747 = vld [vmem:[%s156 + $0x11c8] sm:$0xff]
        %v748 = vld [vmem:[%s156 + $0x11d0] sm:$0xff]
        %v749 = vld [vmem:[%s156 + $0x11d8] sm:$0xff]
        %v750 = vld [vmem:[%s156 + $0x11e0] sm:$0xff]
        %v751 = vld [vmem:[%s156 + $0x11e8] sm:$0xff]
        %v752 = vld [vmem:[%s156 + $0x11f0] sm:$0xff]
        %v753 = vld [vmem:[%s156 + $0x11f8] sm:$0xff]
        %v754 = vld [vmem:[%s156 + $0x1200] sm:$0xff]
        %v755 = vld [vmem:[%s156 + $0x1208] sm:$0xff]
        %v756 = vld [vmem:[%s156 + $0x1210] sm:$0xff]
        %v757 = vld [vmem:[%s156 + $0x1218] sm:$0xff]
        %v758 = vld [vmem:[%s156 + $0x1220] sm:$0xff]
        %v759 = vld [vmem:[%s156 + $0x1228] sm:$0xff]
        %v760 = vld [vmem:[%s156 + $0x1230] sm:$0xff]
        %v761 = vld [vmem:[%s156 + $0x1238] sm:$0xff]
        %v762 = vld [vmem:[%s156 + $0x1240] sm:$0xff]
        %v763 = vld [vmem:[%s156 + $0x1248] sm:$0xff]
        %v764 = vld [vmem:[%s156 + $0x1250] sm:$0xff]
        %v765 = vld [vmem:[%s156 + $0x1258] sm:$0xff]
        %v766 = vld [vmem:[%s156 + $0x1260] sm:$0xff]
        %v767 = vld [vmem:[%s156 + $0x1268] sm:$0xff]
        %v768 = vld [vmem:[%s156 + $0x1270] sm:$0xff]
        %v769 = vld [vmem:[%s156 + $0x1278] sm:$0xff]
        %v770 = vld [vmem:[%s156 + $0x1280] sm:$0xff]
        %v771 = vld [vmem:[%s156 + $0x1288] sm:$0xff]
        %v772 = vld [vmem:[%s156 + $0x1290] sm:$0xff]
        %v773 = vld [vmem:[%s156 + $0x1298] sm:$0xff]
        %v774 = vld [vmem:[%s156 + $0x12a0] sm:$0xff]
        %v775 = vld [vmem:[%s156 + $0x12a8] sm:$0xff]
        %v776 = vld [vmem:[%s156 + $0x12b0] sm:$0xff]
        %v777 = vld [vmem:[%s156 + $0x12b8] sm:$0xff]
        %v778 = vld [vmem:[%s156 + $0x12c0] sm:$0xff]
        %v779 = vld [vmem:[%s156 + $0x12c8] sm:$0xff]
        %v780 = vld [vmem:[%s156 + $0x12d0] sm:$0xff]
        %v781 = vld [vmem:[%s156 + $0x12d8] sm:$0xff]
        %v782 = vld [vmem:[%s156 + $0x12e0] sm:$0xff]
        %v783 = vld [vmem:[%s156 + $0x12e8] sm:$0xff]
        %v784 = vld [vmem:[%s156 + $0x12f0] sm:$0xff]
        %v785 = vld [vmem:[%s156 + $0x12f8] sm:$0xff]
        %v786 = vld [vmem:[%s156 + $0x1300] sm:$0xff]
        %v787 = vld [vmem:[%s156 + $0x1308] sm:$0xff]
        %v788 = vld [vmem:[%s156 + $0x1310] sm:$0xff]
        %v789 = vld [vmem:[%s156 + $0x1318] sm:$0xff]
        %v790 = vld [vmem:[%s156 + $0x1320] sm:$0xff]
        %v791 = vld [vmem:[%s156 + $0x1328] sm:$0xff]
        %v792 = vld [vmem:[%s156 + $0x1330] sm:$0xff]
        %v793 = vld [vmem:[%s156 + $0x1338] sm:$0xff]
        %v794 = vld [vmem:[%s156 + $0x1340] sm:$0xff]
        %v795 = vld [vmem:[%s156 + $0x1348] sm:$0xff]
        %v796 = vld [vmem:[%s156 + $0x1350] sm:$0xff]
        %v797 = vld [vmem:[%s156 + $0x1358] sm:$0xff]
        %v798 = vld [vmem:[%s156 + $0x1360] sm:$0xff]
        %v799 = vld [vmem:[%s156 + $0x1368] sm:$0xff]
        %v800 = vld [vmem:[%s156 + $0x1370] sm:$0xff]
        %v801 = vld [vmem:[%s156 + $0x1378] sm:$0xff]
        %v802 = vld [vmem:[%s156 + $0x1380] sm:$0xff]
        %v803 = vld [vmem:[%s156 + $0x1388] sm:$0xff]
        %v804 = vld [vmem:[%s156 + $0x1390] sm:$0xff]
        %v805 = vld [vmem:[%s156 + $0x1398] sm:$0xff]
        %v806 = vld [vmem:[%s156 + $0x13a0] sm:$0xff]
        %v807 = vld [vmem:[%s156 + $0x13a8] sm:$0xff]
        %v808 = vld [vmem:[%s156 + $0x13b0] sm:$0xff]
        %v809 = vld [vmem:[%s156 + $0x13b8] sm:$0xff]
        %v810 = vld [vmem:[%s156 + $0x13c0] sm:$0xff]
        %v811 = vld [vmem:[%s156 + $0x13c8] sm:$0xff]
        %v812 = vld [vmem:[%s156 + $0x13d0] sm:$0xff]
        %v813 = vld [vmem:[%s156 + $0x13d8] sm:$0xff]
        %v814 = vld [vmem:[%s156 + $0x13e0] sm:$0xff]
        %v815 = vld [vmem:[%s156 + $0x13e8] sm:$0xff]
        %v816 = vld [vmem:[%s156 + $0x13f0] sm:$0xff]
        %v817 = vld [vmem:[%s156 + $0x13f8] sm:$0xff]
        %v818 = vld [vmem:[%s156 + $0x1400] sm:$0xff]
        %v819 = vld [vmem:[%s156 + $0x1408] sm:$0xff]
        %v820 = vld [vmem:[%s156 + $0x1410] sm:$0xff]
        %v821 = vld [vmem:[%s156 + $0x1418] sm:$0xff]
        %v822 = vld [vmem:[%s156 + $0x1420] sm:$0xff]
        %v823 = vld [vmem:[%s156 + $0x1428] sm:$0xff]
        %v824 = vld [vmem:[%s156 + $0x1430] sm:$0xff]
        %v825 = vld [vmem:[%s156 + $0x1438] sm:$0xff]
        %v826 = vld [vmem:[%s156 + $0x1440] sm:$0xff]
        %v827 = vld [vmem:[%s156 + $0x1448] sm:$0xff]
        %v828 = vld [vmem:[%s156 + $0x1450] sm:$0xff]
        %v829 = vld [vmem:[%s156 + $0x1458] sm:$0xff]
        %v830 = vld [vmem:[%s156 + $0x1460] sm:$0xff]
        %v831 = vld [vmem:[%s156 + $0x1468] sm:$0xff]
        %v832 = vld [vmem:[%s156 + $0x1470] sm:$0xff]
        %v833 = vld [vmem:[%s156 + $0x1478] sm:$0xff]
        %v834 = vld [vmem:[%s156 + $0x1480] sm:$0xff]
        %v835 = vld [vmem:[%s156 + $0x1488] sm:$0xff]
        %v836 = vld [vmem:[%s156 + $0x1490] sm:$0xff]
        %v837 = vld [vmem:[%s156 + $0x1498] sm:$0xff]
        %v838 = vld [vmem:[%s156 + $0x14a0] sm:$0xff]
        %v839 = vld [vmem:[%s156 + $0x14a8] sm:$0xff]
        %v840 = vld [vmem:[%s156 + $0x14b0] sm:$0xff]
        %v841 = vld [vmem:[%s156 + $0x14b8] sm:$0xff]
        %v842 = vld [vmem:[%s156 + $0x14c0] sm:$0xff]
        %v843 = vld [vmem:[%s156 + $0x14c8] sm:$0xff]
        %v844 = vld [vmem:[%s156 + $0x14d0] sm:$0xff]
        %v845 = vld [vmem:[%s156 + $0x14d8] sm:$0xff]
        %v846 = vld [vmem:[%s156 + $0x14e0] sm:$0xff]
        %v847 = vld [vmem:[%s156 + $0x14e8] sm:$0xff]
        %v848 = vld [vmem:[%s156 + $0x14f0] sm:$0xff]
        %v849 = vld [vmem:[%s156 + $0x14f8] sm:$0xff]
        %v850 = vld [vmem:[%s156 + $0x1500] sm:$0xff]
        %v851 = vld [vmem:[%s156 + $0x1508] sm:$0xff]
        %v852 = vld [vmem:[%s156 + $0x1510] sm:$0xff]
        %v853 = vld [vmem:[%s156 + $0x1518] sm:$0xff]
        %v854 = vld [vmem:[%s156 + $0x1520] sm:$0xff]
        %v855 = vld [vmem:[%s156 + $0x1528] sm:$0xff]
        %v856 = vld [vmem:[%s156 + $0x1530] sm:$0xff]
        %v857 = vld [vmem:[%s156 + $0x1538] sm:$0xff]
        %v858 = vld [vmem:[%s156 + $0x1540] sm:$0xff]
        %v859 = vld [vmem:[%s156 + $0x1548] sm:$0xff]
        %v860 = vld [vmem:[%s156 + $0x1550] sm:$0xff]
        %v861 = vld [vmem:[%s156 + $0x1558] sm:$0xff]
        %v862 = vld [vmem:[%s156 + $0x1560] sm:$0xff]
        %v863 = vld [vmem:[%s156 + $0x1568] sm:$0xff]
        %v864 = vld [vmem:[%s156 + $0x1570] sm:$0xff]
        %v865 = vld [vmem:[%s156 + $0x1578] sm:$0xff]
        %v866 = vld [vmem:[%s156 + $0x1580] sm:$0xff]
        %v867 = vld [vmem:[%s156 + $0x1588] sm:$0xff]
        %v868 = vld [vmem:[%s156 + $0x1590] sm:$0xff]
        %v869 = vld [vmem:[%s156 + $0x1598] sm:$0xff]
        %v870 = vld [vmem:[%s156 + $0x15a0] sm:$0xff]
        %v871 = vld [vmem:[%s156 + $0x15a8] sm:$0xff]
        %v872 = vld [vmem:[%s156 + $0x15b0] sm:$0xff]
        %v873 = vld [vmem:[%s156 + $0x15b8] sm:$0xff]
        %v874 = vld [vmem:[%s156 + $0x15c0] sm:$0xff]
        %v875 = vld [vmem:[%s156 + $0x15c8] sm:$0xff]
        %v876 = vld [vmem:[%s156 + $0x15d0] sm:$0xff]
        %v877 = vld [vmem:[%s156 + $0x15d8] sm:$0xff]
        %v878 = vld [vmem:[%s156 + $0x15e0] sm:$0xff]
        %v879 = vld [vmem:[%s156 + $0x15e8] sm:$0xff]
        %v880 = vld [vmem:[%s156 + $0x15f0] sm:$0xff]
        %v881 = vld [vmem:[%s156 + $0x15f8] sm:$0xff]
        %v882 = vld [vmem:[%s156 + $0x1600] sm:$0xff]
        %v883 = vld [vmem:[%s156 + $0x1608] sm:$0xff]
        %v884 = vld [vmem:[%s156 + $0x1610] sm:$0xff]
        %v885 = vld [vmem:[%s156 + $0x1618] sm:$0xff]
        %v886 = vld [vmem:[%s156 + $0x1620] sm:$0xff]
        %v887 = vld [vmem:[%s156 + $0x1628] sm:$0xff]
        %v888 = vld [vmem:[%s156 + $0x1630] sm:$0xff]
        %v889 = vld [vmem:[%s156 + $0x1638] sm:$0xff]
        %v890 = vld [vmem:[%s156 + $0x1640] sm:$0xff]
        %v891 = vld [vmem:[%s156 + $0x1648] sm:$0xff]
        %v892 = vld [vmem:[%s156 + $0x1650] sm:$0xff]
        %v893 = vld [vmem:[%s156 + $0x1658] sm:$0xff]
        %v894 = vld [vmem:[%s156 + $0x1660] sm:$0xff]
        %v895 = vld [vmem:[%s156 + $0x1668] sm:$0xff]
        %v896 = vld [vmem:[%s156 + $0x1670] sm:$0xff]
        %v897 = vld [vmem:[%s156 + $0x1678] sm:$0xff]
        %v898 = vld [vmem:[%s156 + $0x1680] sm:$0xff]
        %v899 = vld [vmem:[%s156 + $0x1688] sm:$0xff]
        %v900 = vld [vmem:[%s156 + $0x1690] sm:$0xff]
        %v901 = vld [vmem:[%s156 + $0x1698] sm:$0xff]
        %v902 = vld [vmem:[%s156 + $0x16a0] sm:$0xff]
        %v903 = vld [vmem:[%s156 + $0x16a8] sm:$0xff]
        %v904 = vld [vmem:[%s156 + $0x16b0] sm:$0xff]
        %v905 = vld [vmem:[%s156 + $0x16b8] sm:$0xff]
        %v906 = vld [vmem:[%s156 + $0x16c0] sm:$0xff]
        %v907 = vld [vmem:[%s156 + $0x16c8] sm:$0xff]
        %v908 = vld [vmem:[%s156 + $0x16d0] sm:$0xff]
        %v909 = vld [vmem:[%s156 + $0x16d8] sm:$0xff]
        %v910 = vld [vmem:[%s156 + $0x16e0] sm:$0xff]
        %v911 = vld [vmem:[%s156 + $0x16e8] sm:$0xff]
        %v912 = vld [vmem:[%s156 + $0x16f0] sm:$0xff]
        %v913 = vld [vmem:[%s156 + $0x16f8] sm:$0xff]
        %v914 = vld [vmem:[%s156 + $0x1700] sm:$0xff]
        %v915 = vld [vmem:[%s156 + $0x1708] sm:$0xff]
        %v916 = vld [vmem:[%s156 + $0x1710] sm:$0xff]
        %v917 = vld [vmem:[%s156 + $0x1718] sm:$0xff]
        %v918 = vld [vmem:[%s156 + $0x1720] sm:$0xff]
        %v919 = vld [vmem:[%s156 + $0x1728] sm:$0xff]
        %v920 = vld [vmem:[%s156 + $0x1730] sm:$0xff]
        %v921 = vld [vmem:[%s156 + $0x1738] sm:$0xff]
        %v922 = vld [vmem:[%s156 + $0x1740] sm:$0xff]
        %v923 = vld [vmem:[%s156 + $0x1748] sm:$0xff]
        %v924 = vld [vmem:[%s156 + $0x1750] sm:$0xff]
        %v925 = vld [vmem:[%s156 + $0x1758] sm:$0xff]
        %v926 = vld [vmem:[%s156 + $0x1760] sm:$0xff]
        %v927 = vld [vmem:[%s156 + $0x1768] sm:$0xff]
        %v928 = vld [vmem:[%s156 + $0x1770] sm:$0xff]
        %v929 = vld [vmem:[%s156 + $0x1778] sm:$0xff]
        %v930 = vld [vmem:[%s156 + $0x1780] sm:$0xff]
        %v931 = vld [vmem:[%s156 + $0x1788] sm:$0xff]
        %v932 = vld [vmem:[%s156 + $0x1790] sm:$0xff]
        %v933 = vld [vmem:[%s156 + $0x1798] sm:$0xff]
        %v934 = vld [vmem:[%s156 + $0x17a0] sm:$0xff]
        %v935 = vld [vmem:[%s156 + $0x17a8] sm:$0xff]
        %v936 = vld [vmem:[%s156 + $0x17b0] sm:$0xff]
        %v937 = vld [vmem:[%s156 + $0x17b8] sm:$0xff]
        %v938 = vld [vmem:[%s156 + $0x17c0] sm:$0xff]
        %v939 = vld [vmem:[%s156 + $0x17c8] sm:$0xff]
        %v940 = vld [vmem:[%s156 + $0x17d0] sm:$0xff]
        %v941 = vld [vmem:[%s156 + $0x17d8] sm:$0xff]
        %v942 = vld [vmem:[%s156 + $0x17e0] sm:$0xff]
        %v943 = vld [vmem:[%s156 + $0x17e8] sm:$0xff]
        %v944 = vld [vmem:[%s156 + $0x17f0] sm:$0xff]
        %v945 = vld [vmem:[%s156 + $0x17f8] sm:$0xff]
        %v946 = vld [vmem:[%s156 + $0x1800] sm:$0xff]
        %v947 = vld [vmem:[%s156 + $0x1808] sm:$0xff]
        %v948 = vld [vmem:[%s156 + $0x1810] sm:$0xff]
        %v949 = vld [vmem:[%s156 + $0x1818] sm:$0xff]
        %v950 = vld [vmem:[%s156 + $0x1820] sm:$0xff]
        %v951 = vld [vmem:[%s156 + $0x1828] sm:$0xff]
        %v952 = vld [vmem:[%s156 + $0x1830] sm:$0xff]
        %v953 = vld [vmem:[%s156 + $0x1838] sm:$0xff]
        %v954 = vld [vmem:[%s156 + $0x1840] sm:$0xff]
        %v955 = vld [vmem:[%s156 + $0x1848] sm:$0xff]
        %v956 = vld [vmem:[%s156 + $0x1850] sm:$0xff]
        %v957 = vld [vmem:[%s156 + $0x1858] sm:$0xff]
        %v958 = vld [vmem:[%s156 + $0x1860] sm:$0xff]
        %v959 = vld [vmem:[%s156 + $0x1868] sm:$0xff]
        %v960 = vld [vmem:[%s156 + $0x1870] sm:$0xff]
        %v961 = vld [vmem:[%s156 + $0x1878] sm:$0xff]
        %v962 = vld [vmem:[%s156 + $0x1880] sm:$0xff]
        %v963 = vld [vmem:[%s156 + $0x1888] sm:$0xff]
        %v964 = vld [vmem:[%s156 + $0x1890] sm:$0xff]
        %v965 = vld [vmem:[%s156 + $0x1898] sm:$0xff]
        %v966 = vld [vmem:[%s156 + $0x18a0] sm:$0xff]
        %v967 = vld [vmem:[%s156 + $0x18a8] sm:$0xff]
        %v968 = vld [vmem:[%s156 + $0x18b0] sm:$0xff]
        %v969 = vld [vmem:[%s156 + $0x18b8] sm:$0xff]
        %v970 = vld [vmem:[%s156 + $0x18c0] sm:$0xff]
        %v971 = vld [vmem:[%s156 + $0x18c8] sm:$0xff]
        %v972 = vld [vmem:[%s156 + $0x18d0] sm:$0xff]
        %v973 = vld [vmem:[%s156 + $0x18d8] sm:$0xff]
        %v974 = vld [vmem:[%s156 + $0x18e0] sm:$0xff]
        %v975 = vld [vmem:[%s156 + $0x18e8] sm:$0xff]
        %v976 = vld [vmem:[%s156 + $0x18f0] sm:$0xff]
        %v977 = vld [vmem:[%s156 + $0x18f8] sm:$0xff]
        %v978 = vld [vmem:[%s156 + $0x1900] sm:$0xff]
        %v979 = vld [vmem:[%s156 + $0x1908] sm:$0xff]
        %v980 = vld [vmem:[%s156 + $0x1910] sm:$0xff]
        %v981 = vld [vmem:[%s156 + $0x1918] sm:$0xff]
        %v982 = vld [vmem:[%s156 + $0x1920] sm:$0xff]
        %v983 = vld [vmem:[%s156 + $0x1928] sm:$0xff]
        %v984 = vld [vmem:[%s156 + $0x1930] sm:$0xff]
        %v985 = vld [vmem:[%s156 + $0x1938] sm:$0xff]
        %v986 = vld [vmem:[%s156 + $0x1940] sm:$0xff]
        %v987 = vld [vmem:[%s156 + $0x1948] sm:$0xff]
        %v988 = vld [vmem:[%s156 + $0x1950] sm:$0xff]
        %v989 = vld [vmem:[%s156 + $0x1958] sm:$0xff]
        %v990 = vld [vmem:[%s156 + $0x1960] sm:$0xff]
        %v991 = vld [vmem:[%s156 + $0x1968] sm:$0xff]
        %v992 = vld [vmem:[%s156 + $0x1970] sm:$0xff]
        %v993 = vld [vmem:[%s156 + $0x1978] sm:$0xff]
        %v994 = vld [vmem:[%s156 + $0x1980] sm:$0xff]
        %v995 = vld [vmem:[%s156 + $0x1988] sm:$0xff]
        %v996 = vld [vmem:[%s156 + $0x1990] sm:$0xff]
        %v997 = vld [vmem:[%s156 + $0x1998] sm:$0xff]
        %v998 = vld [vmem:[%s156 + $0x19a0] sm:$0xff]
        %v999 = vld [vmem:[%s156 + $0x19a8] sm:$0xff]
        %v1000 = vld [vmem:[%s156 + $0x19b0] sm:$0xff]
        %v1001 = vld [vmem:[%s156 + $0x19b8] sm:$0xff]
        %v1002 = vld [vmem:[%s156 + $0x19c0] sm:$0xff]
        %v1003 = vld [vmem:[%s156 + $0x19c8] sm:$0xff]
        %v1004 = vld [vmem:[%s156 + $0x19d0] sm:$0xff]
        %v1005 = vld [vmem:[%s156 + $0x19d8] sm:$0xff]
        %v1006 = vld [vmem:[%s156 + $0x19e0] sm:$0xff]
        %v1007 = vld [vmem:[%s156 + $0x19e8] sm:$0xff]
        %v1008 = vld [vmem:[%s156 + $0x19f0] sm:$0xff]
        %v1009 = vld [vmem:[%s156 + $0x19f8] sm:$0xff]
        %v1010 = vld [vmem:[%s156 + $0x1a00] sm:$0xff]
        %v1011 = vld [vmem:[%s156 + $0x1a08] sm:$0xff]
        %v1012 = vld [vmem:[%s156 + $0x1a10] sm:$0xff]
        %v1013 = vld [vmem:[%s156 + $0x1a18] sm:$0xff]
        %v1014 = vld [vmem:[%s156 + $0x1a20] sm:$0xff]
        %v1015 = vld [vmem:[%s156 + $0x1a28] sm:$0xff]
        %v1016 = vld [vmem:[%s156 + $0x1a30] sm:$0xff]
        %v1017 = vld [vmem:[%s156 + $0x1a38] sm:$0xff]
        %v1018 = vld [vmem:[%s156 + $0x1a40] sm:$0xff]
        %v1019 = vld [vmem:[%s156 + $0x1a48] sm:$0xff]
        %v1020 = vld [vmem:[%s156 + $0x1a50] sm:$0xff]
        %v1021 = vld [vmem:[%s156 + $0x1a58] sm:$0xff]
        %v1022 = vld [vmem:[%s156 + $0x1a60] sm:$0xff]
        %v1023 = vld [vmem:[%s156 + $0x1a68] sm:$0xff]
        %v1024 = vld [vmem:[%s156 + $0x1a70] sm:$0xff]
        %v1025 = vld [vmem:[%s156 + $0x1a78] sm:$0xff]
        %v1026 = vld [vmem:[%s156 + $0x1a80] sm:$0xff]
        %v1027 = vld [vmem:[%s156 + $0x1a88] sm:$0xff]
        %v1028 = vld [vmem:[%s156 + $0x1a90] sm:$0xff]
        %v1029 = vld [vmem:[%s156 + $0x1a98] sm:$0xff]
        %v1030 = vld [vmem:[%s156 + $0x1aa0] sm:$0xff]
        %v1031 = vld [vmem:[%s156 + $0x1aa8] sm:$0xff]
        %v1032 = vld [vmem:[%s156 + $0x1ab0] sm:$0xff]
        %v1033 = vld [vmem:[%s156 + $0x1ab8] sm:$0xff]
        %v1034 = vld [vmem:[%s156 + $0x1ac0] sm:$0xff]
        %v1035 = vld [vmem:[%s156 + $0x1ac8] sm:$0xff]
        %v1036 = vld [vmem:[%s156 + $0x1ad0] sm:$0xff]
        %v1037 = vld [vmem:[%s156 + $0x1ad8] sm:$0xff]
        %v1038 = vld [vmem:[%s156 + $0x1ae0] sm:$0xff]
        %v1039 = vld [vmem:[%s156 + $0x1ae8] sm:$0xff]
        %v1040 = vld [vmem:[%s156 + $0x1af0] sm:$0xff]
        %v1041 = vld [vmem:[%s156 + $0x1af8] sm:$0xff]
        %v1042 = vld [vmem:[%s156 + $0x1b00] sm:$0xff]
        %v1043 = vld [vmem:[%s156 + $0x1b08] sm:$0xff]
        %v1044 = vld [vmem:[%s156 + $0x1b10] sm:$0xff]
        %v1045 = vld [vmem:[%s156 + $0x1b18] sm:$0xff]
        %v1046 = vld [vmem:[%s156 + $0x1b20] sm:$0xff]
        %v1047 = vld [vmem:[%s156 + $0x1b28] sm:$0xff]
        %v1048 = vld [vmem:[%s156 + $0x1b30] sm:$0xff]
        %v1049 = vld [vmem:[%s156 + $0x1b38] sm:$0xff]
        %v1050 = vld [vmem:[%s156 + $0x1b40] sm:$0xff]
        %v1051 = vld [vmem:[%s156 + $0x1b48] sm:$0xff]
        %v1052 = vld [vmem:[%s156 + $0x1b50] sm:$0xff]
        %v1053 = vld [vmem:[%s156 + $0x1b58] sm:$0xff]
        %v1054 = vld [vmem:[%s156 + $0x1b60] sm:$0xff]
        %v1055 = vld [vmem:[%s156 + $0x1b68] sm:$0xff]
        %v1056 = vld [vmem:[%s156 + $0x1b70] sm:$0xff]
        %v1057 = vld [vmem:[%s156 + $0x1b78] sm:$0xff]
        %v1058 = vld [vmem:[%s156 + $0x1b80] sm:$0xff]
        %v1059 = vld [vmem:[%s156 + $0x1b88] sm:$0xff]
        %v1060 = vld [vmem:[%s156 + $0x1b90] sm:$0xff]
        %v1061 = vld [vmem:[%s156 + $0x1b98] sm:$0xff]
        %v1062 = vld [vmem:[%s156 + $0x1ba0] sm:$0xff]
        %v1063 = vld [vmem:[%s156 + $0x1ba8] sm:$0xff]
        %v1064 = vld [vmem:[%s156 + $0x1bb0] sm:$0xff]
        %v1065 = vld [vmem:[%s156 + $0x1bb8] sm:$0xff]
        %v1066 = vld [vmem:[%s156 + $0x1bc0] sm:$0xff]
        %v1067 = vld [vmem:[%s156 + $0x1bc8] sm:$0xff]
        %v1068 = vld [vmem:[%s156 + $0x1bd0] sm:$0xff]
        %v1069 = vld [vmem:[%s156 + $0x1bd8] sm:$0xff]
        %v1070 = vld [vmem:[%s156 + $0x1be0] sm:$0xff]
        %v1071 = vld [vmem:[%s156 + $0x1be8] sm:$0xff]
        %v1072 = vld [vmem:[%s156 + $0x1bf0] sm:$0xff]
        %v1073 = vld [vmem:[%s156 + $0x1bf8] sm:$0xff]
        %v1074 = vld [vmem:[%s156 + $0x1c00] sm:$0xff]
        %v1075 = vld [vmem:[%s156 + $0x1c08] sm:$0xff]
        %v1076 = vld [vmem:[%s156 + $0x1c10] sm:$0xff]
        %v1077 = vld [vmem:[%s156 + $0x1c18] sm:$0xff]
        %v1078 = vld [vmem:[%s156 + $0x1c20] sm:$0xff]
        %v1079 = vld [vmem:[%s156 + $0x1c28] sm:$0xff]
        %v1080 = vld [vmem:[%s156 + $0x1c30] sm:$0xff]
        %v1081 = vld [vmem:[%s156 + $0x1c38] sm:$0xff]
        %v1082 = vld [vmem:[%s156 + $0x1c40] sm:$0xff]
        %v1083 = vld [vmem:[%s156 + $0x1c48] sm:$0xff]
        %v1084 = vld [vmem:[%s156 + $0x1c50] sm:$0xff]
        %v1085 = vld [vmem:[%s156 + $0x1c58] sm:$0xff]
        %v1086 = vld [vmem:[%s156 + $0x1c60] sm:$0xff]
        %v1087 = vld [vmem:[%s156 + $0x1c68] sm:$0xff]
        %v1088 = vld [vmem:[%s156 + $0x1c70] sm:$0xff]
        %v1089 = vld [vmem:[%s156 + $0x1c78] sm:$0xff]
        %v1090 = vld [vmem:[%s156 + $0x1c80] sm:$0xff]
        %v1091 = vld [vmem:[%s156 + $0x1c88] sm:$0xff]
        %v1092 = vld [vmem:[%s156 + $0x1c90] sm:$0xff]
        %v1093 = vld [vmem:[%s156 + $0x1c98] sm:$0xff]
        %v1094 = vld [vmem:[%s156 + $0x1ca0] sm:$0xff]
        %v1095 = vld [vmem:[%s156 + $0x1ca8] sm:$0xff]
        %v1096 = vld [vmem:[%s156 + $0x1cb0] sm:$0xff]
        %v1097 = vld [vmem:[%s156 + $0x1cb8] sm:$0xff]
        %v1098 = vld [vmem:[%s156 + $0x1cc0] sm:$0xff]
        %v1099 = vld [vmem:[%s156 + $0x1cc8] sm:$0xff]
        %v1100 = vld [vmem:[%s156 + $0x1cd0] sm:$0xff]
        %v1101 = vld [vmem:[%s156 + $0x1cd8] sm:$0xff]
        %v1102 = vld [vmem:[%s156 + $0x1ce0] sm:$0xff]
        %v1103 = vld [vmem:[%s156 + $0x1ce8] sm:$0xff]
        %v1104 = vld [vmem:[%s156 + $0x1cf0] sm:$0xff]
        %v1105 = vld [vmem:[%s156 + $0x1cf8] sm:$0xff]
        %v1106 = vld [vmem:[%s156 + $0x1d00] sm:$0xff]
        %v1107 = vld [vmem:[%s156 + $0x1d08] sm:$0xff]
        %v1108 = vld [vmem:[%s156 + $0x1d10] sm:$0xff]
        %v1109 = vld [vmem:[%s156 + $0x1d18] sm:$0xff]
        %v1110 = vld [vmem:[%s156 + $0x1d20] sm:$0xff]
        %v1111 = vld [vmem:[%s156 + $0x1d28] sm:$0xff]
        %v1112 = vld [vmem:[%s156 + $0x1d30] sm:$0xff]
        %v1113 = vld [vmem:[%s156 + $0x1d38] sm:$0xff]
        %v1114 = vld [vmem:[%s156 + $0x1d40] sm:$0xff]
        %v1115 = vld [vmem:[%s156 + $0x1d48] sm:$0xff]
        %v1116 = vld [vmem:[%s156 + $0x1d50] sm:$0xff]
        %v1117 = vld [vmem:[%s156 + $0x1d58] sm:$0xff]
        %v1118 = vld [vmem:[%s156 + $0x1d60] sm:$0xff]
        %v1119 = vld [vmem:[%s156 + $0x1d68] sm:$0xff]
        %v1120 = vld [vmem:[%s156 + $0x1d70] sm:$0xff]
        %v1121 = vld [vmem:[%s156 + $0x1d78] sm:$0xff]
        %v1122 = vld [vmem:[%s156 + $0x1d80] sm:$0xff]
        %v1123 = vld [vmem:[%s156 + $0x1d88] sm:$0xff]
        %v1124 = vld [vmem:[%s156 + $0x1d90] sm:$0xff]
        %v1125 = vld [vmem:[%s156 + $0x1d98] sm:$0xff]
        %v1126 = vld [vmem:[%s156 + $0x1da0] sm:$0xff]
        %v1127 = vld [vmem:[%s156 + $0x1da8] sm:$0xff]
        %v1128 = vld [vmem:[%s156 + $0x1db0] sm:$0xff]
        %v1129 = vld [vmem:[%s156 + $0x1db8] sm:$0xff]
        %v1130 = vld [vmem:[%s156 + $0x1dc0] sm:$0xff]
        %v1131 = vld [vmem:[%s156 + $0x1dc8] sm:$0xff]
        %v1132 = vld [vmem:[%s156 + $0x1dd0] sm:$0xff]
        %v1133 = vld [vmem:[%s156 + $0x1dd8] sm:$0xff]
        %v1134 = vld [vmem:[%s156 + $0x1de0] sm:$0xff]
        %v1135 = vld [vmem:[%s156 + $0x1de8] sm:$0xff]
        %v1136 = vld [vmem:[%s156 + $0x1df0] sm:$0xff]
        %v1137 = vld [vmem:[%s156 + $0x1df8] sm:$0xff]
        %v1138 = vld [vmem:[%s156 + $0x1e00] sm:$0xff]
        %v1139 = vld [vmem:[%s156 + $0x1e08] sm:$0xff]
        %v1140 = vld [vmem:[%s156 + $0x1e10] sm:$0xff]
        %v1141 = vld [vmem:[%s156 + $0x1e18] sm:$0xff]
        %v1142 = vld [vmem:[%s156 + $0x1e20] sm:$0xff]
        %v1143 = vld [vmem:[%s156 + $0x1e28] sm:$0xff]
        %v1144 = vld [vmem:[%s156 + $0x1e30] sm:$0xff]
        %v1145 = vld [vmem:[%s156 + $0x1e38] sm:$0xff]
        %v1146 = vld [vmem:[%s156 + $0x1e40] sm:$0xff]
        %v1147 = vld [vmem:[%s156 + $0x1e48] sm:$0xff]
        %v1148 = vld [vmem:[%s156 + $0x1e50] sm:$0xff]
        %v1149 = vld [vmem:[%s156 + $0x1e58] sm:$0xff]
        %v1150 = vld [vmem:[%s156 + $0x1e60] sm:$0xff]
        %v1151 = vld [vmem:[%s156 + $0x1e68] sm:$0xff]
        %v1152 = vld [vmem:[%s156 + $0x1e70] sm:$0xff]
        %v1153 = vld [vmem:[%s156 + $0x1e78] sm:$0xff]
        %v1154 = vld [vmem:[%s156 + $0x1e80] sm:$0xff]
        %v1155 = vld [vmem:[%s156 + $0x1e88] sm:$0xff]
        %v1156 = vld [vmem:[%s156 + $0x1e90] sm:$0xff]
        %v1157 = vld [vmem:[%s156 + $0x1e98] sm:$0xff]
        %v1158 = vld [vmem:[%s156 + $0x1ea0] sm:$0xff]
        %v1159 = vld [vmem:[%s156 + $0x1ea8] sm:$0xff]
        %v1160 = vld [vmem:[%s156 + $0x1eb0] sm:$0xff]
        %v1161 = vld [vmem:[%s156 + $0x1eb8] sm:$0xff]
        %v1162 = vld [vmem:[%s156 + $0x1ec0] sm:$0xff]
        %v1163 = vld [vmem:[%s156 + $0x1ec8] sm:$0xff]
        %v1164 = vld [vmem:[%s156 + $0x1ed0] sm:$0xff]
        %v1165 = vld [vmem:[%s156 + $0x1ed8] sm:$0xff]
        %v1166 = vld [vmem:[%s156 + $0x1ee0] sm:$0xff]
        %v1167 = vld [vmem:[%s156 + $0x1ee8] sm:$0xff]
        %v1168 = vld [vmem:[%s156 + $0x1ef0] sm:$0xff]
        %v1169 = vld [vmem:[%s156 + $0x1ef8] sm:$0xff]
        %v1170 = vld [vmem:[%s156 + $0x1f00] sm:$0xff]
        %v1171 = vld [vmem:[%s156 + $0x1f08] sm:$0xff]
        %v1172 = vld [vmem:[%s156 + $0x1f10] sm:$0xff]
        %v1173 = vld [vmem:[%s156 + $0x1f18] sm:$0xff]
        %v1174 = vld [vmem:[%s156 + $0x1f20] sm:$0xff]
        %v1175 = vld [vmem:[%s156 + $0x1f28] sm:$0xff]
        %v1176 = vld [vmem:[%s156 + $0x1f30] sm:$0xff]
        %v1177 = vld [vmem:[%s156 + $0x1f38] sm:$0xff]
        %v1178 = vld [vmem:[%s156 + $0x1f40] sm:$0xff]
        %v1179 = vld [vmem:[%s156 + $0x1f48] sm:$0xff]
        %v1180 = vld [vmem:[%s156 + $0x1f50] sm:$0xff]
        %v1181 = vld [vmem:[%s156 + $0x1f58] sm:$0xff]
        %v1182 = vld [vmem:[%s156 + $0x1f60] sm:$0xff]
        %v1183 = vld [vmem:[%s156 + $0x1f68] sm:$0xff]
        %v1184 = vld [vmem:[%s156 + $0x1f70] sm:$0xff]
        %v1185 = vld [vmem:[%s156 + $0x1f78] sm:$0xff]
        %v1186 = vld [vmem:[%s156 + $0x1f80] sm:$0xff]
        %v1187 = vld [vmem:[%s156 + $0x1f88] sm:$0xff]
        %v1188 = vld [vmem:[%s156 + $0x1f90] sm:$0xff]
        %v1189 = vld [vmem:[%s156 + $0x1f98] sm:$0xff]
        %v1190 = vld [vmem:[%s156 + $0x1fa0] sm:$0xff]
        %v1191 = vld [vmem:[%s156 + $0x1fa8] sm:$0xff]
        %v1192 = vld [vmem:[%s156 + $0x1fb0] sm:$0xff]
        %v1193 = vld [vmem:[%s156 + $0x1fb8] sm:$0xff]
        %v1194 = vld [vmem:[%s156 + $0x1fc0] sm:$0xff]
        %v1195 = vld [vmem:[%s156 + $0x1fc8] sm:$0xff]
        %v1196 = vld [vmem:[%s156 + $0x1fd0] sm:$0xff]
        %v1197 = vld [vmem:[%s156 + $0x1fd8] sm:$0xff]
        %v1198 = vld [vmem:[%s156 + $0x1fe0] sm:$0xff]
        %v1199 = vld [vmem:[%s156 + $0x1fe8] sm:$0xff]
        %v1200 = vld [vmem:[%s156 + $0x1ff0] sm:$0xff]
        %v1201 = vld [vmem:[%s156 + $0x1ff8] sm:$0xff]
        %v1202 = vunpack.c.l.bf16 %v178
        %v1203 = vunpack.c.h.bf16 %v178
        %v1204 = vunpack.c.l.bf16 %v179
        %v1205 = vunpack.c.h.bf16 %v179
        %v1206 = vunpack.c.l.bf16 %v180
        %v1207 = vunpack.c.h.bf16 %v180
        %v1208 = vunpack.c.l.bf16 %v181
        %v1209 = vunpack.c.h.bf16 %v181
        %v1210 = vunpack.c.l.bf16 %v182
        %v1211 = vunpack.c.h.bf16 %v182
        %v1212 = vunpack.c.l.bf16 %v183
        %v1213 = vunpack.c.h.bf16 %v183
        %v1214 = vunpack.c.l.bf16 %v184
        %v1215 = vunpack.c.h.bf16 %v184
        %v1216 = vunpack.c.l.bf16 %v185
        %v1217 = vunpack.c.h.bf16 %v185
        %v1218 = vunpack.c.l.bf16 %v186
        %v1219 = vunpack.c.h.bf16 %v186
        %v1220 = vunpack.c.l.bf16 %v187
        %v1221 = vunpack.c.h.bf16 %v187
        %v1222 = vunpack.c.l.bf16 %v188
        %v1223 = vunpack.c.h.bf16 %v188
        %v1224 = vunpack.c.l.bf16 %v189
        %v1225 = vunpack.c.h.bf16 %v189
        %v1226 = vunpack.c.l.bf16 %v190
        %v1227 = vunpack.c.h.bf16 %v190
        %v1228 = vunpack.c.l.bf16 %v191
        %v1229 = vunpack.c.h.bf16 %v191
        %v1230 = vunpack.c.l.bf16 %v192
        %v1231 = vunpack.c.h.bf16 %v192
        %v1232 = vunpack.c.l.bf16 %v193
        %v1233 = vunpack.c.h.bf16 %v193
        %v1234 = vunpack.c.l.bf16 %v194
        %v1235 = vunpack.c.h.bf16 %v194
        %v1236 = vunpack.c.l.bf16 %v195
        %v1237 = vunpack.c.h.bf16 %v195
        %v1238 = vunpack.c.l.bf16 %v196
        %v1239 = vunpack.c.h.bf16 %v196
        %v1240 = vunpack.c.l.bf16 %v197
        %v1241 = vunpack.c.h.bf16 %v197
        %v1242 = vunpack.c.l.bf16 %v198
        %v1243 = vunpack.c.h.bf16 %v198
        %v1244 = vunpack.c.l.bf16 %v199
        %v1245 = vunpack.c.h.bf16 %v199
        %v1246 = vunpack.c.l.bf16 %v200
        %v1247 = vunpack.c.h.bf16 %v200
        %v1248 = vunpack.c.l.bf16 %v201
        %v1249 = vunpack.c.h.bf16 %v201
        %v1250 = vunpack.c.l.bf16 %v202
        %v1251 = vunpack.c.h.bf16 %v202
        %v1252 = vunpack.c.l.bf16 %v203
        %v1253 = vunpack.c.h.bf16 %v203
        %v1254 = vunpack.c.l.bf16 %v204
        %v1255 = vunpack.c.h.bf16 %v204
        %v1256 = vunpack.c.l.bf16 %v205
        %v1257 = vunpack.c.h.bf16 %v205
        %v1258 = vunpack.c.l.bf16 %v206
        %v1259 = vunpack.c.h.bf16 %v206
        %v1260 = vunpack.c.l.bf16 %v207
        %v1261 = vunpack.c.h.bf16 %v207
        %v1262 = vunpack.c.l.bf16 %v208
        %v1263 = vunpack.c.h.bf16 %v208
        %v1264 = vunpack.c.l.bf16 %v209
        %v1265 = vunpack.c.h.bf16 %v209
        %v1266 = vunpack.c.l.bf16 %v210
        %v1267 = vunpack.c.h.bf16 %v210
        %v1268 = vunpack.c.l.bf16 %v211
        %v1269 = vunpack.c.h.bf16 %v211
        %v1270 = vunpack.c.l.bf16 %v212
        %v1271 = vunpack.c.h.bf16 %v212
        %v1272 = vunpack.c.l.bf16 %v213
        %v1273 = vunpack.c.h.bf16 %v213
        %v1274 = vunpack.c.l.bf16 %v214
        %v1275 = vunpack.c.h.bf16 %v214
        %v1276 = vunpack.c.l.bf16 %v215
        %v1277 = vunpack.c.h.bf16 %v215
        %v1278 = vunpack.c.l.bf16 %v216
        %v1279 = vunpack.c.h.bf16 %v216
        %v1280 = vunpack.c.l.bf16 %v217
        %v1281 = vunpack.c.h.bf16 %v217
        %v1282 = vunpack.c.l.bf16 %v218
        %v1283 = vunpack.c.h.bf16 %v218
        %v1284 = vunpack.c.l.bf16 %v219
        %v1285 = vunpack.c.h.bf16 %v219
        %v1286 = vunpack.c.l.bf16 %v220
        %v1287 = vunpack.c.h.bf16 %v220
        %v1288 = vunpack.c.l.bf16 %v221
        %v1289 = vunpack.c.h.bf16 %v221
        %v1290 = vunpack.c.l.bf16 %v222
        %v1291 = vunpack.c.h.bf16 %v222
        %v1292 = vunpack.c.l.bf16 %v223
        %v1293 = vunpack.c.h.bf16 %v223
        %v1294 = vunpack.c.l.bf16 %v224
        %v1295 = vunpack.c.h.bf16 %v224
        %v1296 = vunpack.c.l.bf16 %v225
        %v1297 = vunpack.c.h.bf16 %v225
        %v1298 = vunpack.c.l.bf16 %v226
        %v1299 = vunpack.c.h.bf16 %v226
        %v1300 = vunpack.c.l.bf16 %v227
        %v1301 = vunpack.c.h.bf16 %v227
        %v1302 = vunpack.c.l.bf16 %v228
        %v1303 = vunpack.c.h.bf16 %v228
        %v1304 = vunpack.c.l.bf16 %v229
        %v1305 = vunpack.c.h.bf16 %v229
        %v1306 = vunpack.c.l.bf16 %v230
        %v1307 = vunpack.c.h.bf16 %v230
        %v1308 = vunpack.c.l.bf16 %v231
        %v1309 = vunpack.c.h.bf16 %v231
        %v1310 = vunpack.c.l.bf16 %v232
        %v1311 = vunpack.c.h.bf16 %v232
        %v1312 = vunpack.c.l.bf16 %v233
        %v1313 = vunpack.c.h.bf16 %v233
        %v1314 = vunpack.c.l.bf16 %v234
        %v1315 = vunpack.c.h.bf16 %v234
        %v1316 = vunpack.c.l.bf16 %v235
        %v1317 = vunpack.c.h.bf16 %v235
        %v1318 = vunpack.c.l.bf16 %v236
        %v1319 = vunpack.c.h.bf16 %v236
        %v1320 = vunpack.c.l.bf16 %v237
        %v1321 = vunpack.c.h.bf16 %v237
        %v1322 = vunpack.c.l.bf16 %v238
        %v1323 = vunpack.c.h.bf16 %v238
        %v1324 = vunpack.c.l.bf16 %v239
        %v1325 = vunpack.c.h.bf16 %v239
        %v1326 = vunpack.c.l.bf16 %v240
        %v1327 = vunpack.c.h.bf16 %v240
        %v1328 = vunpack.c.l.bf16 %v241
        %v1329 = vunpack.c.h.bf16 %v241
        %v1330 = vunpack.c.l.bf16 %v242
        %v1331 = vunpack.c.h.bf16 %v242
        %v1332 = vunpack.c.l.bf16 %v243
        %v1333 = vunpack.c.h.bf16 %v243
        %v1334 = vunpack.c.l.bf16 %v244
        %v1335 = vunpack.c.h.bf16 %v244
        %v1336 = vunpack.c.l.bf16 %v245
        %v1337 = vunpack.c.h.bf16 %v245
        %v1338 = vunpack.c.l.bf16 %v246
        %v1339 = vunpack.c.h.bf16 %v246
        %v1340 = vunpack.c.l.bf16 %v247
        %v1341 = vunpack.c.h.bf16 %v247
        %v1342 = vunpack.c.l.bf16 %v248
        %v1343 = vunpack.c.h.bf16 %v248
        %v1344 = vunpack.c.l.bf16 %v249
        %v1345 = vunpack.c.h.bf16 %v249
        %v1346 = vunpack.c.l.bf16 %v250
        %v1347 = vunpack.c.h.bf16 %v250
        %v1348 = vunpack.c.l.bf16 %v251
        %v1349 = vunpack.c.h.bf16 %v251
        %v1350 = vunpack.c.l.bf16 %v252
        %v1351 = vunpack.c.h.bf16 %v252
        %v1352 = vunpack.c.l.bf16 %v253
        %v1353 = vunpack.c.h.bf16 %v253
        %v1354 = vunpack.c.l.bf16 %v254
        %v1355 = vunpack.c.h.bf16 %v254
        %v1356 = vunpack.c.l.bf16 %v255
        %v1357 = vunpack.c.h.bf16 %v255
        %v1358 = vunpack.c.l.bf16 %v256
        %v1359 = vunpack.c.h.bf16 %v256
        %v1360 = vunpack.c.l.bf16 %v257
        %v1361 = vunpack.c.h.bf16 %v257
        %v1362 = vunpack.c.l.bf16 %v258
        %v1363 = vunpack.c.h.bf16 %v258
        %v1364 = vunpack.c.l.bf16 %v259
        %v1365 = vunpack.c.h.bf16 %v259
        %v1366 = vunpack.c.l.bf16 %v260
        %v1367 = vunpack.c.h.bf16 %v260
        %v1368 = vunpack.c.l.bf16 %v261
        %v1369 = vunpack.c.h.bf16 %v261
        %v1370 = vunpack.c.l.bf16 %v262
        %v1371 = vunpack.c.h.bf16 %v262
        %v1372 = vunpack.c.l.bf16 %v263
        %v1373 = vunpack.c.h.bf16 %v263
        %v1374 = vunpack.c.l.bf16 %v264
        %v1375 = vunpack.c.h.bf16 %v264
        %v1376 = vunpack.c.l.bf16 %v265
        %v1377 = vunpack.c.h.bf16 %v265
        %v1378 = vunpack.c.l.bf16 %v266
        %v1379 = vunpack.c.h.bf16 %v266
        %v1380 = vunpack.c.l.bf16 %v267
        %v1381 = vunpack.c.h.bf16 %v267
        %v1382 = vunpack.c.l.bf16 %v268
        %v1383 = vunpack.c.h.bf16 %v268
        %v1384 = vunpack.c.l.bf16 %v269
        %v1385 = vunpack.c.h.bf16 %v269
        %v1386 = vunpack.c.l.bf16 %v270
        %v1387 = vunpack.c.h.bf16 %v270
        %v1388 = vunpack.c.l.bf16 %v271
        %v1389 = vunpack.c.h.bf16 %v271
        %v1390 = vunpack.c.l.bf16 %v272
        %v1391 = vunpack.c.h.bf16 %v272
        %v1392 = vunpack.c.l.bf16 %v273
        %v1393 = vunpack.c.h.bf16 %v273
        %v1394 = vunpack.c.l.bf16 %v274
        %v1395 = vunpack.c.h.bf16 %v274
        %v1396 = vunpack.c.l.bf16 %v275
        %v1397 = vunpack.c.h.bf16 %v275
        %v1398 = vunpack.c.l.bf16 %v276
        %v1399 = vunpack.c.h.bf16 %v276
        %v1400 = vunpack.c.l.bf16 %v277
        %v1401 = vunpack.c.h.bf16 %v277
        %v1402 = vunpack.c.l.bf16 %v278
        %v1403 = vunpack.c.h.bf16 %v278
        %v1404 = vunpack.c.l.bf16 %v279
        %v1405 = vunpack.c.h.bf16 %v279
        %v1406 = vunpack.c.l.bf16 %v280
        %v1407 = vunpack.c.h.bf16 %v280
        %v1408 = vunpack.c.l.bf16 %v281
        %v1409 = vunpack.c.h.bf16 %v281
        %v1410 = vunpack.c.l.bf16 %v282
        %v1411 = vunpack.c.h.bf16 %v282
        %v1412 = vunpack.c.l.bf16 %v283
        %v1413 = vunpack.c.h.bf16 %v283
        %v1414 = vunpack.c.l.bf16 %v284
        %v1415 = vunpack.c.h.bf16 %v284
        %v1416 = vunpack.c.l.bf16 %v285
        %v1417 = vunpack.c.h.bf16 %v285
        %v1418 = vunpack.c.l.bf16 %v286
        %v1419 = vunpack.c.h.bf16 %v286
        %v1420 = vunpack.c.l.bf16 %v287
        %v1421 = vunpack.c.h.bf16 %v287
        %v1422 = vunpack.c.l.bf16 %v288
        %v1423 = vunpack.c.h.bf16 %v288
        %v1424 = vunpack.c.l.bf16 %v289
        %v1425 = vunpack.c.h.bf16 %v289
        %v1426 = vunpack.c.l.bf16 %v290
        %v1427 = vunpack.c.h.bf16 %v290
        %v1428 = vunpack.c.l.bf16 %v291
        %v1429 = vunpack.c.h.bf16 %v291
        %v1430 = vunpack.c.l.bf16 %v292
        %v1431 = vunpack.c.h.bf16 %v292
        %v1432 = vunpack.c.l.bf16 %v293
        %v1433 = vunpack.c.h.bf16 %v293
        %v1434 = vunpack.c.l.bf16 %v294
        %v1435 = vunpack.c.h.bf16 %v294
        %v1436 = vunpack.c.l.bf16 %v295
        %v1437 = vunpack.c.h.bf16 %v295
        %v1438 = vunpack.c.l.bf16 %v296
        %v1439 = vunpack.c.h.bf16 %v296
        %v1440 = vunpack.c.l.bf16 %v297
        %v1441 = vunpack.c.h.bf16 %v297
        %v1442 = vunpack.c.l.bf16 %v298
        %v1443 = vunpack.c.h.bf16 %v298
        %v1444 = vunpack.c.l.bf16 %v299
        %v1445 = vunpack.c.h.bf16 %v299
        %v1446 = vunpack.c.l.bf16 %v300
        %v1447 = vunpack.c.h.bf16 %v300
        %v1448 = vunpack.c.l.bf16 %v301
        %v1449 = vunpack.c.h.bf16 %v301
        %v1450 = vunpack.c.l.bf16 %v302
        %v1451 = vunpack.c.h.bf16 %v302
        %v1452 = vunpack.c.l.bf16 %v303
        %v1453 = vunpack.c.h.bf16 %v303
        %v1454 = vunpack.c.l.bf16 %v304
        %v1455 = vunpack.c.h.bf16 %v304
        %v1456 = vunpack.c.l.bf16 %v305
        %v1457 = vunpack.c.h.bf16 %v305
        %v1458 = vunpack.c.l.bf16 %v306
        %v1459 = vunpack.c.h.bf16 %v306
        %v1460 = vunpack.c.l.bf16 %v307
        %v1461 = vunpack.c.h.bf16 %v307
        %v1462 = vunpack.c.l.bf16 %v308
        %v1463 = vunpack.c.h.bf16 %v308
        %v1464 = vunpack.c.l.bf16 %v309
        %v1465 = vunpack.c.h.bf16 %v309
        %v1466 = vunpack.c.l.bf16 %v310
        %v1467 = vunpack.c.h.bf16 %v310
        %v1468 = vunpack.c.l.bf16 %v311
        %v1469 = vunpack.c.h.bf16 %v311
        %v1470 = vunpack.c.l.bf16 %v312
        %v1471 = vunpack.c.h.bf16 %v312
        %v1472 = vunpack.c.l.bf16 %v313
        %v1473 = vunpack.c.h.bf16 %v313
        %v1474 = vunpack.c.l.bf16 %v314
        %v1475 = vunpack.c.h.bf16 %v314
        %v1476 = vunpack.c.l.bf16 %v315
        %v1477 = vunpack.c.h.bf16 %v315
        %v1478 = vunpack.c.l.bf16 %v316
        %v1479 = vunpack.c.h.bf16 %v316
        %v1480 = vunpack.c.l.bf16 %v317
        %v1481 = vunpack.c.h.bf16 %v317
        %v1482 = vunpack.c.l.bf16 %v318
        %v1483 = vunpack.c.h.bf16 %v318
        %v1484 = vunpack.c.l.bf16 %v319
        %v1485 = vunpack.c.h.bf16 %v319
        %v1486 = vunpack.c.l.bf16 %v320
        %v1487 = vunpack.c.h.bf16 %v320
        %v1488 = vunpack.c.l.bf16 %v321
        %v1489 = vunpack.c.h.bf16 %v321
        %v1490 = vunpack.c.l.bf16 %v322
        %v1491 = vunpack.c.h.bf16 %v322
        %v1492 = vunpack.c.l.bf16 %v323
        %v1493 = vunpack.c.h.bf16 %v323
        %v1494 = vunpack.c.l.bf16 %v324
        %v1495 = vunpack.c.h.bf16 %v324
        %v1496 = vunpack.c.l.bf16 %v325
        %v1497 = vunpack.c.h.bf16 %v325
        %v1498 = vunpack.c.l.bf16 %v326
        %v1499 = vunpack.c.h.bf16 %v326
        %v1500 = vunpack.c.l.bf16 %v327
        %v1501 = vunpack.c.h.bf16 %v327
        %v1502 = vunpack.c.l.bf16 %v328
        %v1503 = vunpack.c.h.bf16 %v328
        %v1504 = vunpack.c.l.bf16 %v329
        %v1505 = vunpack.c.h.bf16 %v329
        %v1506 = vunpack.c.l.bf16 %v330
        %v1507 = vunpack.c.h.bf16 %v330
        %v1508 = vunpack.c.l.bf16 %v331
        %v1509 = vunpack.c.h.bf16 %v331
        %v1510 = vunpack.c.l.bf16 %v332
        %v1511 = vunpack.c.h.bf16 %v332
        %v1512 = vunpack.c.l.bf16 %v333
        %v1513 = vunpack.c.h.bf16 %v333
        %v1514 = vunpack.c.l.bf16 %v334
        %v1515 = vunpack.c.h.bf16 %v334
        %v1516 = vunpack.c.l.bf16 %v335
        %v1517 = vunpack.c.h.bf16 %v335
        %v1518 = vunpack.c.l.bf16 %v336
        %v1519 = vunpack.c.h.bf16 %v336
        %v1520 = vunpack.c.l.bf16 %v337
        %v1521 = vunpack.c.h.bf16 %v337
        %v1522 = vunpack.c.l.bf16 %v338
        %v1523 = vunpack.c.h.bf16 %v338
        %v1524 = vunpack.c.l.bf16 %v339
        %v1525 = vunpack.c.h.bf16 %v339
        %v1526 = vunpack.c.l.bf16 %v340
        %v1527 = vunpack.c.h.bf16 %v340
        %v1528 = vunpack.c.l.bf16 %v341
        %v1529 = vunpack.c.h.bf16 %v341
        %v1530 = vunpack.c.l.bf16 %v342
        %v1531 = vunpack.c.h.bf16 %v342
        %v1532 = vunpack.c.l.bf16 %v343
        %v1533 = vunpack.c.h.bf16 %v343
        %v1534 = vunpack.c.l.bf16 %v344
        %v1535 = vunpack.c.h.bf16 %v344
        %v1536 = vunpack.c.l.bf16 %v345
        %v1537 = vunpack.c.h.bf16 %v345
        %v1538 = vunpack.c.l.bf16 %v346
        %v1539 = vunpack.c.h.bf16 %v346
        %v1540 = vunpack.c.l.bf16 %v347
        %v1541 = vunpack.c.h.bf16 %v347
        %v1542 = vunpack.c.l.bf16 %v348
        %v1543 = vunpack.c.h.bf16 %v348
        %v1544 = vunpack.c.l.bf16 %v349
        %v1545 = vunpack.c.h.bf16 %v349
        %v1546 = vunpack.c.l.bf16 %v350
        %v1547 = vunpack.c.h.bf16 %v350
        %v1548 = vunpack.c.l.bf16 %v351
        %v1549 = vunpack.c.h.bf16 %v351
        %v1550 = vunpack.c.l.bf16 %v352
        %v1551 = vunpack.c.h.bf16 %v352
        %v1552 = vunpack.c.l.bf16 %v353
        %v1553 = vunpack.c.h.bf16 %v353
        %v1554 = vunpack.c.l.bf16 %v354
        %v1555 = vunpack.c.h.bf16 %v354
        %v1556 = vunpack.c.l.bf16 %v355
        %v1557 = vunpack.c.h.bf16 %v355
        %v1558 = vunpack.c.l.bf16 %v356
        %v1559 = vunpack.c.h.bf16 %v356
        %v1560 = vunpack.c.l.bf16 %v357
        %v1561 = vunpack.c.h.bf16 %v357
        %v1562 = vunpack.c.l.bf16 %v358
        %v1563 = vunpack.c.h.bf16 %v358
        %v1564 = vunpack.c.l.bf16 %v359
        %v1565 = vunpack.c.h.bf16 %v359
        %v1566 = vunpack.c.l.bf16 %v360
        %v1567 = vunpack.c.h.bf16 %v360
        %v1568 = vunpack.c.l.bf16 %v361
        %v1569 = vunpack.c.h.bf16 %v361
        %v1570 = vunpack.c.l.bf16 %v362
        %v1571 = vunpack.c.h.bf16 %v362
        %v1572 = vunpack.c.l.bf16 %v363
        %v1573 = vunpack.c.h.bf16 %v363
        %v1574 = vunpack.c.l.bf16 %v364
        %v1575 = vunpack.c.h.bf16 %v364
        %v1576 = vunpack.c.l.bf16 %v365
        %v1577 = vunpack.c.h.bf16 %v365
        %v1578 = vunpack.c.l.bf16 %v366
        %v1579 = vunpack.c.h.bf16 %v366
        %v1580 = vunpack.c.l.bf16 %v367
        %v1581 = vunpack.c.h.bf16 %v367
        %v1582 = vunpack.c.l.bf16 %v368
        %v1583 = vunpack.c.h.bf16 %v368
        %v1584 = vunpack.c.l.bf16 %v369
        %v1585 = vunpack.c.h.bf16 %v369
        %v1586 = vunpack.c.l.bf16 %v370
        %v1587 = vunpack.c.h.bf16 %v370
        %v1588 = vunpack.c.l.bf16 %v371
        %v1589 = vunpack.c.h.bf16 %v371
        %v1590 = vunpack.c.l.bf16 %v372
        %v1591 = vunpack.c.h.bf16 %v372
        %v1592 = vunpack.c.l.bf16 %v373
        %v1593 = vunpack.c.h.bf16 %v373
        %v1594 = vunpack.c.l.bf16 %v374
        %v1595 = vunpack.c.h.bf16 %v374
        %v1596 = vunpack.c.l.bf16 %v375
        %v1597 = vunpack.c.h.bf16 %v375
        %v1598 = vunpack.c.l.bf16 %v376
        %v1599 = vunpack.c.h.bf16 %v376
        %v1600 = vunpack.c.l.bf16 %v377
        %v1601 = vunpack.c.h.bf16 %v377
        %v1602 = vunpack.c.l.bf16 %v378
        %v1603 = vunpack.c.h.bf16 %v378
        %v1604 = vunpack.c.l.bf16 %v379
        %v1605 = vunpack.c.h.bf16 %v379
        %v1606 = vunpack.c.l.bf16 %v380
        %v1607 = vunpack.c.h.bf16 %v380
        %v1608 = vunpack.c.l.bf16 %v381
        %v1609 = vunpack.c.h.bf16 %v381
        %v1610 = vunpack.c.l.bf16 %v382
        %v1611 = vunpack.c.h.bf16 %v382
        %v1612 = vunpack.c.l.bf16 %v383
        %v1613 = vunpack.c.h.bf16 %v383
        %v1614 = vunpack.c.l.bf16 %v384
        %v1615 = vunpack.c.h.bf16 %v384
        %v1616 = vunpack.c.l.bf16 %v385
        %v1617 = vunpack.c.h.bf16 %v385
        %v1618 = vunpack.c.l.bf16 %v386
        %v1619 = vunpack.c.h.bf16 %v386
        %v1620 = vunpack.c.l.bf16 %v387
        %v1621 = vunpack.c.h.bf16 %v387
        %v1622 = vunpack.c.l.bf16 %v388
        %v1623 = vunpack.c.h.bf16 %v388
        %v1624 = vunpack.c.l.bf16 %v389
        %v1625 = vunpack.c.h.bf16 %v389
        %v1626 = vunpack.c.l.bf16 %v390
        %v1627 = vunpack.c.h.bf16 %v390
        %v1628 = vunpack.c.l.bf16 %v391
        %v1629 = vunpack.c.h.bf16 %v391
        %v1630 = vunpack.c.l.bf16 %v392
        %v1631 = vunpack.c.h.bf16 %v392
        %v1632 = vunpack.c.l.bf16 %v393
        %v1633 = vunpack.c.h.bf16 %v393
        %v1634 = vunpack.c.l.bf16 %v394
        %v1635 = vunpack.c.h.bf16 %v394
        %v1636 = vunpack.c.l.bf16 %v395
        %v1637 = vunpack.c.h.bf16 %v395
        %v1638 = vunpack.c.l.bf16 %v396
        %v1639 = vunpack.c.h.bf16 %v396
        %v1640 = vunpack.c.l.bf16 %v397
        %v1641 = vunpack.c.h.bf16 %v397
        %v1642 = vunpack.c.l.bf16 %v398
        %v1643 = vunpack.c.h.bf16 %v398
        %v1644 = vunpack.c.l.bf16 %v399
        %v1645 = vunpack.c.h.bf16 %v399
        %v1646 = vunpack.c.l.bf16 %v400
        %v1647 = vunpack.c.h.bf16 %v400
        %v1648 = vunpack.c.l.bf16 %v401
        %v1649 = vunpack.c.h.bf16 %v401
        %v1650 = vunpack.c.l.bf16 %v402
        %v1651 = vunpack.c.h.bf16 %v402
        %v1652 = vunpack.c.l.bf16 %v403
        %v1653 = vunpack.c.h.bf16 %v403
        %v1654 = vunpack.c.l.bf16 %v404
        %v1655 = vunpack.c.h.bf16 %v404
        %v1656 = vunpack.c.l.bf16 %v405
        %v1657 = vunpack.c.h.bf16 %v405
        %v1658 = vunpack.c.l.bf16 %v406
        %v1659 = vunpack.c.h.bf16 %v406
        %v1660 = vunpack.c.l.bf16 %v407
        %v1661 = vunpack.c.h.bf16 %v407
        %v1662 = vunpack.c.l.bf16 %v408
        %v1663 = vunpack.c.h.bf16 %v408
        %v1664 = vunpack.c.l.bf16 %v409
        %v1665 = vunpack.c.h.bf16 %v409
        %v1666 = vunpack.c.l.bf16 %v410
        %v1667 = vunpack.c.h.bf16 %v410
        %v1668 = vunpack.c.l.bf16 %v411
        %v1669 = vunpack.c.h.bf16 %v411
        %v1670 = vunpack.c.l.bf16 %v412
        %v1671 = vunpack.c.h.bf16 %v412
        %v1672 = vunpack.c.l.bf16 %v413
        %v1673 = vunpack.c.h.bf16 %v413
        %v1674 = vunpack.c.l.bf16 %v414
        %v1675 = vunpack.c.h.bf16 %v414
        %v1676 = vunpack.c.l.bf16 %v415
        %v1677 = vunpack.c.h.bf16 %v415
        %v1678 = vunpack.c.l.bf16 %v416
        %v1679 = vunpack.c.h.bf16 %v416
        %v1680 = vunpack.c.l.bf16 %v417
        %v1681 = vunpack.c.h.bf16 %v417
        %v1682 = vunpack.c.l.bf16 %v418
        %v1683 = vunpack.c.h.bf16 %v418
        %v1684 = vunpack.c.l.bf16 %v419
        %v1685 = vunpack.c.h.bf16 %v419
        %v1686 = vunpack.c.l.bf16 %v420
        %v1687 = vunpack.c.h.bf16 %v420
        %v1688 = vunpack.c.l.bf16 %v421
        %v1689 = vunpack.c.h.bf16 %v421
        %v1690 = vunpack.c.l.bf16 %v422
        %v1691 = vunpack.c.h.bf16 %v422
        %v1692 = vunpack.c.l.bf16 %v423
        %v1693 = vunpack.c.h.bf16 %v423
        %v1694 = vunpack.c.l.bf16 %v424
        %v1695 = vunpack.c.h.bf16 %v424
        %v1696 = vunpack.c.l.bf16 %v425
        %v1697 = vunpack.c.h.bf16 %v425
        %v1698 = vunpack.c.l.bf16 %v426
        %v1699 = vunpack.c.h.bf16 %v426
        %v1700 = vunpack.c.l.bf16 %v427
        %v1701 = vunpack.c.h.bf16 %v427
        %v1702 = vunpack.c.l.bf16 %v428
        %v1703 = vunpack.c.h.bf16 %v428
        %v1704 = vunpack.c.l.bf16 %v429
        %v1705 = vunpack.c.h.bf16 %v429
        %v1706 = vunpack.c.l.bf16 %v430
        %v1707 = vunpack.c.h.bf16 %v430
        %v1708 = vunpack.c.l.bf16 %v431
        %v1709 = vunpack.c.h.bf16 %v431
        %v1710 = vunpack.c.l.bf16 %v432
        %v1711 = vunpack.c.h.bf16 %v432
        %v1712 = vunpack.c.l.bf16 %v433
        %v1713 = vunpack.c.h.bf16 %v433
        %v1714 = vunpack.c.l.bf16 %v434
        %v1715 = vunpack.c.h.bf16 %v434
        %v1716 = vunpack.c.l.bf16 %v435
        %v1717 = vunpack.c.h.bf16 %v435
        %v1718 = vunpack.c.l.bf16 %v436
        %v1719 = vunpack.c.h.bf16 %v436
        %v1720 = vunpack.c.l.bf16 %v437
        %v1721 = vunpack.c.h.bf16 %v437
        %v1722 = vunpack.c.l.bf16 %v438
        %v1723 = vunpack.c.h.bf16 %v438
        %v1724 = vunpack.c.l.bf16 %v439
        %v1725 = vunpack.c.h.bf16 %v439
        %v1726 = vunpack.c.l.bf16 %v440
        %v1727 = vunpack.c.h.bf16 %v440
        %v1728 = vunpack.c.l.bf16 %v441
        %v1729 = vunpack.c.h.bf16 %v441
        %v1730 = vunpack.c.l.bf16 %v442
        %v1731 = vunpack.c.h.bf16 %v442
        %v1732 = vunpack.c.l.bf16 %v443
        %v1733 = vunpack.c.h.bf16 %v443
        %v1734 = vunpack.c.l.bf16 %v444
        %v1735 = vunpack.c.h.bf16 %v444
        %v1736 = vunpack.c.l.bf16 %v445
        %v1737 = vunpack.c.h.bf16 %v445
        %v1738 = vunpack.c.l.bf16 %v446
        %v1739 = vunpack.c.h.bf16 %v446
        %v1740 = vunpack.c.l.bf16 %v447
        %v1741 = vunpack.c.h.bf16 %v447
        %v1742 = vunpack.c.l.bf16 %v448
        %v1743 = vunpack.c.h.bf16 %v448
        %v1744 = vunpack.c.l.bf16 %v449
        %v1745 = vunpack.c.h.bf16 %v449
        %v1746 = vunpack.c.l.bf16 %v450
        %v1747 = vunpack.c.h.bf16 %v450
        %v1748 = vunpack.c.l.bf16 %v451
        %v1749 = vunpack.c.h.bf16 %v451
        %v1750 = vunpack.c.l.bf16 %v452
        %v1751 = vunpack.c.h.bf16 %v452
        %v1752 = vunpack.c.l.bf16 %v453
        %v1753 = vunpack.c.h.bf16 %v453
        %v1754 = vunpack.c.l.bf16 %v454
        %v1755 = vunpack.c.h.bf16 %v454
        %v1756 = vunpack.c.l.bf16 %v455
        %v1757 = vunpack.c.h.bf16 %v455
        %v1758 = vunpack.c.l.bf16 %v456
        %v1759 = vunpack.c.h.bf16 %v456
        %v1760 = vunpack.c.l.bf16 %v457
        %v1761 = vunpack.c.h.bf16 %v457
        %v1762 = vunpack.c.l.bf16 %v458
        %v1763 = vunpack.c.h.bf16 %v458
        %v1764 = vunpack.c.l.bf16 %v459
        %v1765 = vunpack.c.h.bf16 %v459
        %v1766 = vunpack.c.l.bf16 %v460
        %v1767 = vunpack.c.h.bf16 %v460
        %v1768 = vunpack.c.l.bf16 %v461
        %v1769 = vunpack.c.h.bf16 %v461
        %v1770 = vunpack.c.l.bf16 %v462
        %v1771 = vunpack.c.h.bf16 %v462
        %v1772 = vunpack.c.l.bf16 %v463
        %v1773 = vunpack.c.h.bf16 %v463
        %v1774 = vunpack.c.l.bf16 %v464
        %v1775 = vunpack.c.h.bf16 %v464
        %v1776 = vunpack.c.l.bf16 %v465
        %v1777 = vunpack.c.h.bf16 %v465
        %v1778 = vunpack.c.l.bf16 %v466
        %v1779 = vunpack.c.h.bf16 %v466
        %v1780 = vunpack.c.l.bf16 %v467
        %v1781 = vunpack.c.h.bf16 %v467
        %v1782 = vunpack.c.l.bf16 %v468
        %v1783 = vunpack.c.h.bf16 %v468
        %v1784 = vunpack.c.l.bf16 %v469
        %v1785 = vunpack.c.h.bf16 %v469
        %v1786 = vunpack.c.l.bf16 %v470
        %v1787 = vunpack.c.h.bf16 %v470
        %v1788 = vunpack.c.l.bf16 %v471
        %v1789 = vunpack.c.h.bf16 %v471
        %v1790 = vunpack.c.l.bf16 %v472
        %v1791 = vunpack.c.h.bf16 %v472
        %v1792 = vunpack.c.l.bf16 %v473
        %v1793 = vunpack.c.h.bf16 %v473
        %v1794 = vunpack.c.l.bf16 %v474
        %v1795 = vunpack.c.h.bf16 %v474
        %v1796 = vunpack.c.l.bf16 %v475
        %v1797 = vunpack.c.h.bf16 %v475
        %v1798 = vunpack.c.l.bf16 %v476
        %v1799 = vunpack.c.h.bf16 %v476
        %v1800 = vunpack.c.l.bf16 %v477
        %v1801 = vunpack.c.h.bf16 %v477
        %v1802 = vunpack.c.l.bf16 %v478
        %v1803 = vunpack.c.h.bf16 %v478
        %v1804 = vunpack.c.l.bf16 %v479
        %v1805 = vunpack.c.h.bf16 %v479
        %v1806 = vunpack.c.l.bf16 %v480
        %v1807 = vunpack.c.h.bf16 %v480
        %v1808 = vunpack.c.l.bf16 %v481
        %v1809 = vunpack.c.h.bf16 %v481
        %v1810 = vunpack.c.l.bf16 %v482
        %v1811 = vunpack.c.h.bf16 %v482
        %v1812 = vunpack.c.l.bf16 %v483
        %v1813 = vunpack.c.h.bf16 %v483
        %v1814 = vunpack.c.l.bf16 %v484
        %v1815 = vunpack.c.h.bf16 %v484
        %v1816 = vunpack.c.l.bf16 %v485
        %v1817 = vunpack.c.h.bf16 %v485
        %v1818 = vunpack.c.l.bf16 %v486
        %v1819 = vunpack.c.h.bf16 %v486
        %v1820 = vunpack.c.l.bf16 %v487
        %v1821 = vunpack.c.h.bf16 %v487
        %v1822 = vunpack.c.l.bf16 %v488
        %v1823 = vunpack.c.h.bf16 %v488
        %v1824 = vunpack.c.l.bf16 %v489
        %v1825 = vunpack.c.h.bf16 %v489
        %v1826 = vunpack.c.l.bf16 %v490
        %v1827 = vunpack.c.h.bf16 %v490
        %v1828 = vunpack.c.l.bf16 %v491
        %v1829 = vunpack.c.h.bf16 %v491
        %v1830 = vunpack.c.l.bf16 %v492
        %v1831 = vunpack.c.h.bf16 %v492
        %v1832 = vunpack.c.l.bf16 %v493
        %v1833 = vunpack.c.h.bf16 %v493
        %v1834 = vunpack.c.l.bf16 %v494
        %v1835 = vunpack.c.h.bf16 %v494
        %v1836 = vunpack.c.l.bf16 %v495
        %v1837 = vunpack.c.h.bf16 %v495
        %v1838 = vunpack.c.l.bf16 %v496
        %v1839 = vunpack.c.h.bf16 %v496
        %v1840 = vunpack.c.l.bf16 %v497
        %v1841 = vunpack.c.h.bf16 %v497
        %v1842 = vunpack.c.l.bf16 %v498
        %v1843 = vunpack.c.h.bf16 %v498
        %v1844 = vunpack.c.l.bf16 %v499
        %v1845 = vunpack.c.h.bf16 %v499
        %v1846 = vunpack.c.l.bf16 %v500
        %v1847 = vunpack.c.h.bf16 %v500
        %v1848 = vunpack.c.l.bf16 %v501
        %v1849 = vunpack.c.h.bf16 %v501
        %v1850 = vunpack.c.l.bf16 %v502
        %v1851 = vunpack.c.h.bf16 %v502
        %v1852 = vunpack.c.l.bf16 %v503
        %v1853 = vunpack.c.h.bf16 %v503
        %v1854 = vunpack.c.l.bf16 %v504
        %v1855 = vunpack.c.h.bf16 %v504
        %v1856 = vunpack.c.l.bf16 %v505
        %v1857 = vunpack.c.h.bf16 %v505
        %v1858 = vunpack.c.l.bf16 %v506
        %v1859 = vunpack.c.h.bf16 %v506
        %v1860 = vunpack.c.l.bf16 %v507
        %v1861 = vunpack.c.h.bf16 %v507
        %v1862 = vunpack.c.l.bf16 %v508
        %v1863 = vunpack.c.h.bf16 %v508
        %v1864 = vunpack.c.l.bf16 %v509
        %v1865 = vunpack.c.h.bf16 %v509
        %v1866 = vunpack.c.l.bf16 %v510
        %v1867 = vunpack.c.h.bf16 %v510
        %v1868 = vunpack.c.l.bf16 %v511
        %v1869 = vunpack.c.h.bf16 %v511
        %v1870 = vunpack.c.l.bf16 %v512
        %v1871 = vunpack.c.h.bf16 %v512
        %v1872 = vunpack.c.l.bf16 %v513
        %v1873 = vunpack.c.h.bf16 %v513
        %v1874 = vunpack.c.l.bf16 %v514
        %v1875 = vunpack.c.h.bf16 %v514
        %v1876 = vunpack.c.l.bf16 %v515
        %v1877 = vunpack.c.h.bf16 %v515
        %v1878 = vunpack.c.l.bf16 %v516
        %v1879 = vunpack.c.h.bf16 %v516
        %v1880 = vunpack.c.l.bf16 %v517
        %v1881 = vunpack.c.h.bf16 %v517
        %v1882 = vunpack.c.l.bf16 %v518
        %v1883 = vunpack.c.h.bf16 %v518
        %v1884 = vunpack.c.l.bf16 %v519
        %v1885 = vunpack.c.h.bf16 %v519
        %v1886 = vunpack.c.l.bf16 %v520
        %v1887 = vunpack.c.h.bf16 %v520
        %v1888 = vunpack.c.l.bf16 %v521
        %v1889 = vunpack.c.h.bf16 %v521
        %v1890 = vunpack.c.l.bf16 %v522
        %v1891 = vunpack.c.h.bf16 %v522
        %v1892 = vunpack.c.l.bf16 %v523
        %v1893 = vunpack.c.h.bf16 %v523
        %v1894 = vunpack.c.l.bf16 %v524
        %v1895 = vunpack.c.h.bf16 %v524
        %v1896 = vunpack.c.l.bf16 %v525
        %v1897 = vunpack.c.h.bf16 %v525
        %v1898 = vunpack.c.l.bf16 %v526
        %v1899 = vunpack.c.h.bf16 %v526
        %v1900 = vunpack.c.l.bf16 %v527
        %v1901 = vunpack.c.h.bf16 %v527
        %v1902 = vunpack.c.l.bf16 %v528
        %v1903 = vunpack.c.h.bf16 %v528
        %v1904 = vunpack.c.l.bf16 %v529
        %v1905 = vunpack.c.h.bf16 %v529
        %v1906 = vunpack.c.l.bf16 %v530
        %v1907 = vunpack.c.h.bf16 %v530
        %v1908 = vunpack.c.l.bf16 %v531
        %v1909 = vunpack.c.h.bf16 %v531
        %v1910 = vunpack.c.l.bf16 %v532
        %v1911 = vunpack.c.h.bf16 %v532
        %v1912 = vunpack.c.l.bf16 %v533
        %v1913 = vunpack.c.h.bf16 %v533
        %v1914 = vunpack.c.l.bf16 %v534
        %v1915 = vunpack.c.h.bf16 %v534
        %v1916 = vunpack.c.l.bf16 %v535
        %v1917 = vunpack.c.h.bf16 %v535
        %v1918 = vunpack.c.l.bf16 %v536
        %v1919 = vunpack.c.h.bf16 %v536
        %v1920 = vunpack.c.l.bf16 %v537
        %v1921 = vunpack.c.h.bf16 %v537
        %v1922 = vunpack.c.l.bf16 %v538
        %v1923 = vunpack.c.h.bf16 %v538
        %v1924 = vunpack.c.l.bf16 %v539
        %v1925 = vunpack.c.h.bf16 %v539
        %v1926 = vunpack.c.l.bf16 %v540
        %v1927 = vunpack.c.h.bf16 %v540
        %v1928 = vunpack.c.l.bf16 %v541
        %v1929 = vunpack.c.h.bf16 %v541
        %v1930 = vunpack.c.l.bf16 %v542
        %v1931 = vunpack.c.h.bf16 %v542
        %v1932 = vunpack.c.l.bf16 %v543
        %v1933 = vunpack.c.h.bf16 %v543
        %v1934 = vunpack.c.l.bf16 %v544
        %v1935 = vunpack.c.h.bf16 %v544
        %v1936 = vunpack.c.l.bf16 %v545
        %v1937 = vunpack.c.h.bf16 %v545
        %v1938 = vunpack.c.l.bf16 %v546
        %v1939 = vunpack.c.h.bf16 %v546
        %v1940 = vunpack.c.l.bf16 %v547
        %v1941 = vunpack.c.h.bf16 %v547
        %v1942 = vunpack.c.l.bf16 %v548
        %v1943 = vunpack.c.h.bf16 %v548
        %v1944 = vunpack.c.l.bf16 %v549
        %v1945 = vunpack.c.h.bf16 %v549
        %v1946 = vunpack.c.l.bf16 %v550
        %v1947 = vunpack.c.h.bf16 %v550
        %v1948 = vunpack.c.l.bf16 %v551
        %v1949 = vunpack.c.h.bf16 %v551
        %v1950 = vunpack.c.l.bf16 %v552
        %v1951 = vunpack.c.h.bf16 %v552
        %v1952 = vunpack.c.l.bf16 %v553
        %v1953 = vunpack.c.h.bf16 %v553
        %v1954 = vunpack.c.l.bf16 %v554
        %v1955 = vunpack.c.h.bf16 %v554
        %v1956 = vunpack.c.l.bf16 %v555
        %v1957 = vunpack.c.h.bf16 %v555
        %v1958 = vunpack.c.l.bf16 %v556
        %v1959 = vunpack.c.h.bf16 %v556
        %v1960 = vunpack.c.l.bf16 %v557
        %v1961 = vunpack.c.h.bf16 %v557
        %v1962 = vunpack.c.l.bf16 %v558
        %v1963 = vunpack.c.h.bf16 %v558
        %v1964 = vunpack.c.l.bf16 %v559
        %v1965 = vunpack.c.h.bf16 %v559
        %v1966 = vunpack.c.l.bf16 %v560
        %v1967 = vunpack.c.h.bf16 %v560
        %v1968 = vunpack.c.l.bf16 %v561
        %v1969 = vunpack.c.h.bf16 %v561
        %v1970 = vunpack.c.l.bf16 %v562
        %v1971 = vunpack.c.h.bf16 %v562
        %v1972 = vunpack.c.l.bf16 %v563
        %v1973 = vunpack.c.h.bf16 %v563
        %v1974 = vunpack.c.l.bf16 %v564
        %v1975 = vunpack.c.h.bf16 %v564
        %v1976 = vunpack.c.l.bf16 %v565
        %v1977 = vunpack.c.h.bf16 %v565
        %v1978 = vunpack.c.l.bf16 %v566
        %v1979 = vunpack.c.h.bf16 %v566
        %v1980 = vunpack.c.l.bf16 %v567
        %v1981 = vunpack.c.h.bf16 %v567
        %v1982 = vunpack.c.l.bf16 %v568
        %v1983 = vunpack.c.h.bf16 %v568
        %v1984 = vunpack.c.l.bf16 %v569
        %v1985 = vunpack.c.h.bf16 %v569
        %v1986 = vunpack.c.l.bf16 %v570
        %v1987 = vunpack.c.h.bf16 %v570
        %v1988 = vunpack.c.l.bf16 %v571
        %v1989 = vunpack.c.h.bf16 %v571
        %v1990 = vunpack.c.l.bf16 %v572
        %v1991 = vunpack.c.h.bf16 %v572
        %v1992 = vunpack.c.l.bf16 %v573
        %v1993 = vunpack.c.h.bf16 %v573
        %v1994 = vunpack.c.l.bf16 %v574
        %v1995 = vunpack.c.h.bf16 %v574
        %v1996 = vunpack.c.l.bf16 %v575
        %v1997 = vunpack.c.h.bf16 %v575
        %v1998 = vunpack.c.l.bf16 %v576
        %v1999 = vunpack.c.h.bf16 %v576
        %v2000 = vunpack.c.l.bf16 %v577
        %v2001 = vunpack.c.h.bf16 %v577
        %v2002 = vunpack.c.l.bf16 %v578
        %v2003 = vunpack.c.h.bf16 %v578
        %v2004 = vunpack.c.l.bf16 %v579
        %v2005 = vunpack.c.h.bf16 %v579
        %v2006 = vunpack.c.l.bf16 %v580
        %v2007 = vunpack.c.h.bf16 %v580
        %v2008 = vunpack.c.l.bf16 %v581
        %v2009 = vunpack.c.h.bf16 %v581
        %v2010 = vunpack.c.l.bf16 %v582
        %v2011 = vunpack.c.h.bf16 %v582
        %v2012 = vunpack.c.l.bf16 %v583
        %v2013 = vunpack.c.h.bf16 %v583
        %v2014 = vunpack.c.l.bf16 %v584
        %v2015 = vunpack.c.h.bf16 %v584
        %v2016 = vunpack.c.l.bf16 %v585
        %v2017 = vunpack.c.h.bf16 %v585
        %v2018 = vunpack.c.l.bf16 %v586
        %v2019 = vunpack.c.h.bf16 %v586
        %v2020 = vunpack.c.l.bf16 %v587
        %v2021 = vunpack.c.h.bf16 %v587
        %v2022 = vunpack.c.l.bf16 %v588
        %v2023 = vunpack.c.h.bf16 %v588
        %v2024 = vunpack.c.l.bf16 %v589
        %v2025 = vunpack.c.h.bf16 %v589
        %v2026 = vunpack.c.l.bf16 %v590
        %v2027 = vunpack.c.h.bf16 %v590
        %v2028 = vunpack.c.l.bf16 %v591
        %v2029 = vunpack.c.h.bf16 %v591
        %v2030 = vunpack.c.l.bf16 %v592
        %v2031 = vunpack.c.h.bf16 %v592
        %v2032 = vunpack.c.l.bf16 %v593
        %v2033 = vunpack.c.h.bf16 %v593
        %v2034 = vunpack.c.l.bf16 %v594
        %v2035 = vunpack.c.h.bf16 %v594
        %v2036 = vunpack.c.l.bf16 %v595
        %v2037 = vunpack.c.h.bf16 %v595
        %v2038 = vunpack.c.l.bf16 %v596
        %v2039 = vunpack.c.h.bf16 %v596
        %v2040 = vunpack.c.l.bf16 %v597
        %v2041 = vunpack.c.h.bf16 %v597
        %v2042 = vunpack.c.l.bf16 %v598
        %v2043 = vunpack.c.h.bf16 %v598
        %v2044 = vunpack.c.l.bf16 %v599
        %v2045 = vunpack.c.h.bf16 %v599
        %v2046 = vunpack.c.l.bf16 %v600
        %v2047 = vunpack.c.h.bf16 %v600
        %v2048 = vunpack.c.l.bf16 %v601
        %v2049 = vunpack.c.h.bf16 %v601
        %v2050 = vunpack.c.l.bf16 %v602
        %v2051 = vunpack.c.h.bf16 %v602
        %v2052 = vunpack.c.l.bf16 %v603
        %v2053 = vunpack.c.h.bf16 %v603
        %v2054 = vunpack.c.l.bf16 %v604
        %v2055 = vunpack.c.h.bf16 %v604
        %v2056 = vunpack.c.l.bf16 %v605
        %v2057 = vunpack.c.h.bf16 %v605
        %v2058 = vunpack.c.l.bf16 %v606
        %v2059 = vunpack.c.h.bf16 %v606
        %v2060 = vunpack.c.l.bf16 %v607
        %v2061 = vunpack.c.h.bf16 %v607
        %v2062 = vunpack.c.l.bf16 %v608
        %v2063 = vunpack.c.h.bf16 %v608
        %v2064 = vunpack.c.l.bf16 %v609
        %v2065 = vunpack.c.h.bf16 %v609
        %v2066 = vunpack.c.l.bf16 %v610
        %v2067 = vunpack.c.h.bf16 %v610
        %v2068 = vunpack.c.l.bf16 %v611
        %v2069 = vunpack.c.h.bf16 %v611
        %v2070 = vunpack.c.l.bf16 %v612
        %v2071 = vunpack.c.h.bf16 %v612
        %v2072 = vunpack.c.l.bf16 %v613
        %v2073 = vunpack.c.h.bf16 %v613
        %v2074 = vunpack.c.l.bf16 %v614
        %v2075 = vunpack.c.h.bf16 %v614
        %v2076 = vunpack.c.l.bf16 %v615
        %v2077 = vunpack.c.h.bf16 %v615
        %v2078 = vunpack.c.l.bf16 %v616
        %v2079 = vunpack.c.h.bf16 %v616
        %v2080 = vunpack.c.l.bf16 %v617
        %v2081 = vunpack.c.h.bf16 %v617
        %v2082 = vunpack.c.l.bf16 %v618
        %v2083 = vunpack.c.h.bf16 %v618
        %v2084 = vunpack.c.l.bf16 %v619
        %v2085 = vunpack.c.h.bf16 %v619
        %v2086 = vunpack.c.l.bf16 %v620
        %v2087 = vunpack.c.h.bf16 %v620
        %v2088 = vunpack.c.l.bf16 %v621
        %v2089 = vunpack.c.h.bf16 %v621
        %v2090 = vunpack.c.l.bf16 %v622
        %v2091 = vunpack.c.h.bf16 %v622
        %v2092 = vunpack.c.l.bf16 %v623
        %v2093 = vunpack.c.h.bf16 %v623
        %v2094 = vunpack.c.l.bf16 %v624
        %v2095 = vunpack.c.h.bf16 %v624
        %v2096 = vunpack.c.l.bf16 %v625
        %v2097 = vunpack.c.h.bf16 %v625
        %v2098 = vunpack.c.l.bf16 %v626
        %v2099 = vunpack.c.h.bf16 %v626
        %v2100 = vunpack.c.l.bf16 %v627
        %v2101 = vunpack.c.h.bf16 %v627
        %v2102 = vunpack.c.l.bf16 %v628
        %v2103 = vunpack.c.h.bf16 %v628
        %v2104 = vunpack.c.l.bf16 %v629
        %v2105 = vunpack.c.h.bf16 %v629
        %v2106 = vunpack.c.l.bf16 %v630
        %v2107 = vunpack.c.h.bf16 %v630
        %v2108 = vunpack.c.l.bf16 %v631
        %v2109 = vunpack.c.h.bf16 %v631
        %v2110 = vunpack.c.l.bf16 %v632
        %v2111 = vunpack.c.h.bf16 %v632
        %v2112 = vunpack.c.l.bf16 %v633
        %v2113 = vunpack.c.h.bf16 %v633
        %v2114 = vunpack.c.l.bf16 %v634
        %v2115 = vunpack.c.h.bf16 %v634
        %v2116 = vunpack.c.l.bf16 %v635
        %v2117 = vunpack.c.h.bf16 %v635
        %v2118 = vunpack.c.l.bf16 %v636
        %v2119 = vunpack.c.h.bf16 %v636
        %v2120 = vunpack.c.l.bf16 %v637
        %v2121 = vunpack.c.h.bf16 %v637
        %v2122 = vunpack.c.l.bf16 %v638
        %v2123 = vunpack.c.h.bf16 %v638
        %v2124 = vunpack.c.l.bf16 %v639
        %v2125 = vunpack.c.h.bf16 %v639
        %v2126 = vunpack.c.l.bf16 %v640
        %v2127 = vunpack.c.h.bf16 %v640
        %v2128 = vunpack.c.l.bf16 %v641
        %v2129 = vunpack.c.h.bf16 %v641
        %v2130 = vunpack.c.l.bf16 %v642
        %v2131 = vunpack.c.h.bf16 %v642
        %v2132 = vunpack.c.l.bf16 %v643
        %v2133 = vunpack.c.h.bf16 %v643
        %v2134 = vunpack.c.l.bf16 %v644
        %v2135 = vunpack.c.h.bf16 %v644
        %v2136 = vunpack.c.l.bf16 %v645
        %v2137 = vunpack.c.h.bf16 %v645
        %v2138 = vunpack.c.l.bf16 %v646
        %v2139 = vunpack.c.h.bf16 %v646
        %v2140 = vunpack.c.l.bf16 %v647
        %v2141 = vunpack.c.h.bf16 %v647
        %v2142 = vunpack.c.l.bf16 %v648
        %v2143 = vunpack.c.h.bf16 %v648
        %v2144 = vunpack.c.l.bf16 %v649
        %v2145 = vunpack.c.h.bf16 %v649
        %v2146 = vunpack.c.l.bf16 %v650
        %v2147 = vunpack.c.h.bf16 %v650
        %v2148 = vunpack.c.l.bf16 %v651
        %v2149 = vunpack.c.h.bf16 %v651
        %v2150 = vunpack.c.l.bf16 %v652
        %v2151 = vunpack.c.h.bf16 %v652
        %v2152 = vunpack.c.l.bf16 %v653
        %v2153 = vunpack.c.h.bf16 %v653
        %v2154 = vunpack.c.l.bf16 %v654
        %v2155 = vunpack.c.h.bf16 %v654
        %v2156 = vunpack.c.l.bf16 %v655
        %v2157 = vunpack.c.h.bf16 %v655
        %v2158 = vunpack.c.l.bf16 %v656
        %v2159 = vunpack.c.h.bf16 %v656
        %v2160 = vunpack.c.l.bf16 %v657
        %v2161 = vunpack.c.h.bf16 %v657
        %v2162 = vunpack.c.l.bf16 %v658
        %v2163 = vunpack.c.h.bf16 %v658
        %v2164 = vunpack.c.l.bf16 %v659
        %v2165 = vunpack.c.h.bf16 %v659
        %v2166 = vunpack.c.l.bf16 %v660
        %v2167 = vunpack.c.h.bf16 %v660
        %v2168 = vunpack.c.l.bf16 %v661
        %v2169 = vunpack.c.h.bf16 %v661
        %v2170 = vunpack.c.l.bf16 %v662
        %v2171 = vunpack.c.h.bf16 %v662
        %v2172 = vunpack.c.l.bf16 %v663
        %v2173 = vunpack.c.h.bf16 %v663
        %v2174 = vunpack.c.l.bf16 %v664
        %v2175 = vunpack.c.h.bf16 %v664
        %v2176 = vunpack.c.l.bf16 %v665
        %v2177 = vunpack.c.h.bf16 %v665
        %v2178 = vunpack.c.l.bf16 %v666
        %v2179 = vunpack.c.h.bf16 %v666
        %v2180 = vunpack.c.l.bf16 %v667
        %v2181 = vunpack.c.h.bf16 %v667
        %v2182 = vunpack.c.l.bf16 %v668
        %v2183 = vunpack.c.h.bf16 %v668
        %v2184 = vunpack.c.l.bf16 %v669
        %v2185 = vunpack.c.h.bf16 %v669
        %v2186 = vunpack.c.l.bf16 %v670
        %v2187 = vunpack.c.h.bf16 %v670
        %v2188 = vunpack.c.l.bf16 %v671
        %v2189 = vunpack.c.h.bf16 %v671
        %v2190 = vunpack.c.l.bf16 %v672
        %v2191 = vunpack.c.h.bf16 %v672
        %v2192 = vunpack.c.l.bf16 %v673
        %v2193 = vunpack.c.h.bf16 %v673
        %v2194 = vunpack.c.l.bf16 %v674
        %v2195 = vunpack.c.h.bf16 %v674
        %v2196 = vunpack.c.l.bf16 %v675
        %v2197 = vunpack.c.h.bf16 %v675
        %v2198 = vunpack.c.l.bf16 %v676
        %v2199 = vunpack.c.h.bf16 %v676
        %v2200 = vunpack.c.l.bf16 %v677
        %v2201 = vunpack.c.h.bf16 %v677
        %v2202 = vunpack.c.l.bf16 %v678
        %v2203 = vunpack.c.h.bf16 %v678
        %v2204 = vunpack.c.l.bf16 %v679
        %v2205 = vunpack.c.h.bf16 %v679
        %v2206 = vunpack.c.l.bf16 %v680
        %v2207 = vunpack.c.h.bf16 %v680
        %v2208 = vunpack.c.l.bf16 %v681
        %v2209 = vunpack.c.h.bf16 %v681
        %v2210 = vunpack.c.l.bf16 %v682
        %v2211 = vunpack.c.h.bf16 %v682
        %v2212 = vunpack.c.l.bf16 %v683
        %v2213 = vunpack.c.h.bf16 %v683
        %v2214 = vunpack.c.l.bf16 %v684
        %v2215 = vunpack.c.h.bf16 %v684
        %v2216 = vunpack.c.l.bf16 %v685
        %v2217 = vunpack.c.h.bf16 %v685
        %v2218 = vunpack.c.l.bf16 %v686
        %v2219 = vunpack.c.h.bf16 %v686
        %v2220 = vunpack.c.l.bf16 %v687
        %v2221 = vunpack.c.h.bf16 %v687
        %v2222 = vunpack.c.l.bf16 %v688
        %v2223 = vunpack.c.h.bf16 %v688
        %v2224 = vunpack.c.l.bf16 %v689
        %v2225 = vunpack.c.h.bf16 %v689
        %v2226 = vunpack.c.l.bf16 %v690
        %v2227 = vunpack.c.h.bf16 %v690
        %v2228 = vunpack.c.l.bf16 %v691
        %v2229 = vunpack.c.h.bf16 %v691
        %v2230 = vunpack.c.l.bf16 %v692
        %v2231 = vunpack.c.h.bf16 %v692
        %v2232 = vunpack.c.l.bf16 %v693
        %v2233 = vunpack.c.h.bf16 %v693
        %v2234 = vunpack.c.l.bf16 %v694
        %v2235 = vunpack.c.h.bf16 %v694
        %v2236 = vunpack.c.l.bf16 %v695
        %v2237 = vunpack.c.h.bf16 %v695
        %v2238 = vunpack.c.l.bf16 %v696
        %v2239 = vunpack.c.h.bf16 %v696
        %v2240 = vunpack.c.l.bf16 %v697
        %v2241 = vunpack.c.h.bf16 %v697
        %v2242 = vunpack.c.l.bf16 %v698
        %v2243 = vunpack.c.h.bf16 %v698
        %v2244 = vunpack.c.l.bf16 %v699
        %v2245 = vunpack.c.h.bf16 %v699
        %v2246 = vunpack.c.l.bf16 %v700
        %v2247 = vunpack.c.h.bf16 %v700
        %v2248 = vunpack.c.l.bf16 %v701
        %v2249 = vunpack.c.h.bf16 %v701
        %v2250 = vunpack.c.l.bf16 %v702
        %v2251 = vunpack.c.h.bf16 %v702
        %v2252 = vunpack.c.l.bf16 %v703
        %v2253 = vunpack.c.h.bf16 %v703
        %v2254 = vunpack.c.l.bf16 %v704
        %v2255 = vunpack.c.h.bf16 %v704
        %v2256 = vunpack.c.l.bf16 %v705
        %v2257 = vunpack.c.h.bf16 %v705
        %v2258 = vunpack.c.l.bf16 %v706
        %v2259 = vunpack.c.h.bf16 %v706
        %v2260 = vunpack.c.l.bf16 %v707
        %v2261 = vunpack.c.h.bf16 %v707
        %v2262 = vunpack.c.l.bf16 %v708
        %v2263 = vunpack.c.h.bf16 %v708
        %v2264 = vunpack.c.l.bf16 %v709
        %v2265 = vunpack.c.h.bf16 %v709
        %v2266 = vunpack.c.l.bf16 %v710
        %v2267 = vunpack.c.h.bf16 %v710
        %v2268 = vunpack.c.l.bf16 %v711
        %v2269 = vunpack.c.h.bf16 %v711
        %v2270 = vunpack.c.l.bf16 %v712
        %v2271 = vunpack.c.h.bf16 %v712
        %v2272 = vunpack.c.l.bf16 %v713
        %v2273 = vunpack.c.h.bf16 %v713
        %v2274 = vunpack.c.l.bf16 %v714
        %v2275 = vunpack.c.h.bf16 %v714
        %v2276 = vunpack.c.l.bf16 %v715
        %v2277 = vunpack.c.h.bf16 %v715
        %v2278 = vunpack.c.l.bf16 %v716
        %v2279 = vunpack.c.h.bf16 %v716
        %v2280 = vunpack.c.l.bf16 %v717
        %v2281 = vunpack.c.h.bf16 %v717
        %v2282 = vunpack.c.l.bf16 %v718
        %v2283 = vunpack.c.h.bf16 %v718
        %v2284 = vunpack.c.l.bf16 %v719
        %v2285 = vunpack.c.h.bf16 %v719
        %v2286 = vunpack.c.l.bf16 %v720
        %v2287 = vunpack.c.h.bf16 %v720
        %v2288 = vunpack.c.l.bf16 %v721
        %v2289 = vunpack.c.h.bf16 %v721
        %v2290 = vunpack.c.l.bf16 %v722
        %v2291 = vunpack.c.h.bf16 %v722
        %v2292 = vunpack.c.l.bf16 %v723
        %v2293 = vunpack.c.h.bf16 %v723
        %v2294 = vunpack.c.l.bf16 %v724
        %v2295 = vunpack.c.h.bf16 %v724
        %v2296 = vunpack.c.l.bf16 %v725
        %v2297 = vunpack.c.h.bf16 %v725
        %v2298 = vunpack.c.l.bf16 %v726
        %v2299 = vunpack.c.h.bf16 %v726
        %v2300 = vunpack.c.l.bf16 %v727
        %v2301 = vunpack.c.h.bf16 %v727
        %v2302 = vunpack.c.l.bf16 %v728
        %v2303 = vunpack.c.h.bf16 %v728
        %v2304 = vunpack.c.l.bf16 %v729
        %v2305 = vunpack.c.h.bf16 %v729
        %v2306 = vunpack.c.l.bf16 %v730
        %v2307 = vunpack.c.h.bf16 %v730
        %v2308 = vunpack.c.l.bf16 %v731
        %v2309 = vunpack.c.h.bf16 %v731
        %v2310 = vunpack.c.l.bf16 %v732
        %v2311 = vunpack.c.h.bf16 %v732
        %v2312 = vunpack.c.l.bf16 %v733
        %v2313 = vunpack.c.h.bf16 %v733
        %v2314 = vunpack.c.l.bf16 %v734
        %v2315 = vunpack.c.h.bf16 %v734
        %v2316 = vunpack.c.l.bf16 %v735
        %v2317 = vunpack.c.h.bf16 %v735
        %v2318 = vunpack.c.l.bf16 %v736
        %v2319 = vunpack.c.h.bf16 %v736
        %v2320 = vunpack.c.l.bf16 %v737
        %v2321 = vunpack.c.h.bf16 %v737
        %v2322 = vunpack.c.l.bf16 %v738
        %v2323 = vunpack.c.h.bf16 %v738
        %v2324 = vunpack.c.l.bf16 %v739
        %v2325 = vunpack.c.h.bf16 %v739
        %v2326 = vunpack.c.l.bf16 %v740
        %v2327 = vunpack.c.h.bf16 %v740
        %v2328 = vunpack.c.l.bf16 %v741
        %v2329 = vunpack.c.h.bf16 %v741
        %v2330 = vunpack.c.l.bf16 %v742
        %v2331 = vunpack.c.h.bf16 %v742
        %v2332 = vunpack.c.l.bf16 %v743
        %v2333 = vunpack.c.h.bf16 %v743
        %v2334 = vunpack.c.l.bf16 %v744
        %v2335 = vunpack.c.h.bf16 %v744
        %v2336 = vunpack.c.l.bf16 %v745
        %v2337 = vunpack.c.h.bf16 %v745
        %v2338 = vunpack.c.l.bf16 %v746
        %v2339 = vunpack.c.h.bf16 %v746
        %v2340 = vunpack.c.l.bf16 %v747
        %v2341 = vunpack.c.h.bf16 %v747
        %v2342 = vunpack.c.l.bf16 %v748
        %v2343 = vunpack.c.h.bf16 %v748
        %v2344 = vunpack.c.l.bf16 %v749
        %v2345 = vunpack.c.h.bf16 %v749
        %v2346 = vunpack.c.l.bf16 %v750
        %v2347 = vunpack.c.h.bf16 %v750
        %v2348 = vunpack.c.l.bf16 %v751
        %v2349 = vunpack.c.h.bf16 %v751
        %v2350 = vunpack.c.l.bf16 %v752
        %v2351 = vunpack.c.h.bf16 %v752
        %v2352 = vunpack.c.l.bf16 %v753
        %v2353 = vunpack.c.h.bf16 %v753
        %v2354 = vunpack.c.l.bf16 %v754
        %v2355 = vunpack.c.h.bf16 %v754
        %v2356 = vunpack.c.l.bf16 %v755
        %v2357 = vunpack.c.h.bf16 %v755
        %v2358 = vunpack.c.l.bf16 %v756
        %v2359 = vunpack.c.h.bf16 %v756
        %v2360 = vunpack.c.l.bf16 %v757
        %v2361 = vunpack.c.h.bf16 %v757
        %v2362 = vunpack.c.l.bf16 %v758
        %v2363 = vunpack.c.h.bf16 %v758
        %v2364 = vunpack.c.l.bf16 %v759
        %v2365 = vunpack.c.h.bf16 %v759
        %v2366 = vunpack.c.l.bf16 %v760
        %v2367 = vunpack.c.h.bf16 %v760
        %v2368 = vunpack.c.l.bf16 %v761
        %v2369 = vunpack.c.h.bf16 %v761
        %v2370 = vunpack.c.l.bf16 %v762
        %v2371 = vunpack.c.h.bf16 %v762
        %v2372 = vunpack.c.l.bf16 %v763
        %v2373 = vunpack.c.h.bf16 %v763
        %v2374 = vunpack.c.l.bf16 %v764
        %v2375 = vunpack.c.h.bf16 %v764
        %v2376 = vunpack.c.l.bf16 %v765
        %v2377 = vunpack.c.h.bf16 %v765
        %v2378 = vunpack.c.l.bf16 %v766
        %v2379 = vunpack.c.h.bf16 %v766
        %v2380 = vunpack.c.l.bf16 %v767
        %v2381 = vunpack.c.h.bf16 %v767
        %v2382 = vunpack.c.l.bf16 %v768
        %v2383 = vunpack.c.h.bf16 %v768
        %v2384 = vunpack.c.l.bf16 %v769
        %v2385 = vunpack.c.h.bf16 %v769
        %v2386 = vunpack.c.l.bf16 %v770
        %v2387 = vunpack.c.h.bf16 %v770
        %v2388 = vunpack.c.l.bf16 %v771
        %v2389 = vunpack.c.h.bf16 %v771
        %v2390 = vunpack.c.l.bf16 %v772
        %v2391 = vunpack.c.h.bf16 %v772
        %v2392 = vunpack.c.l.bf16 %v773
        %v2393 = vunpack.c.h.bf16 %v773
        %v2394 = vunpack.c.l.bf16 %v774
        %v2395 = vunpack.c.h.bf16 %v774
        %v2396 = vunpack.c.l.bf16 %v775
        %v2397 = vunpack.c.h.bf16 %v775
        %v2398 = vunpack.c.l.bf16 %v776
        %v2399 = vunpack.c.h.bf16 %v776
        %v2400 = vunpack.c.l.bf16 %v777
        %v2401 = vunpack.c.h.bf16 %v777
        %v2402 = vunpack.c.l.bf16 %v778
        %v2403 = vunpack.c.h.bf16 %v778
        %v2404 = vunpack.c.l.bf16 %v779
        %v2405 = vunpack.c.h.bf16 %v779
        %v2406 = vunpack.c.l.bf16 %v780
        %v2407 = vunpack.c.h.bf16 %v780
        %v2408 = vunpack.c.l.bf16 %v781
        %v2409 = vunpack.c.h.bf16 %v781
        %v2410 = vunpack.c.l.bf16 %v782
        %v2411 = vunpack.c.h.bf16 %v782
        %v2412 = vunpack.c.l.bf16 %v783
        %v2413 = vunpack.c.h.bf16 %v783
        %v2414 = vunpack.c.l.bf16 %v784
        %v2415 = vunpack.c.h.bf16 %v784
        %v2416 = vunpack.c.l.bf16 %v785
        %v2417 = vunpack.c.h.bf16 %v785
        %v2418 = vunpack.c.l.bf16 %v786
        %v2419 = vunpack.c.h.bf16 %v786
        %v2420 = vunpack.c.l.bf16 %v787
        %v2421 = vunpack.c.h.bf16 %v787
        %v2422 = vunpack.c.l.bf16 %v788
        %v2423 = vunpack.c.h.bf16 %v788
        %v2424 = vunpack.c.l.bf16 %v789
        %v2425 = vunpack.c.h.bf16 %v789
        %v2426 = vunpack.c.l.bf16 %v790
        %v2427 = vunpack.c.h.bf16 %v790
        %v2428 = vunpack.c.l.bf16 %v791
        %v2429 = vunpack.c.h.bf16 %v791
        %v2430 = vunpack.c.l.bf16 %v792
        %v2431 = vunpack.c.h.bf16 %v792
        %v2432 = vunpack.c.l.bf16 %v793
        %v2433 = vunpack.c.h.bf16 %v793
        %v2434 = vunpack.c.l.bf16 %v794
        %v2435 = vunpack.c.h.bf16 %v794
        %v2436 = vunpack.c.l.bf16 %v795
        %v2437 = vunpack.c.h.bf16 %v795
        %v2438 = vunpack.c.l.bf16 %v796
        %v2439 = vunpack.c.h.bf16 %v796
        %v2440 = vunpack.c.l.bf16 %v797
        %v2441 = vunpack.c.h.bf16 %v797
        %v2442 = vunpack.c.l.bf16 %v798
        %v2443 = vunpack.c.h.bf16 %v798
        %v2444 = vunpack.c.l.bf16 %v799
        %v2445 = vunpack.c.h.bf16 %v799
        %v2446 = vunpack.c.l.bf16 %v800
        %v2447 = vunpack.c.h.bf16 %v800
        %v2448 = vunpack.c.l.bf16 %v801
        %v2449 = vunpack.c.h.bf16 %v801
        %v2450 = vunpack.c.l.bf16 %v802
        %v2451 = vunpack.c.h.bf16 %v802
        %v2452 = vunpack.c.l.bf16 %v803
        %v2453 = vunpack.c.h.bf16 %v803
        %v2454 = vunpack.c.l.bf16 %v804
        %v2455 = vunpack.c.h.bf16 %v804
        %v2456 = vunpack.c.l.bf16 %v805
        %v2457 = vunpack.c.h.bf16 %v805
        %v2458 = vunpack.c.l.bf16 %v806
        %v2459 = vunpack.c.h.bf16 %v806
        %v2460 = vunpack.c.l.bf16 %v807
        %v2461 = vunpack.c.h.bf16 %v807
        %v2462 = vunpack.c.l.bf16 %v808
        %v2463 = vunpack.c.h.bf16 %v808
        %v2464 = vunpack.c.l.bf16 %v809
        %v2465 = vunpack.c.h.bf16 %v809
        %v2466 = vunpack.c.l.bf16 %v810
        %v2467 = vunpack.c.h.bf16 %v810
        %v2468 = vunpack.c.l.bf16 %v811
        %v2469 = vunpack.c.h.bf16 %v811
        %v2470 = vunpack.c.l.bf16 %v812
        %v2471 = vunpack.c.h.bf16 %v812
        %v2472 = vunpack.c.l.bf16 %v813
        %v2473 = vunpack.c.h.bf16 %v813
        %v2474 = vunpack.c.l.bf16 %v814
        %v2475 = vunpack.c.h.bf16 %v814
        %v2476 = vunpack.c.l.bf16 %v815
        %v2477 = vunpack.c.h.bf16 %v815
        %v2478 = vunpack.c.l.bf16 %v816
        %v2479 = vunpack.c.h.bf16 %v816
        %v2480 = vunpack.c.l.bf16 %v817
        %v2481 = vunpack.c.h.bf16 %v817
        %v2482 = vunpack.c.l.bf16 %v818
        %v2483 = vunpack.c.h.bf16 %v818
        %v2484 = vunpack.c.l.bf16 %v819
        %v2485 = vunpack.c.h.bf16 %v819
        %v2486 = vunpack.c.l.bf16 %v820
        %v2487 = vunpack.c.h.bf16 %v820
        %v2488 = vunpack.c.l.bf16 %v821
        %v2489 = vunpack.c.h.bf16 %v821
        %v2490 = vunpack.c.l.bf16 %v822
        %v2491 = vunpack.c.h.bf16 %v822
        %v2492 = vunpack.c.l.bf16 %v823
        %v2493 = vunpack.c.h.bf16 %v823
        %v2494 = vunpack.c.l.bf16 %v824
        %v2495 = vunpack.c.h.bf16 %v824
        %v2496 = vunpack.c.l.bf16 %v825
        %v2497 = vunpack.c.h.bf16 %v825
        %v2498 = vunpack.c.l.bf16 %v826
        %v2499 = vunpack.c.h.bf16 %v826
        %v2500 = vunpack.c.l.bf16 %v827
        %v2501 = vunpack.c.h.bf16 %v827
        %v2502 = vunpack.c.l.bf16 %v828
        %v2503 = vunpack.c.h.bf16 %v828
        %v2504 = vunpack.c.l.bf16 %v829
        %v2505 = vunpack.c.h.bf16 %v829
        %v2506 = vunpack.c.l.bf16 %v830
        %v2507 = vunpack.c.h.bf16 %v830
        %v2508 = vunpack.c.l.bf16 %v831
        %v2509 = vunpack.c.h.bf16 %v831
        %v2510 = vunpack.c.l.bf16 %v832
        %v2511 = vunpack.c.h.bf16 %v832
        %v2512 = vunpack.c.l.bf16 %v833
        %v2513 = vunpack.c.h.bf16 %v833
        %v2514 = vunpack.c.l.bf16 %v834
        %v2515 = vunpack.c.h.bf16 %v834
        %v2516 = vunpack.c.l.bf16 %v835
        %v2517 = vunpack.c.h.bf16 %v835
        %v2518 = vunpack.c.l.bf16 %v836
        %v2519 = vunpack.c.h.bf16 %v836
        %v2520 = vunpack.c.l.bf16 %v837
        %v2521 = vunpack.c.h.bf16 %v837
        %v2522 = vunpack.c.l.bf16 %v838
        %v2523 = vunpack.c.h.bf16 %v838
        %v2524 = vunpack.c.l.bf16 %v839
        %v2525 = vunpack.c.h.bf16 %v839
        %v2526 = vunpack.c.l.bf16 %v840
        %v2527 = vunpack.c.h.bf16 %v840
        %v2528 = vunpack.c.l.bf16 %v841
        %v2529 = vunpack.c.h.bf16 %v841
        %v2530 = vunpack.c.l.bf16 %v842
        %v2531 = vunpack.c.h.bf16 %v842
        %v2532 = vunpack.c.l.bf16 %v843
        %v2533 = vunpack.c.h.bf16 %v843
        %v2534 = vunpack.c.l.bf16 %v844
        %v2535 = vunpack.c.h.bf16 %v844
        %v2536 = vunpack.c.l.bf16 %v845
        %v2537 = vunpack.c.h.bf16 %v845
        %v2538 = vunpack.c.l.bf16 %v846
        %v2539 = vunpack.c.h.bf16 %v846
        %v2540 = vunpack.c.l.bf16 %v847
        %v2541 = vunpack.c.h.bf16 %v847
        %v2542 = vunpack.c.l.bf16 %v848
        %v2543 = vunpack.c.h.bf16 %v848
        %v2544 = vunpack.c.l.bf16 %v849
        %v2545 = vunpack.c.h.bf16 %v849
        %v2546 = vunpack.c.l.bf16 %v850
        %v2547 = vunpack.c.h.bf16 %v850
        %v2548 = vunpack.c.l.bf16 %v851
        %v2549 = vunpack.c.h.bf16 %v851
        %v2550 = vunpack.c.l.bf16 %v852
        %v2551 = vunpack.c.h.bf16 %v852
        %v2552 = vunpack.c.l.bf16 %v853
        %v2553 = vunpack.c.h.bf16 %v853
        %v2554 = vunpack.c.l.bf16 %v854
        %v2555 = vunpack.c.h.bf16 %v854
        %v2556 = vunpack.c.l.bf16 %v855
        %v2557 = vunpack.c.h.bf16 %v855
        %v2558 = vunpack.c.l.bf16 %v856
        %v2559 = vunpack.c.h.bf16 %v856
        %v2560 = vunpack.c.l.bf16 %v857
        %v2561 = vunpack.c.h.bf16 %v857
        %v2562 = vunpack.c.l.bf16 %v858
        %v2563 = vunpack.c.h.bf16 %v858
        %v2564 = vunpack.c.l.bf16 %v859
        %v2565 = vunpack.c.h.bf16 %v859
        %v2566 = vunpack.c.l.bf16 %v860
        %v2567 = vunpack.c.h.bf16 %v860
        %v2568 = vunpack.c.l.bf16 %v861
        %v2569 = vunpack.c.h.bf16 %v861
        %v2570 = vunpack.c.l.bf16 %v862
        %v2571 = vunpack.c.h.bf16 %v862
        %v2572 = vunpack.c.l.bf16 %v863
        %v2573 = vunpack.c.h.bf16 %v863
        %v2574 = vunpack.c.l.bf16 %v864
        %v2575 = vunpack.c.h.bf16 %v864
        %v2576 = vunpack.c.l.bf16 %v865
        %v2577 = vunpack.c.h.bf16 %v865
        %v2578 = vunpack.c.l.bf16 %v866
        %v2579 = vunpack.c.h.bf16 %v866
        %v2580 = vunpack.c.l.bf16 %v867
        %v2581 = vunpack.c.h.bf16 %v867
        %v2582 = vunpack.c.l.bf16 %v868
        %v2583 = vunpack.c.h.bf16 %v868
        %v2584 = vunpack.c.l.bf16 %v869
        %v2585 = vunpack.c.h.bf16 %v869
        %v2586 = vunpack.c.l.bf16 %v870
        %v2587 = vunpack.c.h.bf16 %v870
        %v2588 = vunpack.c.l.bf16 %v871
        %v2589 = vunpack.c.h.bf16 %v871
        %v2590 = vunpack.c.l.bf16 %v872
        %v2591 = vunpack.c.h.bf16 %v872
        %v2592 = vunpack.c.l.bf16 %v873
        %v2593 = vunpack.c.h.bf16 %v873
        %v2594 = vunpack.c.l.bf16 %v874
        %v2595 = vunpack.c.h.bf16 %v874
        %v2596 = vunpack.c.l.bf16 %v875
        %v2597 = vunpack.c.h.bf16 %v875
        %v2598 = vunpack.c.l.bf16 %v876
        %v2599 = vunpack.c.h.bf16 %v876
        %v2600 = vunpack.c.l.bf16 %v877
        %v2601 = vunpack.c.h.bf16 %v877
        %v2602 = vunpack.c.l.bf16 %v878
        %v2603 = vunpack.c.h.bf16 %v878
        %v2604 = vunpack.c.l.bf16 %v879
        %v2605 = vunpack.c.h.bf16 %v879
        %v2606 = vunpack.c.l.bf16 %v880
        %v2607 = vunpack.c.h.bf16 %v880
        %v2608 = vunpack.c.l.bf16 %v881
        %v2609 = vunpack.c.h.bf16 %v881
        %v2610 = vunpack.c.l.bf16 %v882
        %v2611 = vunpack.c.h.bf16 %v882
        %v2612 = vunpack.c.l.bf16 %v883
        %v2613 = vunpack.c.h.bf16 %v883
        %v2614 = vunpack.c.l.bf16 %v884
        %v2615 = vunpack.c.h.bf16 %v884
        %v2616 = vunpack.c.l.bf16 %v885
        %v2617 = vunpack.c.h.bf16 %v885
        %v2618 = vunpack.c.l.bf16 %v886
        %v2619 = vunpack.c.h.bf16 %v886
        %v2620 = vunpack.c.l.bf16 %v887
        %v2621 = vunpack.c.h.bf16 %v887
        %v2622 = vunpack.c.l.bf16 %v888
        %v2623 = vunpack.c.h.bf16 %v888
        %v2624 = vunpack.c.l.bf16 %v889
        %v2625 = vunpack.c.h.bf16 %v889
        %v2626 = vunpack.c.l.bf16 %v890
        %v2627 = vunpack.c.h.bf16 %v890
        %v2628 = vunpack.c.l.bf16 %v891
        %v2629 = vunpack.c.h.bf16 %v891
        %v2630 = vunpack.c.l.bf16 %v892
        %v2631 = vunpack.c.h.bf16 %v892
        %v2632 = vunpack.c.l.bf16 %v893
        %v2633 = vunpack.c.h.bf16 %v893
        %v2634 = vunpack.c.l.bf16 %v894
        %v2635 = vunpack.c.h.bf16 %v894
        %v2636 = vunpack.c.l.bf16 %v895
        %v2637 = vunpack.c.h.bf16 %v895
        %v2638 = vunpack.c.l.bf16 %v896
        %v2639 = vunpack.c.h.bf16 %v896
        %v2640 = vunpack.c.l.bf16 %v897
        %v2641 = vunpack.c.h.bf16 %v897
        %v2642 = vunpack.c.l.bf16 %v898
        %v2643 = vunpack.c.h.bf16 %v898
        %v2644 = vunpack.c.l.bf16 %v899
        %v2645 = vunpack.c.h.bf16 %v899
        %v2646 = vunpack.c.l.bf16 %v900
        %v2647 = vunpack.c.h.bf16 %v900
        %v2648 = vunpack.c.l.bf16 %v901
        %v2649 = vunpack.c.h.bf16 %v901
        %v2650 = vunpack.c.l.bf16 %v902
        %v2651 = vunpack.c.h.bf16 %v902
        %v2652 = vunpack.c.l.bf16 %v903
        %v2653 = vunpack.c.h.bf16 %v903
        %v2654 = vunpack.c.l.bf16 %v904
        %v2655 = vunpack.c.h.bf16 %v904
        %v2656 = vunpack.c.l.bf16 %v905
        %v2657 = vunpack.c.h.bf16 %v905
        %v2658 = vunpack.c.l.bf16 %v906
        %v2659 = vunpack.c.h.bf16 %v906
        %v2660 = vunpack.c.l.bf16 %v907
        %v2661 = vunpack.c.h.bf16 %v907
        %v2662 = vunpack.c.l.bf16 %v908
        %v2663 = vunpack.c.h.bf16 %v908
        %v2664 = vunpack.c.l.bf16 %v909
        %v2665 = vunpack.c.h.bf16 %v909
        %v2666 = vunpack.c.l.bf16 %v910
        %v2667 = vunpack.c.h.bf16 %v910
        %v2668 = vunpack.c.l.bf16 %v911
        %v2669 = vunpack.c.h.bf16 %v911
        %v2670 = vunpack.c.l.bf16 %v912
        %v2671 = vunpack.c.h.bf16 %v912
        %v2672 = vunpack.c.l.bf16 %v913
        %v2673 = vunpack.c.h.bf16 %v913
        %v2674 = vunpack.c.l.bf16 %v914
        %v2675 = vunpack.c.h.bf16 %v914
        %v2676 = vunpack.c.l.bf16 %v915
        %v2677 = vunpack.c.h.bf16 %v915
        %v2678 = vunpack.c.l.bf16 %v916
        %v2679 = vunpack.c.h.bf16 %v916
        %v2680 = vunpack.c.l.bf16 %v917
        %v2681 = vunpack.c.h.bf16 %v917
        %v2682 = vunpack.c.l.bf16 %v918
        %v2683 = vunpack.c.h.bf16 %v918
        %v2684 = vunpack.c.l.bf16 %v919
        %v2685 = vunpack.c.h.bf16 %v919
        %v2686 = vunpack.c.l.bf16 %v920
        %v2687 = vunpack.c.h.bf16 %v920
        %v2688 = vunpack.c.l.bf16 %v921
        %v2689 = vunpack.c.h.bf16 %v921
        %v2690 = vunpack.c.l.bf16 %v922
        %v2691 = vunpack.c.h.bf16 %v922
        %v2692 = vunpack.c.l.bf16 %v923
        %v2693 = vunpack.c.h.bf16 %v923
        %v2694 = vunpack.c.l.bf16 %v924
        %v2695 = vunpack.c.h.bf16 %v924
        %v2696 = vunpack.c.l.bf16 %v925
        %v2697 = vunpack.c.h.bf16 %v925
        %v2698 = vunpack.c.l.bf16 %v926
        %v2699 = vunpack.c.h.bf16 %v926
        %v2700 = vunpack.c.l.bf16 %v927
        %v2701 = vunpack.c.h.bf16 %v927
        %v2702 = vunpack.c.l.bf16 %v928
        %v2703 = vunpack.c.h.bf16 %v928
        %v2704 = vunpack.c.l.bf16 %v929
        %v2705 = vunpack.c.h.bf16 %v929
        %v2706 = vunpack.c.l.bf16 %v930
        %v2707 = vunpack.c.h.bf16 %v930
        %v2708 = vunpack.c.l.bf16 %v931
        %v2709 = vunpack.c.h.bf16 %v931
        %v2710 = vunpack.c.l.bf16 %v932
        %v2711 = vunpack.c.h.bf16 %v932
        %v2712 = vunpack.c.l.bf16 %v933
        %v2713 = vunpack.c.h.bf16 %v933
        %v2714 = vunpack.c.l.bf16 %v934
        %v2715 = vunpack.c.h.bf16 %v934
        %v2716 = vunpack.c.l.bf16 %v935
        %v2717 = vunpack.c.h.bf16 %v935
        %v2718 = vunpack.c.l.bf16 %v936
        %v2719 = vunpack.c.h.bf16 %v936
        %v2720 = vunpack.c.l.bf16 %v937
        %v2721 = vunpack.c.h.bf16 %v937
        %v2722 = vunpack.c.l.bf16 %v938
        %v2723 = vunpack.c.h.bf16 %v938
        %v2724 = vunpack.c.l.bf16 %v939
        %v2725 = vunpack.c.h.bf16 %v939
        %v2726 = vunpack.c.l.bf16 %v940
        %v2727 = vunpack.c.h.bf16 %v940
        %v2728 = vunpack.c.l.bf16 %v941
        %v2729 = vunpack.c.h.bf16 %v941
        %v2730 = vunpack.c.l.bf16 %v942
        %v2731 = vunpack.c.h.bf16 %v942
        %v2732 = vunpack.c.l.bf16 %v943
        %v2733 = vunpack.c.h.bf16 %v943
        %v2734 = vunpack.c.l.bf16 %v944
        %v2735 = vunpack.c.h.bf16 %v944
        %v2736 = vunpack.c.l.bf16 %v945
        %v2737 = vunpack.c.h.bf16 %v945
        %v2738 = vunpack.c.l.bf16 %v946
        %v2739 = vunpack.c.h.bf16 %v946
        %v2740 = vunpack.c.l.bf16 %v947
        %v2741 = vunpack.c.h.bf16 %v947
        %v2742 = vunpack.c.l.bf16 %v948
        %v2743 = vunpack.c.h.bf16 %v948
        %v2744 = vunpack.c.l.bf16 %v949
        %v2745 = vunpack.c.h.bf16 %v949
        %v2746 = vunpack.c.l.bf16 %v950
        %v2747 = vunpack.c.h.bf16 %v950
        %v2748 = vunpack.c.l.bf16 %v951
        %v2749 = vunpack.c.h.bf16 %v951
        %v2750 = vunpack.c.l.bf16 %v952
        %v2751 = vunpack.c.h.bf16 %v952
        %v2752 = vunpack.c.l.bf16 %v953
        %v2753 = vunpack.c.h.bf16 %v953
        %v2754 = vunpack.c.l.bf16 %v954
        %v2755 = vunpack.c.h.bf16 %v954
        %v2756 = vunpack.c.l.bf16 %v955
        %v2757 = vunpack.c.h.bf16 %v955
        %v2758 = vunpack.c.l.bf16 %v956
        %v2759 = vunpack.c.h.bf16 %v956
        %v2760 = vunpack.c.l.bf16 %v957
        %v2761 = vunpack.c.h.bf16 %v957
        %v2762 = vunpack.c.l.bf16 %v958
        %v2763 = vunpack.c.h.bf16 %v958
        %v2764 = vunpack.c.l.bf16 %v959
        %v2765 = vunpack.c.h.bf16 %v959
        %v2766 = vunpack.c.l.bf16 %v960
        %v2767 = vunpack.c.h.bf16 %v960
        %v2768 = vunpack.c.l.bf16 %v961
        %v2769 = vunpack.c.h.bf16 %v961
        %v2770 = vunpack.c.l.bf16 %v962
        %v2771 = vunpack.c.h.bf16 %v962
        %v2772 = vunpack.c.l.bf16 %v963
        %v2773 = vunpack.c.h.bf16 %v963
        %v2774 = vunpack.c.l.bf16 %v964
        %v2775 = vunpack.c.h.bf16 %v964
        %v2776 = vunpack.c.l.bf16 %v965
        %v2777 = vunpack.c.h.bf16 %v965
        %v2778 = vunpack.c.l.bf16 %v966
        %v2779 = vunpack.c.h.bf16 %v966
        %v2780 = vunpack.c.l.bf16 %v967
        %v2781 = vunpack.c.h.bf16 %v967
        %v2782 = vunpack.c.l.bf16 %v968
        %v2783 = vunpack.c.h.bf16 %v968
        %v2784 = vunpack.c.l.bf16 %v969
        %v2785 = vunpack.c.h.bf16 %v969
        %v2786 = vunpack.c.l.bf16 %v970
        %v2787 = vunpack.c.h.bf16 %v970
        %v2788 = vunpack.c.l.bf16 %v971
        %v2789 = vunpack.c.h.bf16 %v971
        %v2790 = vunpack.c.l.bf16 %v972
        %v2791 = vunpack.c.h.bf16 %v972
        %v2792 = vunpack.c.l.bf16 %v973
        %v2793 = vunpack.c.h.bf16 %v973
        %v2794 = vunpack.c.l.bf16 %v974
        %v2795 = vunpack.c.h.bf16 %v974
        %v2796 = vunpack.c.l.bf16 %v975
        %v2797 = vunpack.c.h.bf16 %v975
        %v2798 = vunpack.c.l.bf16 %v976
        %v2799 = vunpack.c.h.bf16 %v976
        %v2800 = vunpack.c.l.bf16 %v977
        %v2801 = vunpack.c.h.bf16 %v977
        %v2802 = vunpack.c.l.bf16 %v978
        %v2803 = vunpack.c.h.bf16 %v978
        %v2804 = vunpack.c.l.bf16 %v979
        %v2805 = vunpack.c.h.bf16 %v979
        %v2806 = vunpack.c.l.bf16 %v980
        %v2807 = vunpack.c.h.bf16 %v980
        %v2808 = vunpack.c.l.bf16 %v981
        %v2809 = vunpack.c.h.bf16 %v981
        %v2810 = vunpack.c.l.bf16 %v982
        %v2811 = vunpack.c.h.bf16 %v982
        %v2812 = vunpack.c.l.bf16 %v983
        %v2813 = vunpack.c.h.bf16 %v983
        %v2814 = vunpack.c.l.bf16 %v984
        %v2815 = vunpack.c.h.bf16 %v984
        %v2816 = vunpack.c.l.bf16 %v985
        %v2817 = vunpack.c.h.bf16 %v985
        %v2818 = vunpack.c.l.bf16 %v986
        %v2819 = vunpack.c.h.bf16 %v986
        %v2820 = vunpack.c.l.bf16 %v987
        %v2821 = vunpack.c.h.bf16 %v987
        %v2822 = vunpack.c.l.bf16 %v988
        %v2823 = vunpack.c.h.bf16 %v988
        %v2824 = vunpack.c.l.bf16 %v989
        %v2825 = vunpack.c.h.bf16 %v989
        %v2826 = vunpack.c.l.bf16 %v990
        %v2827 = vunpack.c.h.bf16 %v990
        %v2828 = vunpack.c.l.bf16 %v991
        %v2829 = vunpack.c.h.bf16 %v991
        %v2830 = vunpack.c.l.bf16 %v992
        %v2831 = vunpack.c.h.bf16 %v992
        %v2832 = vunpack.c.l.bf16 %v993
        %v2833 = vunpack.c.h.bf16 %v993
        %v2834 = vunpack.c.l.bf16 %v994
        %v2835 = vunpack.c.h.bf16 %v994
        %v2836 = vunpack.c.l.bf16 %v995
        %v2837 = vunpack.c.h.bf16 %v995
        %v2838 = vunpack.c.l.bf16 %v996
        %v2839 = vunpack.c.h.bf16 %v996
        %v2840 = vunpack.c.l.bf16 %v997
        %v2841 = vunpack.c.h.bf16 %v997
        %v2842 = vunpack.c.l.bf16 %v998
        %v2843 = vunpack.c.h.bf16 %v998
        %v2844 = vunpack.c.l.bf16 %v999
        %v2845 = vunpack.c.h.bf16 %v999
        %v2846 = vunpack.c.l.bf16 %v1000
        %v2847 = vunpack.c.h.bf16 %v1000
        %v2848 = vunpack.c.l.bf16 %v1001
        %v2849 = vunpack.c.h.bf16 %v1001
        %v2850 = vunpack.c.l.bf16 %v1002
        %v2851 = vunpack.c.h.bf16 %v1002
        %v2852 = vunpack.c.l.bf16 %v1003
        %v2853 = vunpack.c.h.bf16 %v1003
        %v2854 = vunpack.c.l.bf16 %v1004
        %v2855 = vunpack.c.h.bf16 %v1004
        %v2856 = vunpack.c.l.bf16 %v1005
        %v2857 = vunpack.c.h.bf16 %v1005
        %v2858 = vunpack.c.l.bf16 %v1006
        %v2859 = vunpack.c.h.bf16 %v1006
        %v2860 = vunpack.c.l.bf16 %v1007
        %v2861 = vunpack.c.h.bf16 %v1007
        %v2862 = vunpack.c.l.bf16 %v1008
        %v2863 = vunpack.c.h.bf16 %v1008
        %v2864 = vunpack.c.l.bf16 %v1009
        %v2865 = vunpack.c.h.bf16 %v1009
        %v2866 = vunpack.c.l.bf16 %v1010
        %v2867 = vunpack.c.h.bf16 %v1010
        %v2868 = vunpack.c.l.bf16 %v1011
        %v2869 = vunpack.c.h.bf16 %v1011
        %v2870 = vunpack.c.l.bf16 %v1012
        %v2871 = vunpack.c.h.bf16 %v1012
        %v2872 = vunpack.c.l.bf16 %v1013
        %v2873 = vunpack.c.h.bf16 %v1013
        %v2874 = vunpack.c.l.bf16 %v1014
        %v2875 = vunpack.c.h.bf16 %v1014
        %v2876 = vunpack.c.l.bf16 %v1015
        %v2877 = vunpack.c.h.bf16 %v1015
        %v2878 = vunpack.c.l.bf16 %v1016
        %v2879 = vunpack.c.h.bf16 %v1016
        %v2880 = vunpack.c.l.bf16 %v1017
        %v2881 = vunpack.c.h.bf16 %v1017
        %v2882 = vunpack.c.l.bf16 %v1018
        %v2883 = vunpack.c.h.bf16 %v1018
        %v2884 = vunpack.c.l.bf16 %v1019
        %v2885 = vunpack.c.h.bf16 %v1019
        %v2886 = vunpack.c.l.bf16 %v1020
        %v2887 = vunpack.c.h.bf16 %v1020
        %v2888 = vunpack.c.l.bf16 %v1021
        %v2889 = vunpack.c.h.bf16 %v1021
        %v2890 = vunpack.c.l.bf16 %v1022
        %v2891 = vunpack.c.h.bf16 %v1022
        %v2892 = vunpack.c.l.bf16 %v1023
        %v2893 = vunpack.c.h.bf16 %v1023
        %v2894 = vunpack.c.l.bf16 %v1024
        %v2895 = vunpack.c.h.bf16 %v1024
        %v2896 = vunpack.c.l.bf16 %v1025
        %v2897 = vunpack.c.h.bf16 %v1025
        %v2898 = vunpack.c.l.bf16 %v1026
        %v2899 = vunpack.c.h.bf16 %v1026
        %v2900 = vunpack.c.l.bf16 %v1027
        %v2901 = vunpack.c.h.bf16 %v1027
        %v2902 = vunpack.c.l.bf16 %v1028
        %v2903 = vunpack.c.h.bf16 %v1028
        %v2904 = vunpack.c.l.bf16 %v1029
        %v2905 = vunpack.c.h.bf16 %v1029
        %v2906 = vunpack.c.l.bf16 %v1030
        %v2907 = vunpack.c.h.bf16 %v1030
        %v2908 = vunpack.c.l.bf16 %v1031
        %v2909 = vunpack.c.h.bf16 %v1031
        %v2910 = vunpack.c.l.bf16 %v1032
        %v2911 = vunpack.c.h.bf16 %v1032
        %v2912 = vunpack.c.l.bf16 %v1033
        %v2913 = vunpack.c.h.bf16 %v1033
        %v2914 = vunpack.c.l.bf16 %v1034
        %v2915 = vunpack.c.h.bf16 %v1034
        %v2916 = vunpack.c.l.bf16 %v1035
        %v2917 = vunpack.c.h.bf16 %v1035
        %v2918 = vunpack.c.l.bf16 %v1036
        %v2919 = vunpack.c.h.bf16 %v1036
        %v2920 = vunpack.c.l.bf16 %v1037
        %v2921 = vunpack.c.h.bf16 %v1037
        %v2922 = vunpack.c.l.bf16 %v1038
        %v2923 = vunpack.c.h.bf16 %v1038
        %v2924 = vunpack.c.l.bf16 %v1039
        %v2925 = vunpack.c.h.bf16 %v1039
        %v2926 = vunpack.c.l.bf16 %v1040
        %v2927 = vunpack.c.h.bf16 %v1040
        %v2928 = vunpack.c.l.bf16 %v1041
        %v2929 = vunpack.c.h.bf16 %v1041
        %v2930 = vunpack.c.l.bf16 %v1042
        %v2931 = vunpack.c.h.bf16 %v1042
        %v2932 = vunpack.c.l.bf16 %v1043
        %v2933 = vunpack.c.h.bf16 %v1043
        %v2934 = vunpack.c.l.bf16 %v1044
        %v2935 = vunpack.c.h.bf16 %v1044
        %v2936 = vunpack.c.l.bf16 %v1045
        %v2937 = vunpack.c.h.bf16 %v1045
        %v2938 = vunpack.c.l.bf16 %v1046
        %v2939 = vunpack.c.h.bf16 %v1046
        %v2940 = vunpack.c.l.bf16 %v1047
        %v2941 = vunpack.c.h.bf16 %v1047
        %v2942 = vunpack.c.l.bf16 %v1048
        %v2943 = vunpack.c.h.bf16 %v1048
        %v2944 = vunpack.c.l.bf16 %v1049
        %v2945 = vunpack.c.h.bf16 %v1049
        %v2946 = vunpack.c.l.bf16 %v1050
        %v2947 = vunpack.c.h.bf16 %v1050
        %v2948 = vunpack.c.l.bf16 %v1051
        %v2949 = vunpack.c.h.bf16 %v1051
        %v2950 = vunpack.c.l.bf16 %v1052
        %v2951 = vunpack.c.h.bf16 %v1052
        %v2952 = vunpack.c.l.bf16 %v1053
        %v2953 = vunpack.c.h.bf16 %v1053
        %v2954 = vunpack.c.l.bf16 %v1054
        %v2955 = vunpack.c.h.bf16 %v1054
        %v2956 = vunpack.c.l.bf16 %v1055
        %v2957 = vunpack.c.h.bf16 %v1055
        %v2958 = vunpack.c.l.bf16 %v1056
        %v2959 = vunpack.c.h.bf16 %v1056
        %v2960 = vunpack.c.l.bf16 %v1057
        %v2961 = vunpack.c.h.bf16 %v1057
        %v2962 = vunpack.c.l.bf16 %v1058
        %v2963 = vunpack.c.h.bf16 %v1058
        %v2964 = vunpack.c.l.bf16 %v1059
        %v2965 = vunpack.c.h.bf16 %v1059
        %v2966 = vunpack.c.l.bf16 %v1060
        %v2967 = vunpack.c.h.bf16 %v1060
        %v2968 = vunpack.c.l.bf16 %v1061
        %v2969 = vunpack.c.h.bf16 %v1061
        %v2970 = vunpack.c.l.bf16 %v1062
        %v2971 = vunpack.c.h.bf16 %v1062
        %v2972 = vunpack.c.l.bf16 %v1063
        %v2973 = vunpack.c.h.bf16 %v1063
        %v2974 = vunpack.c.l.bf16 %v1064
        %v2975 = vunpack.c.h.bf16 %v1064
        %v2976 = vunpack.c.l.bf16 %v1065
        %v2977 = vunpack.c.h.bf16 %v1065
        %v2978 = vunpack.c.l.bf16 %v1066
        %v2979 = vunpack.c.h.bf16 %v1066
        %v2980 = vunpack.c.l.bf16 %v1067
        %v2981 = vunpack.c.h.bf16 %v1067
        %v2982 = vunpack.c.l.bf16 %v1068
        %v2983 = vunpack.c.h.bf16 %v1068
        %v2984 = vunpack.c.l.bf16 %v1069
        %v2985 = vunpack.c.h.bf16 %v1069
        %v2986 = vunpack.c.l.bf16 %v1070
        %v2987 = vunpack.c.h.bf16 %v1070
        %v2988 = vunpack.c.l.bf16 %v1071
        %v2989 = vunpack.c.h.bf16 %v1071
        %v2990 = vunpack.c.l.bf16 %v1072
        %v2991 = vunpack.c.h.bf16 %v1072
        %v2992 = vunpack.c.l.bf16 %v1073
        %v2993 = vunpack.c.h.bf16 %v1073
        %v2994 = vunpack.c.l.bf16 %v1074
        %v2995 = vunpack.c.h.bf16 %v1074
        %v2996 = vunpack.c.l.bf16 %v1075
        %v2997 = vunpack.c.h.bf16 %v1075
        %v2998 = vunpack.c.l.bf16 %v1076
        %v2999 = vunpack.c.h.bf16 %v1076
        %v3000 = vunpack.c.l.bf16 %v1077
        %v3001 = vunpack.c.h.bf16 %v1077
        %v3002 = vunpack.c.l.bf16 %v1078
        %v3003 = vunpack.c.h.bf16 %v1078
        %v3004 = vunpack.c.l.bf16 %v1079
        %v3005 = vunpack.c.h.bf16 %v1079
        %v3006 = vunpack.c.l.bf16 %v1080
        %v3007 = vunpack.c.h.bf16 %v1080
        %v3008 = vunpack.c.l.bf16 %v1081
        %v3009 = vunpack.c.h.bf16 %v1081
        %v3010 = vunpack.c.l.bf16 %v1082
        %v3011 = vunpack.c.h.bf16 %v1082
        %v3012 = vunpack.c.l.bf16 %v1083
        %v3013 = vunpack.c.h.bf16 %v1083
        %v3014 = vunpack.c.l.bf16 %v1084
        %v3015 = vunpack.c.h.bf16 %v1084
        %v3016 = vunpack.c.l.bf16 %v1085
        %v3017 = vunpack.c.h.bf16 %v1085
        %v3018 = vunpack.c.l.bf16 %v1086
        %v3019 = vunpack.c.h.bf16 %v1086
        %v3020 = vunpack.c.l.bf16 %v1087
        %v3021 = vunpack.c.h.bf16 %v1087
        %v3022 = vunpack.c.l.bf16 %v1088
        %v3023 = vunpack.c.h.bf16 %v1088
        %v3024 = vunpack.c.l.bf16 %v1089
        %v3025 = vunpack.c.h.bf16 %v1089
        %v3026 = vunpack.c.l.bf16 %v1090
        %v3027 = vunpack.c.h.bf16 %v1090
        %v3028 = vunpack.c.l.bf16 %v1091
        %v3029 = vunpack.c.h.bf16 %v1091
        %v3030 = vunpack.c.l.bf16 %v1092
        %v3031 = vunpack.c.h.bf16 %v1092
        %v3032 = vunpack.c.l.bf16 %v1093
        %v3033 = vunpack.c.h.bf16 %v1093
        %v3034 = vunpack.c.l.bf16 %v1094
        %v3035 = vunpack.c.h.bf16 %v1094
        %v3036 = vunpack.c.l.bf16 %v1095
        %v3037 = vunpack.c.h.bf16 %v1095
        %v3038 = vunpack.c.l.bf16 %v1096
        %v3039 = vunpack.c.h.bf16 %v1096
        %v3040 = vunpack.c.l.bf16 %v1097
        %v3041 = vunpack.c.h.bf16 %v1097
        %v3042 = vunpack.c.l.bf16 %v1098
        %v3043 = vunpack.c.h.bf16 %v1098
        %v3044 = vunpack.c.l.bf16 %v1099
        %v3045 = vunpack.c.h.bf16 %v1099
        %v3046 = vunpack.c.l.bf16 %v1100
        %v3047 = vunpack.c.h.bf16 %v1100
        %v3048 = vunpack.c.l.bf16 %v1101
        %v3049 = vunpack.c.h.bf16 %v1101
        %v3050 = vunpack.c.l.bf16 %v1102
        %v3051 = vunpack.c.h.bf16 %v1102
        %v3052 = vunpack.c.l.bf16 %v1103
        %v3053 = vunpack.c.h.bf16 %v1103
        %v3054 = vunpack.c.l.bf16 %v1104
        %v3055 = vunpack.c.h.bf16 %v1104
        %v3056 = vunpack.c.l.bf16 %v1105
        %v3057 = vunpack.c.h.bf16 %v1105
        %v3058 = vunpack.c.l.bf16 %v1106
        %v3059 = vunpack.c.h.bf16 %v1106
        %v3060 = vunpack.c.l.bf16 %v1107
        %v3061 = vunpack.c.h.bf16 %v1107
        %v3062 = vunpack.c.l.bf16 %v1108
        %v3063 = vunpack.c.h.bf16 %v1108
        %v3064 = vunpack.c.l.bf16 %v1109
        %v3065 = vunpack.c.h.bf16 %v1109
        %v3066 = vunpack.c.l.bf16 %v1110
        %v3067 = vunpack.c.h.bf16 %v1110
        %v3068 = vunpack.c.l.bf16 %v1111
        %v3069 = vunpack.c.h.bf16 %v1111
        %v3070 = vunpack.c.l.bf16 %v1112
        %v3071 = vunpack.c.h.bf16 %v1112
        %v3072 = vunpack.c.l.bf16 %v1113
        %v3073 = vunpack.c.h.bf16 %v1113
        %v3074 = vunpack.c.l.bf16 %v1114
        %v3075 = vunpack.c.h.bf16 %v1114
        %v3076 = vunpack.c.l.bf16 %v1115
        %v3077 = vunpack.c.h.bf16 %v1115
        %v3078 = vunpack.c.l.bf16 %v1116
        %v3079 = vunpack.c.h.bf16 %v1116
        %v3080 = vunpack.c.l.bf16 %v1117
        %v3081 = vunpack.c.h.bf16 %v1117
        %v3082 = vunpack.c.l.bf16 %v1118
        %v3083 = vunpack.c.h.bf16 %v1118
        %v3084 = vunpack.c.l.bf16 %v1119
        %v3085 = vunpack.c.h.bf16 %v1119
        %v3086 = vunpack.c.l.bf16 %v1120
        %v3087 = vunpack.c.h.bf16 %v1120
        %v3088 = vunpack.c.l.bf16 %v1121
        %v3089 = vunpack.c.h.bf16 %v1121
        %v3090 = vunpack.c.l.bf16 %v1122
        %v3091 = vunpack.c.h.bf16 %v1122
        %v3092 = vunpack.c.l.bf16 %v1123
        %v3093 = vunpack.c.h.bf16 %v1123
        %v3094 = vunpack.c.l.bf16 %v1124
        %v3095 = vunpack.c.h.bf16 %v1124
        %v3096 = vunpack.c.l.bf16 %v1125
        %v3097 = vunpack.c.h.bf16 %v1125
        %v3098 = vunpack.c.l.bf16 %v1126
        %v3099 = vunpack.c.h.bf16 %v1126
        %v3100 = vunpack.c.l.bf16 %v1127
        %v3101 = vunpack.c.h.bf16 %v1127
        %v3102 = vunpack.c.l.bf16 %v1128
        %v3103 = vunpack.c.h.bf16 %v1128
        %v3104 = vunpack.c.l.bf16 %v1129
        %v3105 = vunpack.c.h.bf16 %v1129
        %v3106 = vunpack.c.l.bf16 %v1130
        %v3107 = vunpack.c.h.bf16 %v1130
        %v3108 = vunpack.c.l.bf16 %v1131
        %v3109 = vunpack.c.h.bf16 %v1131
        %v3110 = vunpack.c.l.bf16 %v1132
        %v3111 = vunpack.c.h.bf16 %v1132
        %v3112 = vunpack.c.l.bf16 %v1133
        %v3113 = vunpack.c.h.bf16 %v1133
        %v3114 = vunpack.c.l.bf16 %v1134
        %v3115 = vunpack.c.h.bf16 %v1134
        %v3116 = vunpack.c.l.bf16 %v1135
        %v3117 = vunpack.c.h.bf16 %v1135
        %v3118 = vunpack.c.l.bf16 %v1136
        %v3119 = vunpack.c.h.bf16 %v1136
        %v3120 = vunpack.c.l.bf16 %v1137
        %v3121 = vunpack.c.h.bf16 %v1137
        %v3122 = vunpack.c.l.bf16 %v1138
        %v3123 = vunpack.c.h.bf16 %v1138
        %v3124 = vunpack.c.l.bf16 %v1139
        %v3125 = vunpack.c.h.bf16 %v1139
        %v3126 = vunpack.c.l.bf16 %v1140
        %v3127 = vunpack.c.h.bf16 %v1140
        %v3128 = vunpack.c.l.bf16 %v1141
        %v3129 = vunpack.c.h.bf16 %v1141
        %v3130 = vunpack.c.l.bf16 %v1142
        %v3131 = vunpack.c.h.bf16 %v1142
        %v3132 = vunpack.c.l.bf16 %v1143
        %v3133 = vunpack.c.h.bf16 %v1143
        %v3134 = vunpack.c.l.bf16 %v1144
        %v3135 = vunpack.c.h.bf16 %v1144
        %v3136 = vunpack.c.l.bf16 %v1145
        %v3137 = vunpack.c.h.bf16 %v1145
        %v3138 = vunpack.c.l.bf16 %v1146
        %v3139 = vunpack.c.h.bf16 %v1146
        %v3140 = vunpack.c.l.bf16 %v1147
        %v3141 = vunpack.c.h.bf16 %v1147
        %v3142 = vunpack.c.l.bf16 %v1148
        %v3143 = vunpack.c.h.bf16 %v1148
        %v3144 = vunpack.c.l.bf16 %v1149
        %v3145 = vunpack.c.h.bf16 %v1149
        %v3146 = vunpack.c.l.bf16 %v1150
        %v3147 = vunpack.c.h.bf16 %v1150
        %v3148 = vunpack.c.l.bf16 %v1151
        %v3149 = vunpack.c.h.bf16 %v1151
        %v3150 = vunpack.c.l.bf16 %v1152
        %v3151 = vunpack.c.h.bf16 %v1152
        %v3152 = vunpack.c.l.bf16 %v1153
        %v3153 = vunpack.c.h.bf16 %v1153
        %v3154 = vunpack.c.l.bf16 %v1154
        %v3155 = vunpack.c.h.bf16 %v1154
        %v3156 = vunpack.c.l.bf16 %v1155
        %v3157 = vunpack.c.h.bf16 %v1155
        %v3158 = vunpack.c.l.bf16 %v1156
        %v3159 = vunpack.c.h.bf16 %v1156
        %v3160 = vunpack.c.l.bf16 %v1157
        %v3161 = vunpack.c.h.bf16 %v1157
        %v3162 = vunpack.c.l.bf16 %v1158
        %v3163 = vunpack.c.h.bf16 %v1158
        %v3164 = vunpack.c.l.bf16 %v1159
        %v3165 = vunpack.c.h.bf16 %v1159
        %v3166 = vunpack.c.l.bf16 %v1160
        %v3167 = vunpack.c.h.bf16 %v1160
        %v3168 = vunpack.c.l.bf16 %v1161
        %v3169 = vunpack.c.h.bf16 %v1161
        %v3170 = vunpack.c.l.bf16 %v1162
        %v3171 = vunpack.c.h.bf16 %v1162
        %v3172 = vunpack.c.l.bf16 %v1163
        %v3173 = vunpack.c.h.bf16 %v1163
        %v3174 = vunpack.c.l.bf16 %v1164
        %v3175 = vunpack.c.h.bf16 %v1164
        %v3176 = vunpack.c.l.bf16 %v1165
        %v3177 = vunpack.c.h.bf16 %v1165
        %v3178 = vunpack.c.l.bf16 %v1166
        %v3179 = vunpack.c.h.bf16 %v1166
        %v3180 = vunpack.c.l.bf16 %v1167
        %v3181 = vunpack.c.h.bf16 %v1167
        %v3182 = vunpack.c.l.bf16 %v1168
        %v3183 = vunpack.c.h.bf16 %v1168
        %v3184 = vunpack.c.l.bf16 %v1169
        %v3185 = vunpack.c.h.bf16 %v1169
        %v3186 = vunpack.c.l.bf16 %v1170
        %v3187 = vunpack.c.h.bf16 %v1170
        %v3188 = vunpack.c.l.bf16 %v1171
        %v3189 = vunpack.c.h.bf16 %v1171
        %v3190 = vunpack.c.l.bf16 %v1172
        %v3191 = vunpack.c.h.bf16 %v1172
        %v3192 = vunpack.c.l.bf16 %v1173
        %v3193 = vunpack.c.h.bf16 %v1173
        %v3194 = vunpack.c.l.bf16 %v1174
        %v3195 = vunpack.c.h.bf16 %v1174
        %v3196 = vunpack.c.l.bf16 %v1175
        %v3197 = vunpack.c.h.bf16 %v1175
        %v3198 = vunpack.c.l.bf16 %v1176
        %v3199 = vunpack.c.h.bf16 %v1176
        %v3200 = vunpack.c.l.bf16 %v1177
        %v3201 = vunpack.c.h.bf16 %v1177
        %v3202 = vunpack.c.l.bf16 %v1178
        %v3203 = vunpack.c.h.bf16 %v1178
        %v3204 = vunpack.c.l.bf16 %v1179
        %v3205 = vunpack.c.h.bf16 %v1179
        %v3206 = vunpack.c.l.bf16 %v1180
        %v3207 = vunpack.c.h.bf16 %v1180
        %v3208 = vunpack.c.l.bf16 %v1181
        %v3209 = vunpack.c.h.bf16 %v1181
        %v3210 = vunpack.c.l.bf16 %v1182
        %v3211 = vunpack.c.h.bf16 %v1182
        %v3212 = vunpack.c.l.bf16 %v1183
        %v3213 = vunpack.c.h.bf16 %v1183
        %v3214 = vunpack.c.l.bf16 %v1184
        %v3215 = vunpack.c.h.bf16 %v1184
        %v3216 = vunpack.c.l.bf16 %v1185
        %v3217 = vunpack.c.h.bf16 %v1185
        %v3218 = vunpack.c.l.bf16 %v1186
        %v3219 = vunpack.c.h.bf16 %v1186
        %v3220 = vunpack.c.l.bf16 %v1187
        %v3221 = vunpack.c.h.bf16 %v1187
        %v3222 = vunpack.c.l.bf16 %v1188
        %v3223 = vunpack.c.h.bf16 %v1188
        %v3224 = vunpack.c.l.bf16 %v1189
        %v3225 = vunpack.c.h.bf16 %v1189
        %v3226 = vunpack.c.l.bf16 %v1190
        %v3227 = vunpack.c.h.bf16 %v1190
        %v3228 = vunpack.c.l.bf16 %v1191
        %v3229 = vunpack.c.h.bf16 %v1191
        %v3230 = vunpack.c.l.bf16 %v1192
        %v3231 = vunpack.c.h.bf16 %v1192
        %v3232 = vunpack.c.l.bf16 %v1193
        %v3233 = vunpack.c.h.bf16 %v1193
        %v3234 = vunpack.c.l.bf16 %v1194
        %v3235 = vunpack.c.h.bf16 %v1194
        %v3236 = vunpack.c.l.bf16 %v1195
        %v3237 = vunpack.c.h.bf16 %v1195
        %v3238 = vunpack.c.l.bf16 %v1196
        %v3239 = vunpack.c.h.bf16 %v1196
        %v3240 = vunpack.c.l.bf16 %v1197
        %v3241 = vunpack.c.h.bf16 %v1197
        %v3242 = vunpack.c.l.bf16 %v1198
        %v3243 = vunpack.c.h.bf16 %v1198
        %v3244 = vunpack.c.l.bf16 %v1199
        %v3245 = vunpack.c.h.bf16 %v1199
        %v3246 = vunpack.c.l.bf16 %v1200
        %v3247 = vunpack.c.h.bf16 %v1200
        %v3248 = vunpack.c.l.bf16 %v1201
        %v3249 = vunpack.c.h.bf16 %v1201
        %v3250 = vld [vmem:[#allocation2] sm:$0xff]
        %v3251 = vld [vmem:[#allocation2 + $0x8] sm:$0xff]
        %v3252 = vld [vmem:[#allocation2 + $0x10] sm:$0xff]
        %v3253 = vld [vmem:[#allocation2 + $0x18] sm:$0xff]
        %v3254 = vld [vmem:[#allocation2 + $0x20] sm:$0xff]
        %v3255 = vld [vmem:[#allocation2 + $0x28] sm:$0xff]
        %v3256 = vld [vmem:[#allocation2 + $0x30] sm:$0xff]
        %v3257 = vld [vmem:[#allocation2 + $0x38] sm:$0xff]
        %v3258 = vld [vmem:[#allocation2 + $0x40] sm:$0xff]
        %v3259 = vld [vmem:[#allocation2 + $0x48] sm:$0xff]
        %v3260 = vld [vmem:[#allocation2 + $0x50] sm:$0xff]
        %v3261 = vld [vmem:[#allocation2 + $0x58] sm:$0xff]
        %v3262 = vld [vmem:[#allocation2 + $0x60] sm:$0xff]
        %v3263 = vld [vmem:[#allocation2 + $0x68] sm:$0xff]
        %v3264 = vld [vmem:[#allocation2 + $0x70] sm:$0xff]
        %v3265 = vld [vmem:[#allocation2 + $0x78] sm:$0xff]
        %v3266 = vld [vmem:[#allocation2 + $0x80] sm:$0xff]
        %v3267 = vld [vmem:[#allocation2 + $0x88] sm:$0xff]
        %v3268 = vld [vmem:[#allocation2 + $0x90] sm:$0xff]
        %v3269 = vld [vmem:[#allocation2 + $0x98] sm:$0xff]
        %v3270 = vld [vmem:[#allocation2 + $0xa0] sm:$0xff]
        %v3271 = vld [vmem:[#allocation2 + $0xa8] sm:$0xff]
        %v3272 = vld [vmem:[#allocation2 + $0xb0] sm:$0xff]
        %v3273 = vld [vmem:[#allocation2 + $0xb8] sm:$0xff]
        %v3274 = vld [vmem:[#allocation2 + $0xc0] sm:$0xff]
        %v3275 = vld [vmem:[#allocation2 + $0xc8] sm:$0xff]
        %v3276 = vld [vmem:[#allocation2 + $0xd0] sm:$0xff]
        %v3277 = vld [vmem:[#allocation2 + $0xd8] sm:$0xff]
        %v3278 = vld [vmem:[#allocation2 + $0xe0] sm:$0xff]
        %v3279 = vld [vmem:[#allocation2 + $0xe8] sm:$0xff]
        %v3280 = vld [vmem:[#allocation2 + $0xf0] sm:$0xff]
        %v3281 = vld [vmem:[#allocation2 + $0xf8] sm:$0xff]
        %v3282 = vld [vmem:[#allocation2 + $0x100] sm:$0xff]
        %v3283 = vld [vmem:[#allocation2 + $0x108] sm:$0xff]
        %v3284 = vld [vmem:[#allocation2 + $0x110] sm:$0xff]
        %v3285 = vld [vmem:[#allocation2 + $0x118] sm:$0xff]
        %v3286 = vld [vmem:[#allocation2 + $0x120] sm:$0xff]
        %v3287 = vld [vmem:[#allocation2 + $0x128] sm:$0xff]
        %v3288 = vld [vmem:[#allocation2 + $0x130] sm:$0xff]
        %v3289 = vld [vmem:[#allocation2 + $0x138] sm:$0xff]
        %v3290 = vld [vmem:[#allocation2 + $0x140] sm:$0xff]
        %v3291 = vld [vmem:[#allocation2 + $0x148] sm:$0xff]
        %v3292 = vld [vmem:[#allocation2 + $0x150] sm:$0xff]
        %v3293 = vld [vmem:[#allocation2 + $0x158] sm:$0xff]
        %v3294 = vld [vmem:[#allocation2 + $0x160] sm:$0xff]
        %v3295 = vld [vmem:[#allocation2 + $0x168] sm:$0xff]
        %v3296 = vld [vmem:[#allocation2 + $0x170] sm:$0xff]
        %v3297 = vld [vmem:[#allocation2 + $0x178] sm:$0xff]
        %v3298 = vld [vmem:[#allocation2 + $0x180] sm:$0xff]
        %v3299 = vld [vmem:[#allocation2 + $0x188] sm:$0xff]
        %v3300 = vld [vmem:[#allocation2 + $0x190] sm:$0xff]
        %v3301 = vld [vmem:[#allocation2 + $0x198] sm:$0xff]
        %v3302 = vld [vmem:[#allocation2 + $0x1a0] sm:$0xff]
        %v3303 = vld [vmem:[#allocation2 + $0x1a8] sm:$0xff]
        %v3304 = vld [vmem:[#allocation2 + $0x1b0] sm:$0xff]
        %v3305 = vld [vmem:[#allocation2 + $0x1b8] sm:$0xff]
        %v3306 = vld [vmem:[#allocation2 + $0x1c0] sm:$0xff]
        %v3307 = vld [vmem:[#allocation2 + $0x1c8] sm:$0xff]
        %v3308 = vld [vmem:[#allocation2 + $0x1d0] sm:$0xff]
        %v3309 = vld [vmem:[#allocation2 + $0x1d8] sm:$0xff]
        %v3310 = vld [vmem:[#allocation2 + $0x1e0] sm:$0xff]
        %v3311 = vld [vmem:[#allocation2 + $0x1e8] sm:$0xff]
        %v3312 = vld [vmem:[#allocation2 + $0x1f0] sm:$0xff]
        %v3313 = vld [vmem:[#allocation2 + $0x1f8] sm:$0xff]
        %3314 = vmatprep.subr.mxu0 %v1203
        %3315 = vmatpush1.msra.mxu0 %v1202
        %3316 = vmatprep.subr.mxu0 %v1207
        %3317 = vmatpush1.msra.mxu0 %v1206
        %3318 = vmatprep.subr.mxu0 %v1211
        %3319 = vmatpush1.msra.mxu0 %v1210
        %3320 = vmatprep.subr.mxu0 %v1215
        %3321 = vmatpush1.msra.mxu0 %v1214
        %3322 = vmatprep.subr.mxu0 %v1219
        %3323 = vmatpush1.msra.mxu0 %v1218
        %3324 = vmatprep.subr.mxu0 %v1223
        %3325 = vmatpush1.msra.mxu0 %v1222
        %3326 = vmatprep.subr.mxu0 %v1227
        %3327 = vmatpush1.msra.mxu0 %v1226
        %3328 = vmatprep.subr.mxu0 %v1231
        %3329 = vmatpush1.msra.mxu0 %v1230
        %3330 = vmatprep.subr.mxu0 %v1235
        %3331 = vmatpush1.msra.mxu0 %v1234
        %3332 = vmatprep.subr.mxu0 %v1239
        %3333 = vmatpush1.msra.mxu0 %v1238
        %3334 = vmatprep.subr.mxu0 %v1243
        %3335 = vmatpush1.msra.mxu0 %v1242
        %3336 = vmatprep.subr.mxu0 %v1247
        %3337 = vmatpush1.msra.mxu0 %v1246
        %3338 = vmatprep.subr.mxu0 %v1251
        %3339 = vmatpush1.msra.mxu0 %v1250
        %3340 = vmatprep.subr.mxu0 %v1255
        %3341 = vmatpush1.msra.mxu0 %v1254
        %3342 = vmatprep.subr.mxu0 %v1259
        %3343 = vmatpush1.msra.mxu0 %v1258
        %3344 = vmatprep.subr.mxu0 %v1263
        %3345 = vmatpush1.msra.mxu0 %v1262
        %3346 = vmatprep.subr.mxu0 %v1267
        %3347 = vmatpush1.msra.mxu0 %v1266
        %3348 = vmatprep.subr.mxu0 %v1271
        %3349 = vmatpush1.msra.mxu0 %v1270
        %3350 = vmatprep.subr.mxu0 %v1275
        %3351 = vmatpush1.msra.mxu0 %v1274
        %3352 = vmatprep.subr.mxu0 %v1279
        %3353 = vmatpush1.msra.mxu0 %v1278
        %3354 = vmatprep.subr.mxu0 %v1283
        %3355 = vmatpush1.msra.mxu0 %v1282
        %3356 = vmatprep.subr.mxu0 %v1287
        %3357 = vmatpush1.msra.mxu0 %v1286
        %3358 = vmatprep.subr.mxu0 %v1291
        %3359 = vmatpush1.msra.mxu0 %v1290
        %3360 = vmatprep.subr.mxu0 %v1295
        %3361 = vmatpush1.msra.mxu0 %v1294
        %3362 = vmatprep.subr.mxu0 %v1299
        %3363 = vmatpush1.msra.mxu0 %v1298
        %3364 = vmatprep.subr.mxu0 %v1303
        %3365 = vmatpush1.msra.mxu0 %v1302
        %3366 = vmatprep.subr.mxu0 %v1307
        %3367 = vmatpush1.msra.mxu0 %v1306
        %3368 = vmatprep.subr.mxu0 %v1311
        %3369 = vmatpush1.msra.mxu0 %v1310
        %3370 = vmatprep.subr.mxu0 %v1315
        %3371 = vmatpush1.msra.mxu0 %v1314
        %3372 = vmatprep.subr.mxu0 %v1319
        %3373 = vmatpush1.msra.mxu0 %v1318
        %3374 = vmatprep.subr.mxu0 %v1323
        %3375 = vmatpush1.msra.mxu0 %v1322
        %3376 = vmatprep.subr.mxu0 %v1327
        %3377 = vmatpush1.msra.mxu0 %v1326
        %3378 = vmatprep.mubr.f32.mxu0 %v3251
        %3379 = vmatmul.mubr.f32.gmra.mrb[0].mxu0 %v3250
        %v3380 = vpop.f32.mrb[0].mxu0
        %v3381 = vadd.f32 0.0, %v3380
        %v3382 = vpop.f32.mrb[0].mxu0
        %v3383 = vadd.f32 0.0, %v3382
        %3384 = vmatprep.mubr.f32.mxu0 %v3283
        %3385 = vmatmul.mubr.f32.gmra.mrb[0].mxu0 %v3282
        %v3386 = vpop.f32.mrb[0].mxu0
        %v3387 = vadd.f32 0.0, %v3386
        %v3388 = vpop.f32.mrb[0].mxu0
        %v3389 = vadd.f32 0.0, %v3388
        %3390 = vdwg.mxu0
        %3391 = vmatprep.subr.mxu0 %v1331
        %3392 = vmatpush1.msra.mxu0 %v1330
        %3393 = vmatprep.subr.mxu0 %v1335
        %3394 = vmatpush1.msra.mxu0 %v1334
        %3395 = vmatprep.subr.mxu0 %v1339
        %3396 = vmatpush1.msra.mxu0 %v1338
        %3397 = vmatprep.subr.mxu0 %v1343
        %3398 = vmatpush1.msra.mxu0 %v1342
        %3399 = vmatprep.subr.mxu0 %v1347
        %3400 = vmatpush1.msra.mxu0 %v1346
        %3401 = vmatprep.subr.mxu0 %v1351
        %3402 = vmatpush1.msra.mxu0 %v1350
        %3403 = vmatprep.subr.mxu0 %v1355
        %3404 = vmatpush1.msra.mxu0 %v1354
        %3405 = vmatprep.subr.mxu0 %v1359
        %3406 = vmatpush1.msra.mxu0 %v1358
        %3407 = vmatprep.subr.mxu0 %v1363
        %3408 = vmatpush1.msra.mxu0 %v1362
        %3409 = vmatprep.subr.mxu0 %v1367
        %3410 = vmatpush1.msra.mxu0 %v1366
        %3411 = vmatprep.subr.mxu0 %v1371
        %3412 = vmatpush1.msra.mxu0 %v1370
        %3413 = vmatprep.subr.mxu0 %v1375
        %3414 = vmatpush1.msra.mxu0 %v1374
        %3415 = vmatprep.subr.mxu0 %v1379
        %3416 = vmatpush1.msra.mxu0 %v1378
        %3417 = vmatprep.subr.mxu0 %v1383
        %3418 = vmatpush1.msra.mxu0 %v1382
        %3419 = vmatprep.subr.mxu0 %v1387
        %3420 = vmatpush1.msra.mxu0 %v1386
        %3421 = vmatprep.subr.mxu0 %v1391
        %3422 = vmatpush1.msra.mxu0 %v1390
        %3423 = vmatprep.subr.mxu0 %v1395
        %3424 = vmatpush1.msra.mxu0 %v1394
        %3425 = vmatprep.subr.mxu0 %v1399
        %3426 = vmatpush1.msra.mxu0 %v1398
        %3427 = vmatprep.subr.mxu0 %v1403
        %3428 = vmatpush1.msra.mxu0 %v1402
        %3429 = vmatprep.subr.mxu0 %v1407
        %3430 = vmatpush1.msra.mxu0 %v1406
        %3431 = vmatprep.subr.mxu0 %v1411
        %3432 = vmatpush1.msra.mxu0 %v1410
        %3433 = vmatprep.subr.mxu0 %v1415
        %3434 = vmatpush1.msra.mxu0 %v1414
        %3435 = vmatprep.subr.mxu0 %v1419
        %3436 = vmatpush1.msra.mxu0 %v1418
        %3437 = vmatprep.subr.mxu0 %v1423
        %3438 = vmatpush1.msra.mxu0 %v1422
        %3439 = vmatprep.subr.mxu0 %v1427
        %3440 = vmatpush1.msra.mxu0 %v1426
        %3441 = vmatprep.subr.mxu0 %v1431
        %3442 = vmatpush1.msra.mxu0 %v1430
        %3443 = vmatprep.subr.mxu0 %v1435
        %3444 = vmatpush1.msra.mxu0 %v1434
        %3445 = vmatprep.subr.mxu0 %v1439
        %3446 = vmatpush1.msra.mxu0 %v1438
        %3447 = vmatprep.subr.mxu0 %v1443
        %3448 = vmatpush1.msra.mxu0 %v1442
        %3449 = vmatprep.subr.mxu0 %v1447
        %3450 = vmatpush1.msra.mxu0 %v1446
        %3451 = vmatprep.subr.mxu0 %v1451
        %3452 = vmatpush1.msra.mxu0 %v1450
        %3453 = vmatprep.subr.mxu0 %v1455
        %3454 = vmatpush1.msra.mxu0 %v1454
        %3455 = vmatprep.mubr.f32.mxu0 %v3253
        %3456 = vmatmul.mubr.f32.gmra.mrb[0].mxu0 %v3252
        %v3457 = vpop.f32.mrb[0].mxu0
        %v3458 = vadd.f32 %v3381, %v3457
        %v3459 = vpop.f32.mrb[0].mxu0
        %v3460 = vadd.f32 %v3383, %v3459
        %3461 = vmatprep.mubr.f32.mxu0 %v3285
        %3462 = vmatmul.mubr.f32.gmra.mrb[0].mxu0 %v3284
        %v3463 = vpop.f32.mrb[0].mxu0
        %v3464 = vadd.f32 %v3387, %v3463
        %v3465 = vpop.f32.mrb[0].mxu0
        %v3466 = vadd.f32 %v3389, %v3465
        %3467 = vdwg.mxu0
        %3468 = vmatprep.subr.mxu0 %v1459
        %3469 = vmatpush1.msra.mxu0 %v1458
        %3470 = vmatprep.subr.mxu0 %v1463
        %3471 = vmatpush1.msra.mxu0 %v1462
        %3472 = vmatprep.subr.mxu0 %v1467
        %3473 = vmatpush1.msra.mxu0 %v1466
        %3474 = vmatprep.subr.mxu0 %v1471
        %3475 = vmatpush1.msra.mxu0 %v1470
        %3476 = vmatprep.subr.mxu0 %v1475
        %3477 = vmatpush1.msra.mxu0 %v1474
        %3478 = vmatprep.subr.mxu0 %v1479
        %3479 = vmatpush1.msra.mxu0 %v1478
        %3480 = vmatprep.subr.mxu0 %v1483
        %3481 = vmatpush1.msra.mxu0 %v1482
        %3482 = vmatprep.subr.mxu0 %v1487
        %3483 = vmatpush1.msra.mxu0 %v1486
        %3484 = vmatprep.subr.mxu0 %v1491
        %3485 = vmatpush1.msra.mxu0 %v1490
        %3486 = vmatprep.subr.mxu0 %v1495
        %3487 = vmatpush1.msra.mxu0 %v1494
        %3488 = vmatprep.subr.mxu0 %v1499
        %3489 = vmatpush1.msra.mxu0 %v1498
        %3490 = vmatprep.subr.mxu0 %v1503
        %3491 = vmatpush1.msra.mxu0 %v1502
        %3492 = vmatprep.subr.mxu0 %v1507
        %3493 = vmatpush1.msra.mxu0 %v1506
        %3494 = vmatprep.subr.mxu0 %v1511
        %3495 = vmatpush1.msra.mxu0 %v1510
        %3496 = vmatprep.subr.mxu0 %v1515
        %3497 = vmatpush1.msra.mxu0 %v1514
        %3498 = vmatprep.subr.mxu0 %v1519
        %3499 = vmatpush1.msra.mxu0 %v1518
        %3500 = vmatprep.subr.mxu0 %v1523
        %3501 = vmatpush1.msra.mxu0 %v1522
        %3502 = vmatprep.subr.mxu0 %v1527
        %3503 = vmatpush1.msra.mxu0 %v1526
        %3504 = vmatprep.subr.mxu0 %v1531
        %3505 = vmatpush1.msra.mxu0 %v1530
        %3506 = vmatprep.subr.mxu0 %v1535
        %3507 = vmatpush1.msra.mxu0 %v1534
        %3508 = vmatprep.subr.mxu0 %v1539
        %3509 = vmatpush1.msra.mxu0 %v1538
        %3510 = vmatprep.subr.mxu0 %v1543
        %3511 = vmatpush1.msra.mxu0 %v1542
        %3512 = vmatprep.subr.mxu0 %v1547
        %3513 = vmatpush1.msra.mxu0 %v1546
        %3514 = vmatprep.subr.mxu0 %v1551
        %3515 = vmatpush1.msra.mxu0 %v1550
        %3516 = vmatprep.subr.mxu0 %v1555
        %3517 = vmatpush1.msra.mxu0 %v1554
        %3518 = vmatprep.subr.mxu0 %v1559
        %3519 = vmatpush1.msra.mxu0 %v1558
        %3520 = vmatprep.subr.mxu0 %v1563
        %3521 = vmatpush1.msra.mxu0 %v1562
        %3522 = vmatprep.subr.mxu0 %v1567
        %3523 = vmatpush1.msra.mxu0 %v1566
        %3524 = vmatprep.subr.mxu0 %v1571
        %3525 = vmatpush1.msra.mxu0 %v1570
        %3526 = vmatprep.subr.mxu0 %v1575
        %3527 = vmatpush1.msra.mxu0 %v1574
        %3528 = vmatprep.subr.mxu0 %v1579
        %3529 = vmatpush1.msra.mxu0 %v1578
        %3530 = vmatprep.subr.mxu0 %v1583
        %3531 = vmatpush1.msra.mxu0 %v1582
        %3532 = vmatprep.mubr.f32.mxu0 %v3255
        %3533 = vmatmul.mubr.f32.gmra.mrb[0].mxu0 %v3254
        %v3534 = vpop.f32.mrb[0].mxu0
        %v3535 = vadd.f32 %v3458, %v3534
        %v3536 = vpop.f32.mrb[0].mxu0
        %v3537 = vadd.f32 %v3460, %v3536
        %3538 = vmatprep.mubr.f32.mxu0 %v3287
        %3539 = vmatmul.mubr.f32.gmra.mrb[0].mxu0 %v3286
        %v3540 = vpop.f32.mrb[0].mxu0
        %v3541 = vadd.f32 %v3464, %v3540
        %v3542 = vpop.f32.mrb[0].mxu0
        %v3543 = vadd.f32 %v3466, %v3542
        %3544 = vdwg.mxu0
        %3545 = vmatprep.subr.mxu0 %v1587
        %3546 = vmatpush1.msra.mxu0 %v1586
        %3547 = vmatprep.subr.mxu0 %v1591
        %3548 = vmatpush1.msra.mxu0 %v1590
        %3549 = vmatprep.subr.mxu0 %v1595
        %3550 = vmatpush1.msra.mxu0 %v1594
        %3551 = vmatprep.subr.mxu0 %v1599
        %3552 = vmatpush1.msra.mxu0 %v1598
        %3553 = vmatprep.subr.mxu0 %v1603
        %3554 = vmatpush1.msra.mxu0 %v1602
        %3555 = vmatprep.subr.mxu0 %v1607
        %3556 = vmatpush1.msra.mxu0 %v1606
        %3557 = vmatprep.subr.mxu0 %v1611
        %3558 = vmatpush1.msra.mxu0 %v1610
        %3559 = vmatprep.subr.mxu0 %v1615
        %3560 = vmatpush1.msra.mxu0 %v1614
        %3561 = vmatprep.subr.mxu0 %v1619
        %3562 = vmatpush1.msra.mxu0 %v1618
        %3563 = vmatprep.subr.mxu0 %v1623
        %3564 = vmatpush1.msra.mxu0 %v1622
        %3565 = vmatprep.subr.mxu0 %v1627
        %3566 = vmatpush1.msra.mxu0 %v1626
        %3567 = vmatprep.subr.mxu0 %v1631
        %3568 = vmatpush1.msra.mxu0 %v1630
        %3569 = vmatprep.subr.mxu0 %v1635
        %3570 = vmatpush1.msra.mxu0 %v1634
        %3571 = vmatprep.subr.mxu0 %v1639
        %3572 = vmatpush1.msra.mxu0 %v1638
        %3573 = vmatprep.subr.mxu0 %v1643
        %3574 = vmatpush1.msra.mxu0 %v1642
        %3575 = vmatprep.subr.mxu0 %v1647
        %3576 = vmatpush1.msra.mxu0 %v1646
        %3577 = vmatprep.subr.mxu0 %v1651
        %3578 = vmatpush1.msra.mxu0 %v1650
        %3579 = vmatprep.subr.mxu0 %v1655
        %3580 = vmatpush1.msra.mxu0 %v1654
        %3581 = vmatprep.subr.mxu0 %v1659
        %3582 = vmatpush1.msra.mxu0 %v1658
        %3583 = vmatprep.subr.mxu0 %v1663
        %3584 = vmatpush1.msra.mxu0 %v1662
        %3585 = vmatprep.subr.mxu0 %v1667
        %3586 = vmatpush1.msra.mxu0 %v1666
        %3587 = vmatprep.subr.mxu0 %v1671
        %3588 = vmatpush1.msra.mxu0 %v1670
        %3589 = vmatprep.subr.mxu0 %v1675
        %3590 = vmatpush1.msra.mxu0 %v1674
        %3591 = vmatprep.subr.mxu0 %v1679
        %3592 = vmatpush1.msra.mxu0 %v1678
        %3593 = vmatprep.subr.mxu0 %v1683
        %3594 = vmatpush1.msra.mxu0 %v1682
        %3595 = vmatprep.subr.mxu0 %v1687
        %3596 = vmatpush1.msra.mxu0 %v1686
        %3597 = vmatprep.subr.mxu0 %v1691
        %3598 = vmatpush1.msra.mxu0 %v1690
        %3599 = vmatprep.subr.mxu0 %v1695
        %3600 = vmatpush1.msra.mxu0 %v1694
        %3601 = vmatprep.subr.mxu0 %v1699
        %3602 = vmatpush1.msra.mxu0 %v1698
        %3603 = vmatprep.subr.mxu0 %v1703
        %3604 = vmatpush1.msra.mxu0 %v1702
        %3605 = vmatprep.subr.mxu0 %v1707
        %3606 = vmatpush1.msra.mxu0 %v1706
        %3607 = vmatprep.subr.mxu0 %v1711
        %3608 = vmatpush1.msra.mxu0 %v1710
        %3609 = vmatprep.mubr.f32.mxu0 %v3257
        %3610 = vmatmul.mubr.f32.gmra.mrb[0].mxu0 %v3256
        %v3611 = vpop.f32.mrb[0].mxu0
        %v3612 = vadd.f32 %v3535, %v3611
        %v3613 = vpop.f32.mrb[0].mxu0
        %v3614 = vadd.f32 %v3537, %v3613
        %3615 = vmatprep.mubr.f32.mxu0 %v3289
        %3616 = vmatmul.mubr.f32.gmra.mrb[0].mxu0 %v3288
        %v3617 = vpop.f32.mrb[0].mxu0
        %v3618 = vadd.f32 %v3541, %v3617
        %v3619 = vpop.f32.mrb[0].mxu0
        %v3620 = vadd.f32 %v3543, %v3619
        %3621 = vdwg.mxu0
        %3622 = vmatprep.subr.mxu0 %v1715
        %3623 = vmatpush1.msra.mxu0 %v1714
        %3624 = vmatprep.subr.mxu0 %v1719
        %3625 = vmatpush1.msra.mxu0 %v1718
        %3626 = vmatprep.subr.mxu0 %v1723
        %3627 = vmatpush1.msra.mxu0 %v1722
        %3628 = vmatprep.subr.mxu0 %v1727
        %3629 = vmatpush1.msra.mxu0 %v1726
        %3630 = vmatprep.subr.mxu0 %v1731
        %3631 = vmatpush1.msra.mxu0 %v1730
        %3632 = vmatprep.subr.mxu0 %v1735
        %3633 = vmatpush1.msra.mxu0 %v1734
        %3634 = vmatprep.subr.mxu0 %v1739
        %3635 = vmatpush1.msra.mxu0 %v1738
        %3636 = vmatprep.subr.mxu0 %v1743
        %3637 = vmatpush1.msra.mxu0 %v1742
        %3638 = vmatprep.subr.mxu0 %v1747
        %3639 = vmatpush1.msra.mxu0 %v1746
        %3640 = vmatprep.subr.mxu0 %v1751
        %3641 = vmatpush1.msra.mxu0 %v1750
        %3642 = vmatprep.subr.mxu0 %v1755
        %3643 = vmatpush1.msra.mxu0 %v1754
        %3644 = vmatprep.subr.mxu0 %v1759
        %3645 = vmatpush1.msra.mxu0 %v1758
        %3646 = vmatprep.subr.mxu0 %v1763
        %3647 = vmatpush1.msra.mxu0 %v1762
        %3648 = vmatprep.subr.mxu0 %v1767
        %3649 = vmatpush1.msra.mxu0 %v1766
        %3650 = vmatprep.subr.mxu0 %v1771
        %3651 = vmatpush1.msra.mxu0 %v1770
        %3652 = vmatprep.subr.mxu0 %v1775
        %3653 = vmatpush1.msra.mxu0 %v1774
        %3654 = vmatprep.subr.mxu0 %v1779
        %3655 = vmatpush1.msra.mxu0 %v1778
        %3656 = vmatprep.subr.mxu0 %v1783
        %3657 = vmatpush1.msra.mxu0 %v1782
        %3658 = vmatprep.subr.mxu0 %v1787
        %3659 = vmatpush1.msra.mxu0 %v1786
        %3660 = vmatprep.subr.mxu0 %v1791
        %3661 = vmatpush1.msra.mxu0 %v1790
        %3662 = vmatprep.subr.mxu0 %v1795
        %3663 = vmatpush1.msra.mxu0 %v1794
        %3664 = vmatprep.subr.mxu0 %v1799
        %3665 = vmatpush1.msra.mxu0 %v1798
        %3666 = vmatprep.subr.mxu0 %v1803
        %3667 = vmatpush1.msra.mxu0 %v1802
        %3668 = vmatprep.subr.mxu0 %v1807
        %3669 = vmatpush1.msra.mxu0 %v1806
        %3670 = vmatprep.subr.mxu0 %v1811
        %3671 = vmatpush1.msra.mxu0 %v1810
        %3672 = vmatprep.subr.mxu0 %v1815
        %3673 = vmatpush1.msra.mxu0 %v1814
        %3674 = vmatprep.subr.mxu0 %v1819
        %3675 = vmatpush1.msra.mxu0 %v1818
        %3676 = vmatprep.subr.mxu0 %v1823
        %3677 = vmatpush1.msra.mxu0 %v1822
        %3678 = vmatprep.subr.mxu0 %v1827
        %3679 = vmatpush1.msra.mxu0 %v1826
        %3680 = vmatprep.subr.mxu0 %v1831
        %3681 = vmatpush1.msra.mxu0 %v1830
        %3682 = vmatprep.subr.mxu0 %v1835
        %3683 = vmatpush1.msra.mxu0 %v1834
        %3684 = vmatprep.subr.mxu0 %v1839
        %3685 = vmatpush1.msra.mxu0 %v1838
        %3686 = vmatprep.mubr.f32.mxu0 %v3259
        %3687 = vmatmul.mubr.f32.gmra.mrb[0].mxu0 %v3258
        %v3688 = vpop.f32.mrb[0].mxu0
        %v3689 = vadd.f32 %v3612, %v3688
        %v3690 = vpop.f32.mrb[0].mxu0
        %v3691 = vadd.f32 %v3614, %v3690
        %3692 = vmatprep.mubr.f32.mxu0 %v3291
        %3693 = vmatmul.mubr.f32.gmra.mrb[0].mxu0 %v3290
        %v3694 = vpop.f32.mrb[0].mxu0
        %v3695 = vadd.f32 %v3618, %v3694
        %v3696 = vpop.f32.mrb[0].mxu0
        %v3697 = vadd.f32 %v3620, %v3696
        %3698 = vdwg.mxu0
        %3699 = vmatprep.subr.mxu0 %v1843
        %3700 = vmatpush1.msra.mxu0 %v1842
        %3701 = vmatprep.subr.mxu0 %v1847
        %3702 = vmatpush1.msra.mxu0 %v1846
        %3703 = vmatprep.subr.mxu0 %v1851
        %3704 = vmatpush1.msra.mxu0 %v1850
        %3705 = vmatprep.subr.mxu0 %v1855
        %3706 = vmatpush1.msra.mxu0 %v1854
        %3707 = vmatprep.subr.mxu0 %v1859
        %3708 = vmatpush1.msra.mxu0 %v1858
        %3709 = vmatprep.subr.mxu0 %v1863
        %3710 = vmatpush1.msra.mxu0 %v1862
        %3711 = vmatprep.subr.mxu0 %v1867
        %3712 = vmatpush1.msra.mxu0 %v1866
        %3713 = vmatprep.subr.mxu0 %v1871
        %3714 = vmatpush1.msra.mxu0 %v1870
        %3715 = vmatprep.subr.mxu0 %v1875
        %3716 = vmatpush1.msra.mxu0 %v1874
        %3717 = vmatprep.subr.mxu0 %v1879
        %3718 = vmatpush1.msra.mxu0 %v1878
        %3719 = vmatprep.subr.mxu0 %v1883
        %3720 = vmatpush1.msra.mxu0 %v1882
        %3721 = vmatprep.subr.mxu0 %v1887
        %3722 = vmatpush1.msra.mxu0 %v1886
        %3723 = vmatprep.subr.mxu0 %v1891
        %3724 = vmatpush1.msra.mxu0 %v1890
        %3725 = vmatprep.subr.mxu0 %v1895
        %3726 = vmatpush1.msra.mxu0 %v1894
        %3727 = vmatprep.subr.mxu0 %v1899
        %3728 = vmatpush1.msra.mxu0 %v1898
        %3729 = vmatprep.subr.mxu0 %v1903
        %3730 = vmatpush1.msra.mxu0 %v1902
        %3731 = vmatprep.subr.mxu0 %v1907
        %3732 = vmatpush1.msra.mxu0 %v1906
        %3733 = vmatprep.subr.mxu0 %v1911
        %3734 = vmatpush1.msra.mxu0 %v1910
        %3735 = vmatprep.subr.mxu0 %v1915
        %3736 = vmatpush1.msra.mxu0 %v1914
        %3737 = vmatprep.subr.mxu0 %v1919
        %3738 = vmatpush1.msra.mxu0 %v1918
        %3739 = vmatprep.subr.mxu0 %v1923
        %3740 = vmatpush1.msra.mxu0 %v1922
        %3741 = vmatprep.subr.mxu0 %v1927
        %3742 = vmatpush1.msra.mxu0 %v1926
        %3743 = vmatprep.subr.mxu0 %v1931
        %3744 = vmatpush1.msra.mxu0 %v1930
        %3745 = vmatprep.subr.mxu0 %v1935
        %3746 = vmatpush1.msra.mxu0 %v1934
        %3747 = vmatprep.subr.mxu0 %v1939
        %3748 = vmatpush1.msra.mxu0 %v1938
        %3749 = vmatprep.subr.mxu0 %v1943
        %3750 = vmatpush1.msra.mxu0 %v1942
        %3751 = vmatprep.subr.mxu0 %v1947
        %3752 = vmatpush1.msra.mxu0 %v1946
        %3753 = vmatprep.subr.mxu0 %v1951
        %3754 = vmatpush1.msra.mxu0 %v1950
        %3755 = vmatprep.subr.mxu0 %v1955
        %3756 = vmatpush1.msra.mxu0 %v1954
        %3757 = vmatprep.subr.mxu0 %v1959
        %3758 = vmatpush1.msra.mxu0 %v1958
        %3759 = vmatprep.subr.mxu0 %v1963
        %3760 = vmatpush1.msra.mxu0 %v1962
        %3761 = vmatprep.subr.mxu0 %v1967
        %3762 = vmatpush1.msra.mxu0 %v1966
        %3763 = vmatprep.mubr.f32.mxu0 %v3261
        %3764 = vmatmul.mubr.f32.gmra.mrb[0].mxu0 %v3260
        %v3765 = vpop.f32.mrb[0].mxu0
        %v3766 = vadd.f32 %v3689, %v3765
        %v3767 = vpop.f32.mrb[0].mxu0
        %v3768 = vadd.f32 %v3691, %v3767
        %3769 = vmatprep.mubr.f32.mxu0 %v3293
        %3770 = vmatmul.mubr.f32.gmra.mrb[0].mxu0 %v3292
        %v3771 = vpop.f32.mrb[0].mxu0
        %v3772 = vadd.f32 %v3695, %v3771
        %v3773 = vpop.f32.mrb[0].mxu0
        %v3774 = vadd.f32 %v3697, %v3773
        %3775 = vdwg.mxu0
        %3776 = vmatprep.subr.mxu0 %v1971
        %3777 = vmatpush1.msra.mxu0 %v1970
        %3778 = vmatprep.subr.mxu0 %v1975
        %3779 = vmatpush1.msra.mxu0 %v1974
        %3780 = vmatprep.subr.mxu0 %v1979
        %3781 = vmatpush1.msra.mxu0 %v1978
        %3782 = vmatprep.subr.mxu0 %v1983
        %3783 = vmatpush1.msra.mxu0 %v1982
        %3784 = vmatprep.subr.mxu0 %v1987
        %3785 = vmatpush1.msra.mxu0 %v1986
        %3786 = vmatprep.subr.mxu0 %v1991
        %3787 = vmatpush1.msra.mxu0 %v1990
        %3788 = vmatprep.subr.mxu0 %v1995
        %3789 = vmatpush1.msra.mxu0 %v1994
        %3790 = vmatprep.subr.mxu0 %v1999
        %3791 = vmatpush1.msra.mxu0 %v1998
        %3792 = vmatprep.subr.mxu0 %v2003
        %3793 = vmatpush1.msra.mxu0 %v2002
        %3794 = vmatprep.subr.mxu0 %v2007
        %3795 = vmatpush1.msra.mxu0 %v2006
        %3796 = vmatprep.subr.mxu0 %v2011
        %3797 = vmatpush1.msra.mxu0 %v2010
        %3798 = vmatprep.subr.mxu0 %v2015
        %3799 = vmatpush1.msra.mxu0 %v2014
        %3800 = vmatprep.subr.mxu0 %v2019
        %3801 = vmatpush1.msra.mxu0 %v2018
        %3802 = vmatprep.subr.mxu0 %v2023
        %3803 = vmatpush1.msra.mxu0 %v2022
        %3804 = vmatprep.subr.mxu0 %v2027
        %3805 = vmatpush1.msra.mxu0 %v2026
        %3806 = vmatprep.subr.mxu0 %v2031
        %3807 = vmatpush1.msra.mxu0 %v2030
        %3808 = vmatprep.subr.mxu0 %v2035
        %3809 = vmatpush1.msra.mxu0 %v2034
        %3810 = vmatprep.subr.mxu0 %v2039
        %3811 = vmatpush1.msra.mxu0 %v2038
        %3812 = vmatprep.subr.mxu0 %v2043
        %3813 = vmatpush1.msra.mxu0 %v2042
        %3814 = vmatprep.subr.mxu0 %v2047
        %3815 = vmatpush1.msra.mxu0 %v2046
        %3816 = vmatprep.subr.mxu0 %v2051
        %3817 = vmatpush1.msra.mxu0 %v2050
        %3818 = vmatprep.subr.mxu0 %v2055
        %3819 = vmatpush1.msra.mxu0 %v2054
        %3820 = vmatprep.subr.mxu0 %v2059
        %3821 = vmatpush1.msra.mxu0 %v2058
        %3822 = vmatprep.subr.mxu0 %v2063
        %3823 = vmatpush1.msra.mxu0 %v2062
        %3824 = vmatprep.subr.mxu0 %v2067
        %3825 = vmatpush1.msra.mxu0 %v2066
        %3826 = vmatprep.subr.mxu0 %v2071
        %3827 = vmatpush1.msra.mxu0 %v2070
        %3828 = vmatprep.subr.mxu0 %v2075
        %3829 = vmatpush1.msra.mxu0 %v2074
        %3830 = vmatprep.subr.mxu0 %v2079
        %3831 = vmatpush1.msra.mxu0 %v2078
        %3832 = vmatprep.subr.mxu0 %v2083
        %3833 = vmatpush1.msra.mxu0 %v2082
        %3834 = vmatprep.subr.mxu0 %v2087
        %3835 = vmatpush1.msra.mxu0 %v2086
        %3836 = vmatprep.subr.mxu0 %v2091
        %3837 = vmatpush1.msra.mxu0 %v2090
        %3838 = vmatprep.subr.mxu0 %v2095
        %3839 = vmatpush1.msra.mxu0 %v2094
        %3840 = vmatprep.mubr.f32.mxu0 %v3263
        %3841 = vmatmul.mubr.f32.gmra.mrb[0].mxu0 %v3262
        %v3842 = vpop.f32.mrb[0].mxu0
        %v3843 = vadd.f32 %v3766, %v3842
        %v3844 = vpop.f32.mrb[0].mxu0
        %v3845 = vadd.f32 %v3768, %v3844
        %3846 = vmatprep.mubr.f32.mxu0 %v3295
        %3847 = vmatmul.mubr.f32.gmra.mrb[0].mxu0 %v3294
        %v3848 = vpop.f32.mrb[0].mxu0
        %v3849 = vadd.f32 %v3772, %v3848
        %v3850 = vpop.f32.mrb[0].mxu0
        %v3851 = vadd.f32 %v3774, %v3850
        %3852 = vdwg.mxu0
        %3853 = vmatprep.subr.mxu0 %v2099
        %3854 = vmatpush1.msra.mxu0 %v2098
        %3855 = vmatprep.subr.mxu0 %v2103
        %3856 = vmatpush1.msra.mxu0 %v2102
        %3857 = vmatprep.subr.mxu0 %v2107
        %3858 = vmatpush1.msra.mxu0 %v2106
        %3859 = vmatprep.subr.mxu0 %v2111
        %3860 = vmatpush1.msra.mxu0 %v2110
        %3861 = vmatprep.subr.mxu0 %v2115
        %3862 = vmatpush1.msra.mxu0 %v2114
        %3863 = vmatprep.subr.mxu0 %v2119
        %3864 = vmatpush1.msra.mxu0 %v2118
        %3865 = vmatprep.subr.mxu0 %v2123
        %3866 = vmatpush1.msra.mxu0 %v2122
        %3867 = vmatprep.subr.mxu0 %v2127
        %3868 = vmatpush1.msra.mxu0 %v2126
        %3869 = vmatprep.subr.mxu0 %v2131
        %3870 = vmatpush1.msra.mxu0 %v2130
        %3871 = vmatprep.subr.mxu0 %v2135
        %3872 = vmatpush1.msra.mxu0 %v2134
        %3873 = vmatprep.subr.mxu0 %v2139
        %3874 = vmatpush1.msra.mxu0 %v2138
        %3875 = vmatprep.subr.mxu0 %v2143
        %3876 = vmatpush1.msra.mxu0 %v2142
        %3877 = vmatprep.subr.mxu0 %v2147
        %3878 = vmatpush1.msra.mxu0 %v2146
        %3879 = vmatprep.subr.mxu0 %v2151
        %3880 = vmatpush1.msra.mxu0 %v2150
        %3881 = vmatprep.subr.mxu0 %v2155
        %3882 = vmatpush1.msra.mxu0 %v2154
        %3883 = vmatprep.subr.mxu0 %v2159
        %3884 = vmatpush1.msra.mxu0 %v2158
        %3885 = vmatprep.subr.mxu0 %v2163
        %3886 = vmatpush1.msra.mxu0 %v2162
        %3887 = vmatprep.subr.mxu0 %v2167
        %3888 = vmatpush1.msra.mxu0 %v2166
        %3889 = vmatprep.subr.mxu0 %v2171
        %3890 = vmatpush1.msra.mxu0 %v2170
        %3891 = vmatprep.subr.mxu0 %v2175
        %3892 = vmatpush1.msra.mxu0 %v2174
        %3893 = vmatprep.subr.mxu0 %v2179
        %3894 = vmatpush1.msra.mxu0 %v2178
        %3895 = vmatprep.subr.mxu0 %v2183
        %3896 = vmatpush1.msra.mxu0 %v2182
        %3897 = vmatprep.subr.mxu0 %v2187
        %3898 = vmatpush1.msra.mxu0 %v2186
        %3899 = vmatprep.subr.mxu0 %v2191
        %3900 = vmatpush1.msra.mxu0 %v2190
        %3901 = vmatprep.subr.mxu0 %v2195
        %3902 = vmatpush1.msra.mxu0 %v2194
        %3903 = vmatprep.subr.mxu0 %v2199
        %3904 = vmatpush1.msra.mxu0 %v2198
        %3905 = vmatprep.subr.mxu0 %v2203
        %3906 = vmatpush1.msra.mxu0 %v2202
        %3907 = vmatprep.subr.mxu0 %v2207
        %3908 = vmatpush1.msra.mxu0 %v2206
        %3909 = vmatprep.subr.mxu0 %v2211
        %3910 = vmatpush1.msra.mxu0 %v2210
        %3911 = vmatprep.subr.mxu0 %v2215
        %3912 = vmatpush1.msra.mxu0 %v2214
        %3913 = vmatprep.subr.mxu0 %v2219
        %3914 = vmatpush1.msra.mxu0 %v2218
        %3915 = vmatprep.subr.mxu0 %v2223
        %3916 = vmatpush1.msra.mxu0 %v2222
        %3917 = vmatprep.mubr.f32.mxu0 %v3265
        %3918 = vmatmul.mubr.f32.gmra.mrb[0].mxu0 %v3264
        %v3919 = vpop.f32.mrb[0].mxu0
        %v3920 = vadd.f32 %v3843, %v3919
        %v3921 = vpop.f32.mrb[0].mxu0
        %v3922 = vadd.f32 %v3845, %v3921
        %3923 = vmatprep.mubr.f32.mxu0 %v3297
        %3924 = vmatmul.mubr.f32.gmra.mrb[0].mxu0 %v3296
        %v3925 = vpop.f32.mrb[0].mxu0
        %v3926 = vadd.f32 %v3849, %v3925
        %v3927 = vpop.f32.mrb[0].mxu0
        %v3928 = vadd.f32 %v3851, %v3927
        %3929 = vdwg.mxu0
        %3930 = vmatprep.subr.mxu0 %v2227
        %3931 = vmatpush1.msra.mxu0 %v2226
        %3932 = vmatprep.subr.mxu0 %v2231
        %3933 = vmatpush1.msra.mxu0 %v2230
        %3934 = vmatprep.subr.mxu0 %v2235
        %3935 = vmatpush1.msra.mxu0 %v2234
        %3936 = vmatprep.subr.mxu0 %v2239
        %3937 = vmatpush1.msra.mxu0 %v2238
        %3938 = vmatprep.subr.mxu0 %v2243
        %3939 = vmatpush1.msra.mxu0 %v2242
        %3940 = vmatprep.subr.mxu0 %v2247
        %3941 = vmatpush1.msra.mxu0 %v2246
        %3942 = vmatprep.subr.mxu0 %v2251
        %3943 = vmatpush1.msra.mxu0 %v2250
        %3944 = vmatprep.subr.mxu0 %v2255
        %3945 = vmatpush1.msra.mxu0 %v2254
        %3946 = vmatprep.subr.mxu0 %v2259
        %3947 = vmatpush1.msra.mxu0 %v2258
        %3948 = vmatprep.subr.mxu0 %v2263
        %3949 = vmatpush1.msra.mxu0 %v2262
        %3950 = vmatprep.subr.mxu0 %v2267
        %3951 = vmatpush1.msra.mxu0 %v2266
        %3952 = vmatprep.subr.mxu0 %v2271
        %3953 = vmatpush1.msra.mxu0 %v2270
        %3954 = vmatprep.subr.mxu0 %v2275
        %3955 = vmatpush1.msra.mxu0 %v2274
        %3956 = vmatprep.subr.mxu0 %v2279
        %3957 = vmatpush1.msra.mxu0 %v2278
        %3958 = vmatprep.subr.mxu0 %v2283
        %3959 = vmatpush1.msra.mxu0 %v2282
        %3960 = vmatprep.subr.mxu0 %v2287
        %3961 = vmatpush1.msra.mxu0 %v2286
        %3962 = vmatprep.subr.mxu0 %v2291
        %3963 = vmatpush1.msra.mxu0 %v2290
        %3964 = vmatprep.subr.mxu0 %v2295
        %3965 = vmatpush1.msra.mxu0 %v2294
        %3966 = vmatprep.subr.mxu0 %v2299
        %3967 = vmatpush1.msra.mxu0 %v2298
        %3968 = vmatprep.subr.mxu0 %v2303
        %3969 = vmatpush1.msra.mxu0 %v2302
        %3970 = vmatprep.subr.mxu0 %v2307
        %3971 = vmatpush1.msra.mxu0 %v2306
        %3972 = vmatprep.subr.mxu0 %v2311
        %3973 = vmatpush1.msra.mxu0 %v2310
        %3974 = vmatprep.subr.mxu0 %v2315
        %3975 = vmatpush1.msra.mxu0 %v2314
        %3976 = vmatprep.subr.mxu0 %v2319
        %3977 = vmatpush1.msra.mxu0 %v2318
        %3978 = vmatprep.subr.mxu0 %v2323
        %3979 = vmatpush1.msra.mxu0 %v2322
        %3980 = vmatprep.subr.mxu0 %v2327
        %3981 = vmatpush1.msra.mxu0 %v2326
        %3982 = vmatprep.subr.mxu0 %v2331
        %3983 = vmatpush1.msra.mxu0 %v2330
        %3984 = vmatprep.subr.mxu0 %v2335
        %3985 = vmatpush1.msra.mxu0 %v2334
        %3986 = vmatprep.subr.mxu0 %v2339
        %3987 = vmatpush1.msra.mxu0 %v2338
        %3988 = vmatprep.subr.mxu0 %v2343
        %3989 = vmatpush1.msra.mxu0 %v2342
        %3990 = vmatprep.subr.mxu0 %v2347
        %3991 = vmatpush1.msra.mxu0 %v2346
        %3992 = vmatprep.subr.mxu0 %v2351
        %3993 = vmatpush1.msra.mxu0 %v2350
        %3994 = vmatprep.mubr.f32.mxu0 %v3267
        %3995 = vmatmul.mubr.f32.gmra.mrb[0].mxu0 %v3266
        %v3996 = vpop.f32.mrb[0].mxu0
        %v3997 = vadd.f32 %v3920, %v3996
        %v3998 = vpop.f32.mrb[0].mxu0
        %v3999 = vadd.f32 %v3922, %v3998
        %4000 = vmatprep.mubr.f32.mxu0 %v3299
        %4001 = vmatmul.mubr.f32.gmra.mrb[0].mxu0 %v3298
        %v4002 = vpop.f32.mrb[0].mxu0
        %v4003 = vadd.f32 %v3926, %v4002
        %v4004 = vpop.f32.mrb[0].mxu0
        %v4005 = vadd.f32 %v3928, %v4004
        %4006 = vdwg.mxu0
        %4007 = vmatprep.subr.mxu0 %v2355
        %4008 = vmatpush1.msra.mxu0 %v2354
        %4009 = vmatprep.subr.mxu0 %v2359
        %4010 = vmatpush1.msra.mxu0 %v2358
        %4011 = vmatprep.subr.mxu0 %v2363
        %4012 = vmatpush1.msra.mxu0 %v2362
        %4013 = vmatprep.subr.mxu0 %v2367
        %4014 = vmatpush1.msra.mxu0 %v2366
        %4015 = vmatprep.subr.mxu0 %v2371
        %4016 = vmatpush1.msra.mxu0 %v2370
        %4017 = vmatprep.subr.mxu0 %v2375
        %4018 = vmatpush1.msra.mxu0 %v2374
        %4019 = vmatprep.subr.mxu0 %v2379
        %4020 = vmatpush1.msra.mxu0 %v2378
        %4021 = vmatprep.subr.mxu0 %v2383
        %4022 = vmatpush1.msra.mxu0 %v2382
        %4023 = vmatprep.subr.mxu0 %v2387
        %4024 = vmatpush1.msra.mxu0 %v2386
        %4025 = vmatprep.subr.mxu0 %v2391
        %4026 = vmatpush1.msra.mxu0 %v2390
        %4027 = vmatprep.subr.mxu0 %v2395
        %4028 = vmatpush1.msra.mxu0 %v2394
        %4029 = vmatprep.subr.mxu0 %v2399
        %4030 = vmatpush1.msra.mxu0 %v2398
        %4031 = vmatprep.subr.mxu0 %v2403
        %4032 = vmatpush1.msra.mxu0 %v2402
        %4033 = vmatprep.subr.mxu0 %v2407
        %4034 = vmatpush1.msra.mxu0 %v2406
        %4035 = vmatprep.subr.mxu0 %v2411
        %4036 = vmatpush1.msra.mxu0 %v2410
        %4037 = vmatprep.subr.mxu0 %v2415
        %4038 = vmatpush1.msra.mxu0 %v2414
        %4039 = vmatprep.subr.mxu0 %v2419
        %4040 = vmatpush1.msra.mxu0 %v2418
        %4041 = vmatprep.subr.mxu0 %v2423
        %4042 = vmatpush1.msra.mxu0 %v2422
        %4043 = vmatprep.subr.mxu0 %v2427
        %4044 = vmatpush1.msra.mxu0 %v2426
        %4045 = vmatprep.subr.mxu0 %v2431
        %4046 = vmatpush1.msra.mxu0 %v2430
        %4047 = vmatprep.subr.mxu0 %v2435
        %4048 = vmatpush1.msra.mxu0 %v2434
        %4049 = vmatprep.subr.mxu0 %v2439
        %4050 = vmatpush1.msra.mxu0 %v2438
        %4051 = vmatprep.subr.mxu0 %v2443
        %4052 = vmatpush1.msra.mxu0 %v2442
        %4053 = vmatprep.subr.mxu0 %v2447
        %4054 = vmatpush1.msra.mxu0 %v2446
        %4055 = vmatprep.subr.mxu0 %v2451
        %4056 = vmatpush1.msra.mxu0 %v2450
        %4057 = vmatprep.subr.mxu0 %v2455
        %4058 = vmatpush1.msra.mxu0 %v2454
        %4059 = vmatprep.subr.mxu0 %v2459
        %4060 = vmatpush1.msra.mxu0 %v2458
        %4061 = vmatprep.subr.mxu0 %v2463
        %4062 = vmatpush1.msra.mxu0 %v2462
        %4063 = vmatprep.subr.mxu0 %v2467
        %4064 = vmatpush1.msra.mxu0 %v2466
        %4065 = vmatprep.subr.mxu0 %v2471
        %4066 = vmatpush1.msra.mxu0 %v2470
        %4067 = vmatprep.subr.mxu0 %v2475
        %4068 = vmatpush1.msra.mxu0 %v2474
        %4069 = vmatprep.subr.mxu0 %v2479
        %4070 = vmatpush1.msra.mxu0 %v2478
        %4071 = vmatprep.mubr.f32.mxu0 %v3269
        %4072 = vmatmul.mubr.f32.gmra.mrb[0].mxu0 %v3268
        %v4073 = vpop.f32.mrb[0].mxu0
        %v4074 = vadd.f32 %v3997, %v4073
        %v4075 = vpop.f32.mrb[0].mxu0
        %v4076 = vadd.f32 %v3999, %v4075
        %4077 = vmatprep.mubr.f32.mxu0 %v3301
        %4078 = vmatmul.mubr.f32.gmra.mrb[0].mxu0 %v3300
        %v4079 = vpop.f32.mrb[0].mxu0
        %v4080 = vadd.f32 %v4003, %v4079
        %v4081 = vpop.f32.mrb[0].mxu0
        %v4082 = vadd.f32 %v4005, %v4081
        %4083 = vdwg.mxu0
        %4084 = vmatprep.subr.mxu0 %v2483
        %4085 = vmatpush1.msra.mxu0 %v2482
        %4086 = vmatprep.subr.mxu0 %v2487
        %4087 = vmatpush1.msra.mxu0 %v2486
        %4088 = vmatprep.subr.mxu0 %v2491
        %4089 = vmatpush1.msra.mxu0 %v2490
        %4090 = vmatprep.subr.mxu0 %v2495
        %4091 = vmatpush1.msra.mxu0 %v2494
        %4092 = vmatprep.subr.mxu0 %v2499
        %4093 = vmatpush1.msra.mxu0 %v2498
        %4094 = vmatprep.subr.mxu0 %v2503
        %4095 = vmatpush1.msra.mxu0 %v2502
        %4096 = vmatprep.subr.mxu0 %v2507
        %4097 = vmatpush1.msra.mxu0 %v2506
        %4098 = vmatprep.subr.mxu0 %v2511
        %4099 = vmatpush1.msra.mxu0 %v2510
        %4100 = vmatprep.subr.mxu0 %v2515
        %4101 = vmatpush1.msra.mxu0 %v2514
        %4102 = vmatprep.subr.mxu0 %v2519
        %4103 = vmatpush1.msra.mxu0 %v2518
        %4104 = vmatprep.subr.mxu0 %v2523
        %4105 = vmatpush1.msra.mxu0 %v2522
        %4106 = vmatprep.subr.mxu0 %v2527
        %4107 = vmatpush1.msra.mxu0 %v2526
        %4108 = vmatprep.subr.mxu0 %v2531
        %4109 = vmatpush1.msra.mxu0 %v2530
        %4110 = vmatprep.subr.mxu0 %v2535
        %4111 = vmatpush1.msra.mxu0 %v2534
        %4112 = vmatprep.subr.mxu0 %v2539
        %4113 = vmatpush1.msra.mxu0 %v2538
        %4114 = vmatprep.subr.mxu0 %v2543
        %4115 = vmatpush1.msra.mxu0 %v2542
        %4116 = vmatprep.subr.mxu0 %v2547
        %4117 = vmatpush1.msra.mxu0 %v2546
        %4118 = vmatprep.subr.mxu0 %v2551
        %4119 = vmatpush1.msra.mxu0 %v2550
        %4120 = vmatprep.subr.mxu0 %v2555
        %4121 = vmatpush1.msra.mxu0 %v2554
        %4122 = vmatprep.subr.mxu0 %v2559
        %4123 = vmatpush1.msra.mxu0 %v2558
        %4124 = vmatprep.subr.mxu0 %v2563
        %4125 = vmatpush1.msra.mxu0 %v2562
        %4126 = vmatprep.subr.mxu0 %v2567
        %4127 = vmatpush1.msra.mxu0 %v2566
        %4128 = vmatprep.subr.mxu0 %v2571
        %4129 = vmatpush1.msra.mxu0 %v2570
        %4130 = vmatprep.subr.mxu0 %v2575
        %4131 = vmatpush1.msra.mxu0 %v2574
        %4132 = vmatprep.subr.mxu0 %v2579
        %4133 = vmatpush1.msra.mxu0 %v2578
        %4134 = vmatprep.subr.mxu0 %v2583
        %4135 = vmatpush1.msra.mxu0 %v2582
        %4136 = vmatprep.subr.mxu0 %v2587
        %4137 = vmatpush1.msra.mxu0 %v2586
        %4138 = vmatprep.subr.mxu0 %v2591
        %4139 = vmatpush1.msra.mxu0 %v2590
        %4140 = vmatprep.subr.mxu0 %v2595
        %4141 = vmatpush1.msra.mxu0 %v2594
        %4142 = vmatprep.subr.mxu0 %v2599
        %4143 = vmatpush1.msra.mxu0 %v2598
        %4144 = vmatprep.subr.mxu0 %v2603
        %4145 = vmatpush1.msra.mxu0 %v2602
        %4146 = vmatprep.subr.mxu0 %v2607
        %4147 = vmatpush1.msra.mxu0 %v2606
        %4148 = vmatprep.mubr.f32.mxu0 %v3271
        %4149 = vmatmul.mubr.f32.gmra.mrb[0].mxu0 %v3270
        %v4150 = vpop.f32.mrb[0].mxu0
        %v4151 = vadd.f32 %v4074, %v4150
        %v4152 = vpop.f32.mrb[0].mxu0
        %v4153 = vadd.f32 %v4076, %v4152
        %4154 = vmatprep.mubr.f32.mxu0 %v3303
        %4155 = vmatmul.mubr.f32.gmra.mrb[0].mxu0 %v3302
        %v4156 = vpop.f32.mrb[0].mxu0
        %v4157 = vadd.f32 %v4080, %v4156
        %v4158 = vpop.f32.mrb[0].mxu0
        %v4159 = vadd.f32 %v4082, %v4158
        %4160 = vdwg.mxu0
        %4161 = vmatprep.subr.mxu0 %v2611
        %4162 = vmatpush1.msra.mxu0 %v2610
        %4163 = vmatprep.subr.mxu0 %v2615
        %4164 = vmatpush1.msra.mxu0 %v2614
        %4165 = vmatprep.subr.mxu0 %v2619
        %4166 = vmatpush1.msra.mxu0 %v2618
        %4167 = vmatprep.subr.mxu0 %v2623
        %4168 = vmatpush1.msra.mxu0 %v2622
        %4169 = vmatprep.subr.mxu0 %v2627
        %4170 = vmatpush1.msra.mxu0 %v2626
        %4171 = vmatprep.subr.mxu0 %v2631
        %4172 = vmatpush1.msra.mxu0 %v2630
        %4173 = vmatprep.subr.mxu0 %v2635
        %4174 = vmatpush1.msra.mxu0 %v2634
        %4175 = vmatprep.subr.mxu0 %v2639
        %4176 = vmatpush1.msra.mxu0 %v2638
        %4177 = vmatprep.subr.mxu0 %v2643
        %4178 = vmatpush1.msra.mxu0 %v2642
        %4179 = vmatprep.subr.mxu0 %v2647
        %4180 = vmatpush1.msra.mxu0 %v2646
        %4181 = vmatprep.subr.mxu0 %v2651
        %4182 = vmatpush1.msra.mxu0 %v2650
        %4183 = vmatprep.subr.mxu0 %v2655
        %4184 = vmatpush1.msra.mxu0 %v2654
        %4185 = vmatprep.subr.mxu0 %v2659
        %4186 = vmatpush1.msra.mxu0 %v2658
        %4187 = vmatprep.subr.mxu0 %v2663
        %4188 = vmatpush1.msra.mxu0 %v2662
        %4189 = vmatprep.subr.mxu0 %v2667
        %4190 = vmatpush1.msra.mxu0 %v2666
        %4191 = vmatprep.subr.mxu0 %v2671
        %4192 = vmatpush1.msra.mxu0 %v2670
        %4193 = vmatprep.subr.mxu0 %v2675
        %4194 = vmatpush1.msra.mxu0 %v2674
        %4195 = vmatprep.subr.mxu0 %v2679
        %4196 = vmatpush1.msra.mxu0 %v2678
        %4197 = vmatprep.subr.mxu0 %v2683
        %4198 = vmatpush1.msra.mxu0 %v2682
        %4199 = vmatprep.subr.mxu0 %v2687
        %4200 = vmatpush1.msra.mxu0 %v2686
        %4201 = vmatprep.subr.mxu0 %v2691
        %4202 = vmatpush1.msra.mxu0 %v2690
        %4203 = vmatprep.subr.mxu0 %v2695
        %4204 = vmatpush1.msra.mxu0 %v2694
        %4205 = vmatprep.subr.mxu0 %v2699
        %4206 = vmatpush1.msra.mxu0 %v2698
        %4207 = vmatprep.subr.mxu0 %v2703
        %4208 = vmatpush1.msra.mxu0 %v2702
        %4209 = vmatprep.subr.mxu0 %v2707
        %4210 = vmatpush1.msra.mxu0 %v2706
        %4211 = vmatprep.subr.mxu0 %v2711
        %4212 = vmatpush1.msra.mxu0 %v2710
        %4213 = vmatprep.subr.mxu0 %v2715
        %4214 = vmatpush1.msra.mxu0 %v2714
        %4215 = vmatprep.subr.mxu0 %v2719
        %4216 = vmatpush1.msra.mxu0 %v2718
        %4217 = vmatprep.subr.mxu0 %v2723
        %4218 = vmatpush1.msra.mxu0 %v2722
        %4219 = vmatprep.subr.mxu0 %v2727
        %4220 = vmatpush1.msra.mxu0 %v2726
        %4221 = vmatprep.subr.mxu0 %v2731
        %4222 = vmatpush1.msra.mxu0 %v2730
        %4223 = vmatprep.subr.mxu0 %v2735
        %4224 = vmatpush1.msra.mxu0 %v2734
        %4225 = vmatprep.mubr.f32.mxu0 %v3273
        %4226 = vmatmul.mubr.f32.gmra.mrb[0].mxu0 %v3272
        %v4227 = vpop.f32.mrb[0].mxu0
        %v4228 = vadd.f32 %v4151, %v4227
        %v4229 = vpop.f32.mrb[0].mxu0
        %v4230 = vadd.f32 %v4153, %v4229
        %4231 = vmatprep.mubr.f32.mxu0 %v3305
        %4232 = vmatmul.mubr.f32.gmra.mrb[0].mxu0 %v3304
        %v4233 = vpop.f32.mrb[0].mxu0
        %v4234 = vadd.f32 %v4157, %v4233
        %v4235 = vpop.f32.mrb[0].mxu0
        %v4236 = vadd.f32 %v4159, %v4235
        %4237 = vdwg.mxu0
        %4238 = vmatprep.subr.mxu0 %v2739
        %4239 = vmatpush1.msra.mxu0 %v2738
        %4240 = vmatprep.subr.mxu0 %v2743
        %4241 = vmatpush1.msra.mxu0 %v2742
        %4242 = vmatprep.subr.mxu0 %v2747
        %4243 = vmatpush1.msra.mxu0 %v2746
        %4244 = vmatprep.subr.mxu0 %v2751
        %4245 = vmatpush1.msra.mxu0 %v2750
        %4246 = vmatprep.subr.mxu0 %v2755
        %4247 = vmatpush1.msra.mxu0 %v2754
        %4248 = vmatprep.subr.mxu0 %v2759
        %4249 = vmatpush1.msra.mxu0 %v2758
        %4250 = vmatprep.subr.mxu0 %v2763
        %4251 = vmatpush1.msra.mxu0 %v2762
        %4252 = vmatprep.subr.mxu0 %v2767
        %4253 = vmatpush1.msra.mxu0 %v2766
        %4254 = vmatprep.subr.mxu0 %v2771
        %4255 = vmatpush1.msra.mxu0 %v2770
        %4256 = vmatprep.subr.mxu0 %v2775
        %4257 = vmatpush1.msra.mxu0 %v2774
        %4258 = vmatprep.subr.mxu0 %v2779
        %4259 = vmatpush1.msra.mxu0 %v2778
        %4260 = vmatprep.subr.mxu0 %v2783
        %4261 = vmatpush1.msra.mxu0 %v2782
        %4262 = vmatprep.subr.mxu0 %v2787
        %4263 = vmatpush1.msra.mxu0 %v2786
        %4264 = vmatprep.subr.mxu0 %v2791
        %4265 = vmatpush1.msra.mxu0 %v2790
        %4266 = vmatprep.subr.mxu0 %v2795
        %4267 = vmatpush1.msra.mxu0 %v2794
        %4268 = vmatprep.subr.mxu0 %v2799
        %4269 = vmatpush1.msra.mxu0 %v2798
        %4270 = vmatprep.subr.mxu0 %v2803
        %4271 = vmatpush1.msra.mxu0 %v2802
        %4272 = vmatprep.subr.mxu0 %v2807
        %4273 = vmatpush1.msra.mxu0 %v2806
        %4274 = vmatprep.subr.mxu0 %v2811
        %4275 = vmatpush1.msra.mxu0 %v2810
        %4276 = vmatprep.subr.mxu0 %v2815
        %4277 = vmatpush1.msra.mxu0 %v2814
        %4278 = vmatprep.subr.mxu0 %v2819
        %4279 = vmatpush1.msra.mxu0 %v2818
        %4280 = vmatprep.subr.mxu0 %v2823
        %4281 = vmatpush1.msra.mxu0 %v2822
        %4282 = vmatprep.subr.mxu0 %v2827
        %4283 = vmatpush1.msra.mxu0 %v2826
        %4284 = vmatprep.subr.mxu0 %v2831
        %4285 = vmatpush1.msra.mxu0 %v2830
        %4286 = vmatprep.subr.mxu0 %v2835
        %4287 = vmatpush1.msra.mxu0 %v2834
        %4288 = vmatprep.subr.mxu0 %v2839
        %4289 = vmatpush1.msra.mxu0 %v2838
        %4290 = vmatprep.subr.mxu0 %v2843
        %4291 = vmatpush1.msra.mxu0 %v2842
        %4292 = vmatprep.subr.mxu0 %v2847
        %4293 = vmatpush1.msra.mxu0 %v2846
        %4294 = vmatprep.subr.mxu0 %v2851
        %4295 = vmatpush1.msra.mxu0 %v2850
        %4296 = vmatprep.subr.mxu0 %v2855
        %4297 = vmatpush1.msra.mxu0 %v2854
        %4298 = vmatprep.subr.mxu0 %v2859
        %4299 = vmatpush1.msra.mxu0 %v2858
        %4300 = vmatprep.subr.mxu0 %v2863
        %4301 = vmatpush1.msra.mxu0 %v2862
        %4302 = vmatprep.mubr.f32.mxu0 %v3275
        %4303 = vmatmul.mubr.f32.gmra.mrb[0].mxu0 %v3274
        %v4304 = vpop.f32.mrb[0].mxu0
        %v4305 = vadd.f32 %v4228, %v4304
        %v4306 = vpop.f32.mrb[0].mxu0
        %v4307 = vadd.f32 %v4230, %v4306
        %4308 = vmatprep.mubr.f32.mxu0 %v3307
        %4309 = vmatmul.mubr.f32.gmra.mrb[0].mxu0 %v3306
        %v4310 = vpop.f32.mrb[0].mxu0
        %v4311 = vadd.f32 %v4234, %v4310
        %v4312 = vpop.f32.mrb[0].mxu0
        %v4313 = vadd.f32 %v4236, %v4312
        %4314 = vdwg.mxu0
        %4315 = vmatprep.subr.mxu0 %v2867
        %4316 = vmatpush1.msra.mxu0 %v2866
        %4317 = vmatprep.subr.mxu0 %v2871
        %4318 = vmatpush1.msra.mxu0 %v2870
        %4319 = vmatprep.subr.mxu0 %v2875
        %4320 = vmatpush1.msra.mxu0 %v2874
        %4321 = vmatprep.subr.mxu0 %v2879
        %4322 = vmatpush1.msra.mxu0 %v2878
        %4323 = vmatprep.subr.mxu0 %v2883
        %4324 = vmatpush1.msra.mxu0 %v2882
        %4325 = vmatprep.subr.mxu0 %v2887
        %4326 = vmatpush1.msra.mxu0 %v2886
        %4327 = vmatprep.subr.mxu0 %v2891
        %4328 = vmatpush1.msra.mxu0 %v2890
        %4329 = vmatprep.subr.mxu0 %v2895
        %4330 = vmatpush1.msra.mxu0 %v2894
        %4331 = vmatprep.subr.mxu0 %v2899
        %4332 = vmatpush1.msra.mxu0 %v2898
        %4333 = vmatprep.subr.mxu0 %v2903
        %4334 = vmatpush1.msra.mxu0 %v2902
        %4335 = vmatprep.subr.mxu0 %v2907
        %4336 = vmatpush1.msra.mxu0 %v2906
        %4337 = vmatprep.subr.mxu0 %v2911
        %4338 = vmatpush1.msra.mxu0 %v2910
        %4339 = vmatprep.subr.mxu0 %v2915
        %4340 = vmatpush1.msra.mxu0 %v2914
        %4341 = vmatprep.subr.mxu0 %v2919
        %4342 = vmatpush1.msra.mxu0 %v2918
        %4343 = vmatprep.subr.mxu0 %v2923
        %4344 = vmatpush1.msra.mxu0 %v2922
        %4345 = vmatprep.subr.mxu0 %v2927
        %4346 = vmatpush1.msra.mxu0 %v2926
        %4347 = vmatprep.subr.mxu0 %v2931
        %4348 = vmatpush1.msra.mxu0 %v2930
        %4349 = vmatprep.subr.mxu0 %v2935
        %4350 = vmatpush1.msra.mxu0 %v2934
        %4351 = vmatprep.subr.mxu0 %v2939
        %4352 = vmatpush1.msra.mxu0 %v2938
        %4353 = vmatprep.subr.mxu0 %v2943
        %4354 = vmatpush1.msra.mxu0 %v2942
        %4355 = vmatprep.subr.mxu0 %v2947
        %4356 = vmatpush1.msra.mxu0 %v2946
        %4357 = vmatprep.subr.mxu0 %v2951
        %4358 = vmatpush1.msra.mxu0 %v2950
        %4359 = vmatprep.subr.mxu0 %v2955
        %4360 = vmatpush1.msra.mxu0 %v2954
        %4361 = vmatprep.subr.mxu0 %v2959
        %4362 = vmatpush1.msra.mxu0 %v2958
        %4363 = vmatprep.subr.mxu0 %v2963
        %4364 = vmatpush1.msra.mxu0 %v2962
        %4365 = vmatprep.subr.mxu0 %v2967
        %4366 = vmatpush1.msra.mxu0 %v2966
        %4367 = vmatprep.subr.mxu0 %v2971
        %4368 = vmatpush1.msra.mxu0 %v2970
        %4369 = vmatprep.subr.mxu0 %v2975
        %4370 = vmatpush1.msra.mxu0 %v2974
        %4371 = vmatprep.subr.mxu0 %v2979
        %4372 = vmatpush1.msra.mxu0 %v2978
        %4373 = vmatprep.subr.mxu0 %v2983
        %4374 = vmatpush1.msra.mxu0 %v2982
        %4375 = vmatprep.subr.mxu0 %v2987
        %4376 = vmatpush1.msra.mxu0 %v2986
        %4377 = vmatprep.subr.mxu0 %v2991
        %4378 = vmatpush1.msra.mxu0 %v2990
        %4379 = vmatprep.mubr.f32.mxu0 %v3277
        %4380 = vmatmul.mubr.f32.gmra.mrb[0].mxu0 %v3276
        %v4381 = vpop.f32.mrb[0].mxu0
        %v4382 = vadd.f32 %v4305, %v4381
        %v4383 = vpop.f32.mrb[0].mxu0
        %v4384 = vadd.f32 %v4307, %v4383
        %4385 = vmatprep.mubr.f32.mxu0 %v3309
        %4386 = vmatmul.mubr.f32.gmra.mrb[0].mxu0 %v3308
        %v4387 = vpop.f32.mrb[0].mxu0
        %v4388 = vadd.f32 %v4311, %v4387
        %v4389 = vpop.f32.mrb[0].mxu0
        %v4390 = vadd.f32 %v4313, %v4389
        %4391 = vdwg.mxu0
        %4392 = vmatprep.subr.mxu0 %v2995
        %4393 = vmatpush1.msra.mxu0 %v2994
        %4394 = vmatprep.subr.mxu0 %v2999
        %4395 = vmatpush1.msra.mxu0 %v2998
        %4396 = vmatprep.subr.mxu0 %v3003
        %4397 = vmatpush1.msra.mxu0 %v3002
        %4398 = vmatprep.subr.mxu0 %v3007
        %4399 = vmatpush1.msra.mxu0 %v3006
        %4400 = vmatprep.subr.mxu0 %v3011
        %4401 = vmatpush1.msra.mxu0 %v3010
        %4402 = vmatprep.subr.mxu0 %v3015
        %4403 = vmatpush1.msra.mxu0 %v3014
        %4404 = vmatprep.subr.mxu0 %v3019
        %4405 = vmatpush1.msra.mxu0 %v3018
        %4406 = vmatprep.subr.mxu0 %v3023
        %4407 = vmatpush1.msra.mxu0 %v3022
        %4408 = vmatprep.subr.mxu0 %v3027
        %4409 = vmatpush1.msra.mxu0 %v3026
        %4410 = vmatprep.subr.mxu0 %v3031
        %4411 = vmatpush1.msra.mxu0 %v3030
        %4412 = vmatprep.subr.mxu0 %v3035
        %4413 = vmatpush1.msra.mxu0 %v3034
        %4414 = vmatprep.subr.mxu0 %v3039
        %4415 = vmatpush1.msra.mxu0 %v3038
        %4416 = vmatprep.subr.mxu0 %v3043
        %4417 = vmatpush1.msra.mxu0 %v3042
        %4418 = vmatprep.subr.mxu0 %v3047
        %4419 = vmatpush1.msra.mxu0 %v3046
        %4420 = vmatprep.subr.mxu0 %v3051
        %4421 = vmatpush1.msra.mxu0 %v3050
        %4422 = vmatprep.subr.mxu0 %v3055
        %4423 = vmatpush1.msra.mxu0 %v3054
        %4424 = vmatprep.subr.mxu0 %v3059
        %4425 = vmatpush1.msra.mxu0 %v3058
        %4426 = vmatprep.subr.mxu0 %v3063
        %4427 = vmatpush1.msra.mxu0 %v3062
        %4428 = vmatprep.subr.mxu0 %v3067
        %4429 = vmatpush1.msra.mxu0 %v3066
        %4430 = vmatprep.subr.mxu0 %v3071
        %4431 = vmatpush1.msra.mxu0 %v3070
        %4432 = vmatprep.subr.mxu0 %v3075
        %4433 = vmatpush1.msra.mxu0 %v3074
        %4434 = vmatprep.subr.mxu0 %v3079
        %4435 = vmatpush1.msra.mxu0 %v3078
        %4436 = vmatprep.subr.mxu0 %v3083
        %4437 = vmatpush1.msra.mxu0 %v3082
        %4438 = vmatprep.subr.mxu0 %v3087
        %4439 = vmatpush1.msra.mxu0 %v3086
        %4440 = vmatprep.subr.mxu0 %v3091
        %4441 = vmatpush1.msra.mxu0 %v3090
        %4442 = vmatprep.subr.mxu0 %v3095
        %4443 = vmatpush1.msra.mxu0 %v3094
        %4444 = vmatprep.subr.mxu0 %v3099
        %4445 = vmatpush1.msra.mxu0 %v3098
        %4446 = vmatprep.subr.mxu0 %v3103
        %4447 = vmatpush1.msra.mxu0 %v3102
        %4448 = vmatprep.subr.mxu0 %v3107
        %4449 = vmatpush1.msra.mxu0 %v3106
        %4450 = vmatprep.subr.mxu0 %v3111
        %4451 = vmatpush1.msra.mxu0 %v3110
        %4452 = vmatprep.subr.mxu0 %v3115
        %4453 = vmatpush1.msra.mxu0 %v3114
        %4454 = vmatprep.subr.mxu0 %v3119
        %4455 = vmatpush1.msra.mxu0 %v3118
        %4456 = vmatprep.mubr.f32.mxu0 %v3279
        %4457 = vmatmul.mubr.f32.gmra.mrb[0].mxu0 %v3278
        %v4458 = vpop.f32.mrb[0].mxu0
        %v4459 = vadd.f32 %v4382, %v4458
        %v4460 = vpop.f32.mrb[0].mxu0
        %v4461 = vadd.f32 %v4384, %v4460
        %4462 = vmatprep.mubr.f32.mxu0 %v3311
        %4463 = vmatmul.mubr.f32.gmra.mrb[0].mxu0 %v3310
        %v4464 = vpop.f32.mrb[0].mxu0
        %v4465 = vadd.f32 %v4388, %v4464
        %v4466 = vpop.f32.mrb[0].mxu0
        %v4467 = vadd.f32 %v4390, %v4466
        %4468 = vdwg.mxu0
        %4469 = vmatprep.subr.mxu0 %v3123
        %4470 = vmatpush1.msra.mxu0 %v3122
        %4471 = vmatprep.subr.mxu0 %v3127
        %4472 = vmatpush1.msra.mxu0 %v3126
        %4473 = vmatprep.subr.mxu0 %v3131
        %4474 = vmatpush1.msra.mxu0 %v3130
        %4475 = vmatprep.subr.mxu0 %v3135
        %4476 = vmatpush1.msra.mxu0 %v3134
        %4477 = vmatprep.subr.mxu0 %v3139
        %4478 = vmatpush1.msra.mxu0 %v3138
        %4479 = vmatprep.subr.mxu0 %v3143
        %4480 = vmatpush1.msra.mxu0 %v3142
        %4481 = vmatprep.subr.mxu0 %v3147
        %4482 = vmatpush1.msra.mxu0 %v3146
        %4483 = vmatprep.subr.mxu0 %v3151
        %4484 = vmatpush1.msra.mxu0 %v3150
        %4485 = vmatprep.subr.mxu0 %v3155
        %4486 = vmatpush1.msra.mxu0 %v3154
        %4487 = vmatprep.subr.mxu0 %v3159
        %4488 = vmatpush1.msra.mxu0 %v3158
        %4489 = vmatprep.subr.mxu0 %v3163
        %4490 = vmatpush1.msra.mxu0 %v3162
        %4491 = vmatprep.subr.mxu0 %v3167
        %4492 = vmatpush1.msra.mxu0 %v3166
        %4493 = vmatprep.subr.mxu0 %v3171
        %4494 = vmatpush1.msra.mxu0 %v3170
        %4495 = vmatprep.subr.mxu0 %v3175
        %4496 = vmatpush1.msra.mxu0 %v3174
        %4497 = vmatprep.subr.mxu0 %v3179
        %4498 = vmatpush1.msra.mxu0 %v3178
        %4499 = vmatprep.subr.mxu0 %v3183
        %4500 = vmatpush1.msra.mxu0 %v3182
        %4501 = vmatprep.subr.mxu0 %v3187
        %4502 = vmatpush1.msra.mxu0 %v3186
        %4503 = vmatprep.subr.mxu0 %v3191
        %4504 = vmatpush1.msra.mxu0 %v3190
        %4505 = vmatprep.subr.mxu0 %v3195
        %4506 = vmatpush1.msra.mxu0 %v3194
        %4507 = vmatprep.subr.mxu0 %v3199
        %4508 = vmatpush1.msra.mxu0 %v3198
        %4509 = vmatprep.subr.mxu0 %v3203
        %4510 = vmatpush1.msra.mxu0 %v3202
        %4511 = vmatprep.subr.mxu0 %v3207
        %4512 = vmatpush1.msra.mxu0 %v3206
        %4513 = vmatprep.subr.mxu0 %v3211
        %4514 = vmatpush1.msra.mxu0 %v3210
        %4515 = vmatprep.subr.mxu0 %v3215
        %4516 = vmatpush1.msra.mxu0 %v3214
        %4517 = vmatprep.subr.mxu0 %v3219
        %4518 = vmatpush1.msra.mxu0 %v3218
        %4519 = vmatprep.subr.mxu0 %v3223
        %4520 = vmatpush1.msra.mxu0 %v3222
        %4521 = vmatprep.subr.mxu0 %v3227
        %4522 = vmatpush1.msra.mxu0 %v3226
        %4523 = vmatprep.subr.mxu0 %v3231
        %4524 = vmatpush1.msra.mxu0 %v3230
        %4525 = vmatprep.subr.mxu0 %v3235
        %4526 = vmatpush1.msra.mxu0 %v3234
        %4527 = vmatprep.subr.mxu0 %v3239
        %4528 = vmatpush1.msra.mxu0 %v3238
        %4529 = vmatprep.subr.mxu0 %v3243
        %4530 = vmatpush1.msra.mxu0 %v3242
        %4531 = vmatprep.subr.mxu0 %v3247
        %4532 = vmatpush1.msra.mxu0 %v3246
        %4533 = vmatprep.mubr.f32.mxu0 %v3281
        %4534 = vmatmul.mubr.f32.gmra.mrb[0].mxu0 %v3280
        %v4535 = vpop.f32.mrb[0].mxu0
        %v4536 = vadd.f32 %v4459, %v4535
        %v4537 = vpop.f32.mrb[0].mxu0
        %v4538 = vadd.f32 %v4461, %v4537
        %4539 = vmatprep.mubr.f32.mxu0 %v3313
        %4540 = vmatmul.mubr.f32.gmra.mrb[0].mxu0 %v3312
        %v4541 = vpop.f32.mrb[0].mxu0
        %v4542 = vadd.f32 %v4465, %v4541
        %v4543 = vpop.f32.mrb[0].mxu0
        %v4544 = vadd.f32 %v4467, %v4543
        %4545 = vdwg.mxu0
        %4546 = vmatprep.subr.mxu0 %v1205
        %4547 = vmatpush1.msra.mxu0 %v1204
        %4548 = vmatprep.subr.mxu0 %v1209
        %4549 = vmatpush1.msra.mxu0 %v1208
        %4550 = vmatprep.subr.mxu0 %v1213
        %4551 = vmatpush1.msra.mxu0 %v1212
        %4552 = vmatprep.subr.mxu0 %v1217
        %4553 = vmatpush1.msra.mxu0 %v1216
        %4554 = vmatprep.subr.mxu0 %v1221
        %4555 = vmatpush1.msra.mxu0 %v1220
        %4556 = vmatprep.subr.mxu0 %v1225
        %4557 = vmatpush1.msra.mxu0 %v1224
        %4558 = vmatprep.subr.mxu0 %v1229
        %4559 = vmatpush1.msra.mxu0 %v1228
        %4560 = vmatprep.subr.mxu0 %v1233
        %4561 = vmatpush1.msra.mxu0 %v1232
        %4562 = vmatprep.subr.mxu0 %v1237
        %4563 = vmatpush1.msra.mxu0 %v1236
        %4564 = vmatprep.subr.mxu0 %v1241
        %4565 = vmatpush1.msra.mxu0 %v1240
        %4566 = vmatprep.subr.mxu0 %v1245
        %4567 = vmatpush1.msra.mxu0 %v1244
        %4568 = vmatprep.subr.mxu0 %v1249
        %4569 = vmatpush1.msra.mxu0 %v1248
        %4570 = vmatprep.subr.mxu0 %v1253
        %4571 = vmatpush1.msra.mxu0 %v1252
        %4572 = vmatprep.subr.mxu0 %v1257
        %4573 = vmatpush1.msra.mxu0 %v1256
        %4574 = vmatprep.subr.mxu0 %v1261
        %4575 = vmatpush1.msra.mxu0 %v1260
        %4576 = vmatprep.subr.mxu0 %v1265
        %4577 = vmatpush1.msra.mxu0 %v1264
        %4578 = vmatprep.subr.mxu0 %v1269
        %4579 = vmatpush1.msra.mxu0 %v1268
        %4580 = vmatprep.subr.mxu0 %v1273
        %4581 = vmatpush1.msra.mxu0 %v1272
        %4582 = vmatprep.subr.mxu0 %v1277
        %4583 = vmatpush1.msra.mxu0 %v1276
        %4584 = vmatprep.subr.mxu0 %v1281
        %4585 = vmatpush1.msra.mxu0 %v1280
        %4586 = vmatprep.subr.mxu0 %v1285
        %4587 = vmatpush1.msra.mxu0 %v1284
        %4588 = vmatprep.subr.mxu0 %v1289
        %4589 = vmatpush1.msra.mxu0 %v1288
        %4590 = vmatprep.subr.mxu0 %v1293
        %4591 = vmatpush1.msra.mxu0 %v1292
        %4592 = vmatprep.subr.mxu0 %v1297
        %4593 = vmatpush1.msra.mxu0 %v1296
        %4594 = vmatprep.subr.mxu0 %v1301
        %4595 = vmatpush1.msra.mxu0 %v1300
        %4596 = vmatprep.subr.mxu0 %v1305
        %4597 = vmatpush1.msra.mxu0 %v1304
        %4598 = vmatprep.subr.mxu0 %v1309
        %4599 = vmatpush1.msra.mxu0 %v1308
        %4600 = vmatprep.subr.mxu0 %v1313
        %4601 = vmatpush1.msra.mxu0 %v1312
        %4602 = vmatprep.subr.mxu0 %v1317
        %4603 = vmatpush1.msra.mxu0 %v1316
        %4604 = vmatprep.subr.mxu0 %v1321
        %4605 = vmatpush1.msra.mxu0 %v1320
        %4606 = vmatprep.subr.mxu0 %v1325
        %4607 = vmatpush1.msra.mxu0 %v1324
        %4608 = vmatprep.subr.mxu0 %v1329
        %4609 = vmatpush1.msra.mxu0 %v1328
        %4610 = vmatprep.mubr.f32.mxu0 %v3251
        %4611 = vmatmul.mubr.f32.gmra.mrb[0].mxu0 %v3250
        %v4612 = vpop.f32.mrb[0].mxu0
        %v4613 = vadd.f32 0.0, %v4612
        %v4614 = vpop.f32.mrb[0].mxu0
        %v4615 = vadd.f32 0.0, %v4614
        %4616 = vmatprep.mubr.f32.mxu0 %v3283
        %4617 = vmatmul.mubr.f32.gmra.mrb[0].mxu0 %v3282
        %v4618 = vpop.f32.mrb[0].mxu0
        %v4619 = vadd.f32 0.0, %v4618
        %v4620 = vpop.f32.mrb[0].mxu0
        %v4621 = vadd.f32 0.0, %v4620
        %4622 = vdwg.mxu0
        %4623 = vmatprep.subr.mxu0 %v1333
        %4624 = vmatpush1.msra.mxu0 %v1332
        %4625 = vmatprep.subr.mxu0 %v1337
        %4626 = vmatpush1.msra.mxu0 %v1336
        %4627 = vmatprep.subr.mxu0 %v1341
        %4628 = vmatpush1.msra.mxu0 %v1340
        %4629 = vmatprep.subr.mxu0 %v1345
        %4630 = vmatpush1.msra.mxu0 %v1344
        %4631 = vmatprep.subr.mxu0 %v1349
        %4632 = vmatpush1.msra.mxu0 %v1348
        %4633 = vmatprep.subr.mxu0 %v1353
        %4634 = vmatpush1.msra.mxu0 %v1352
        %4635 = vmatprep.subr.mxu0 %v1357
        %4636 = vmatpush1.msra.mxu0 %v1356
        %4637 = vmatprep.subr.mxu0 %v1361
        %4638 = vmatpush1.msra.mxu0 %v1360
        %4639 = vmatprep.subr.mxu0 %v1365
        %4640 = vmatpush1.msra.mxu0 %v1364
        %4641 = vmatprep.subr.mxu0 %v1369
        %4642 = vmatpush1.msra.mxu0 %v1368
        %4643 = vmatprep.subr.mxu0 %v1373
        %4644 = vmatpush1.msra.mxu0 %v1372
        %4645 = vmatprep.subr.mxu0 %v1377
        %4646 = vmatpush1.msra.mxu0 %v1376
        %4647 = vmatprep.subr.mxu0 %v1381
        %4648 = vmatpush1.msra.mxu0 %v1380
        %4649 = vmatprep.subr.mxu0 %v1385
        %4650 = vmatpush1.msra.mxu0 %v1384
        %4651 = vmatprep.subr.mxu0 %v1389
        %4652 = vmatpush1.msra.mxu0 %v1388
        %4653 = vmatprep.subr.mxu0 %v1393
        %4654 = vmatpush1.msra.mxu0 %v1392
        %4655 = vmatprep.subr.mxu0 %v1397
        %4656 = vmatpush1.msra.mxu0 %v1396
        %4657 = vmatprep.subr.mxu0 %v1401
        %4658 = vmatpush1.msra.mxu0 %v1400
        %4659 = vmatprep.subr.mxu0 %v1405
        %4660 = vmatpush1.msra.mxu0 %v1404
        %4661 = vmatprep.subr.mxu0 %v1409
        %4662 = vmatpush1.msra.mxu0 %v1408
        %4663 = vmatprep.subr.mxu0 %v1413
        %4664 = vmatpush1.msra.mxu0 %v1412
        %4665 = vmatprep.subr.mxu0 %v1417
        %4666 = vmatpush1.msra.mxu0 %v1416
        %4667 = vmatprep.subr.mxu0 %v1421
        %4668 = vmatpush1.msra.mxu0 %v1420
        %4669 = vmatprep.subr.mxu0 %v1425
        %4670 = vmatpush1.msra.mxu0 %v1424
        %4671 = vmatprep.subr.mxu0 %v1429
        %4672 = vmatpush1.msra.mxu0 %v1428
        %4673 = vmatprep.subr.mxu0 %v1433
        %4674 = vmatpush1.msra.mxu0 %v1432
        %4675 = vmatprep.subr.mxu0 %v1437
        %4676 = vmatpush1.msra.mxu0 %v1436
        %4677 = vmatprep.subr.mxu0 %v1441
        %4678 = vmatpush1.msra.mxu0 %v1440
        %4679 = vmatprep.subr.mxu0 %v1445
        %4680 = vmatpush1.msra.mxu0 %v1444
        %4681 = vmatprep.subr.mxu0 %v1449
        %4682 = vmatpush1.msra.mxu0 %v1448
        %4683 = vmatprep.subr.mxu0 %v1453
        %4684 = vmatpush1.msra.mxu0 %v1452
        %4685 = vmatprep.subr.mxu0 %v1457
        %4686 = vmatpush1.msra.mxu0 %v1456
        %4687 = vmatprep.mubr.f32.mxu0 %v3253
        %4688 = vmatmul.mubr.f32.gmra.mrb[0].mxu0 %v3252
        %v4689 = vpop.f32.mrb[0].mxu0
        %v4690 = vadd.f32 %v4613, %v4689
        %v4691 = vpop.f32.mrb[0].mxu0
        %v4692 = vadd.f32 %v4615, %v4691
        %4693 = vmatprep.mubr.f32.mxu0 %v3285
        %4694 = vmatmul.mubr.f32.gmra.mrb[0].mxu0 %v3284
        %v4695 = vpop.f32.mrb[0].mxu0
        %v4696 = vadd.f32 %v4619, %v4695
        %v4697 = vpop.f32.mrb[0].mxu0
        %v4698 = vadd.f32 %v4621, %v4697
        %4699 = vdwg.mxu0
        %4700 = vmatprep.subr.mxu0 %v1461
        %4701 = vmatpush1.msra.mxu0 %v1460
        %4702 = vmatprep.subr.mxu0 %v1465
        %4703 = vmatpush1.msra.mxu0 %v1464
        %4704 = vmatprep.subr.mxu0 %v1469
        %4705 = vmatpush1.msra.mxu0 %v1468
        %4706 = vmatprep.subr.mxu0 %v1473
        %4707 = vmatpush1.msra.mxu0 %v1472
        %4708 = vmatprep.subr.mxu0 %v1477
        %4709 = vmatpush1.msra.mxu0 %v1476
        %4710 = vmatprep.subr.mxu0 %v1481
        %4711 = vmatpush1.msra.mxu0 %v1480
        %4712 = vmatprep.subr.mxu0 %v1485
        %4713 = vmatpush1.msra.mxu0 %v1484
        %4714 = vmatprep.subr.mxu0 %v1489
        %4715 = vmatpush1.msra.mxu0 %v1488
        %4716 = vmatprep.subr.mxu0 %v1493
        %4717 = vmatpush1.msra.mxu0 %v1492
        %4718 = vmatprep.subr.mxu0 %v1497
        %4719 = vmatpush1.msra.mxu0 %v1496
        %4720 = vmatprep.subr.mxu0 %v1501
        %4721 = vmatpush1.msra.mxu0 %v1500
        %4722 = vmatprep.subr.mxu0 %v1505
        %4723 = vmatpush1.msra.mxu0 %v1504
        %4724 = vmatprep.subr.mxu0 %v1509
        %4725 = vmatpush1.msra.mxu0 %v1508
        %4726 = vmatprep.subr.mxu0 %v1513
        %4727 = vmatpush1.msra.mxu0 %v1512
        %4728 = vmatprep.subr.mxu0 %v1517
        %4729 = vmatpush1.msra.mxu0 %v1516
        %4730 = vmatprep.subr.mxu0 %v1521
        %4731 = vmatpush1.msra.mxu0 %v1520
        %4732 = vmatprep.subr.mxu0 %v1525
        %4733 = vmatpush1.msra.mxu0 %v1524
        %4734 = vmatprep.subr.mxu0 %v1529
        %4735 = vmatpush1.msra.mxu0 %v1528
        %4736 = vmatprep.subr.mxu0 %v1533
        %4737 = vmatpush1.msra.mxu0 %v1532
        %4738 = vmatprep.subr.mxu0 %v1537
        %4739 = vmatpush1.msra.mxu0 %v1536
        %4740 = vmatprep.subr.mxu0 %v1541
        %4741 = vmatpush1.msra.mxu0 %v1540
        %4742 = vmatprep.subr.mxu0 %v1545
        %4743 = vmatpush1.msra.mxu0 %v1544
        %4744 = vmatprep.subr.mxu0 %v1549
        %4745 = vmatpush1.msra.mxu0 %v1548
        %4746 = vmatprep.subr.mxu0 %v1553
        %4747 = vmatpush1.msra.mxu0 %v1552
        %4748 = vmatprep.subr.mxu0 %v1557
        %4749 = vmatpush1.msra.mxu0 %v1556
        %4750 = vmatprep.subr.mxu0 %v1561
        %4751 = vmatpush1.msra.mxu0 %v1560
        %4752 = vmatprep.subr.mxu0 %v1565
        %4753 = vmatpush1.msra.mxu0 %v1564
        %4754 = vmatprep.subr.mxu0 %v1569
        %4755 = vmatpush1.msra.mxu0 %v1568
        %4756 = vmatprep.subr.mxu0 %v1573
        %4757 = vmatpush1.msra.mxu0 %v1572
        %4758 = vmatprep.subr.mxu0 %v1577
        %4759 = vmatpush1.msra.mxu0 %v1576
        %4760 = vmatprep.subr.mxu0 %v1581
        %4761 = vmatpush1.msra.mxu0 %v1580
        %4762 = vmatprep.subr.mxu0 %v1585
        %4763 = vmatpush1.msra.mxu0 %v1584
        %4764 = vmatprep.mubr.f32.mxu0 %v3255
        %4765 = vmatmul.mubr.f32.gmra.mrb[0].mxu0 %v3254
        %v4766 = vpop.f32.mrb[0].mxu0
        %v4767 = vadd.f32 %v4690, %v4766
        %v4768 = vpop.f32.mrb[0].mxu0
        %v4769 = vadd.f32 %v4692, %v4768
        %4770 = vmatprep.mubr.f32.mxu0 %v3287
        %4771 = vmatmul.mubr.f32.gmra.mrb[0].mxu0 %v3286
        %v4772 = vpop.f32.mrb[0].mxu0
        %v4773 = vadd.f32 %v4696, %v4772
        %v4774 = vpop.f32.mrb[0].mxu0
        %v4775 = vadd.f32 %v4698, %v4774
        %4776 = vdwg.mxu0
        %4777 = vmatprep.subr.mxu0 %v1589
        %4778 = vmatpush1.msra.mxu0 %v1588
        %4779 = vmatprep.subr.mxu0 %v1593
        %4780 = vmatpush1.msra.mxu0 %v1592
        %4781 = vmatprep.subr.mxu0 %v1597
        %4782 = vmatpush1.msra.mxu0 %v1596
        %4783 = vmatprep.subr.mxu0 %v1601
        %4784 = vmatpush1.msra.mxu0 %v1600
        %4785 = vmatprep.subr.mxu0 %v1605
        %4786 = vmatpush1.msra.mxu0 %v1604
        %4787 = vmatprep.subr.mxu0 %v1609
        %4788 = vmatpush1.msra.mxu0 %v1608
        %4789 = vmatprep.subr.mxu0 %v1613
        %4790 = vmatpush1.msra.mxu0 %v1612
        %4791 = vmatprep.subr.mxu0 %v1617
        %4792 = vmatpush1.msra.mxu0 %v1616
        %4793 = vmatprep.subr.mxu0 %v1621
        %4794 = vmatpush1.msra.mxu0 %v1620
        %4795 = vmatprep.subr.mxu0 %v1625
        %4796 = vmatpush1.msra.mxu0 %v1624
        %4797 = vmatprep.subr.mxu0 %v1629
        %4798 = vmatpush1.msra.mxu0 %v1628
        %4799 = vmatprep.subr.mxu0 %v1633
        %4800 = vmatpush1.msra.mxu0 %v1632
        %4801 = vmatprep.subr.mxu0 %v1637
        %4802 = vmatpush1.msra.mxu0 %v1636
        %4803 = vmatprep.subr.mxu0 %v1641
        %4804 = vmatpush1.msra.mxu0 %v1640
        %4805 = vmatprep.subr.mxu0 %v1645
        %4806 = vmatpush1.msra.mxu0 %v1644
        %4807 = vmatprep.subr.mxu0 %v1649
        %4808 = vmatpush1.msra.mxu0 %v1648
        %4809 = vmatprep.subr.mxu0 %v1653
        %4810 = vmatpush1.msra.mxu0 %v1652
        %4811 = vmatprep.subr.mxu0 %v1657
        %4812 = vmatpush1.msra.mxu0 %v1656
        %4813 = vmatprep.subr.mxu0 %v1661
        %4814 = vmatpush1.msra.mxu0 %v1660
        %4815 = vmatprep.subr.mxu0 %v1665
        %4816 = vmatpush1.msra.mxu0 %v1664
        %4817 = vmatprep.subr.mxu0 %v1669
        %4818 = vmatpush1.msra.mxu0 %v1668
        %4819 = vmatprep.subr.mxu0 %v1673
        %4820 = vmatpush1.msra.mxu0 %v1672
        %4821 = vmatprep.subr.mxu0 %v1677
        %4822 = vmatpush1.msra.mxu0 %v1676
        %4823 = vmatprep.subr.mxu0 %v1681
        %4824 = vmatpush1.msra.mxu0 %v1680
        %4825 = vmatprep.subr.mxu0 %v1685
        %4826 = vmatpush1.msra.mxu0 %v1684
        %4827 = vmatprep.subr.mxu0 %v1689
        %4828 = vmatpush1.msra.mxu0 %v1688
        %4829 = vmatprep.subr.mxu0 %v1693
        %4830 = vmatpush1.msra.mxu0 %v1692
        %4831 = vmatprep.subr.mxu0 %v1697
        %4832 = vmatpush1.msra.mxu0 %v1696
        %4833 = vmatprep.subr.mxu0 %v1701
        %4834 = vmatpush1.msra.mxu0 %v1700
        %4835 = vmatprep.subr.mxu0 %v1705
        %4836 = vmatpush1.msra.mxu0 %v1704
        %4837 = vmatprep.subr.mxu0 %v1709
        %4838 = vmatpush1.msra.mxu0 %v1708
        %4839 = vmatprep.subr.mxu0 %v1713
        %4840 = vmatpush1.msra.mxu0 %v1712
        %4841 = vmatprep.mubr.f32.mxu0 %v3257
        %4842 = vmatmul.mubr.f32.gmra.mrb[0].mxu0 %v3256
        %v4843 = vpop.f32.mrb[0].mxu0
        %v4844 = vadd.f32 %v4767, %v4843
        %v4845 = vpop.f32.mrb[0].mxu0
        %v4846 = vadd.f32 %v4769, %v4845
        %4847 = vmatprep.mubr.f32.mxu0 %v3289
        %4848 = vmatmul.mubr.f32.gmra.mrb[0].mxu0 %v3288
        %v4849 = vpop.f32.mrb[0].mxu0
        %v4850 = vadd.f32 %v4773, %v4849
        %v4851 = vpop.f32.mrb[0].mxu0
        %v4852 = vadd.f32 %v4775, %v4851
        %4853 = vdwg.mxu0
        %4854 = vmatprep.subr.mxu0 %v1717
        %4855 = vmatpush1.msra.mxu0 %v1716
        %4856 = vmatprep.subr.mxu0 %v1721
        %4857 = vmatpush1.msra.mxu0 %v1720
        %4858 = vmatprep.subr.mxu0 %v1725
        %4859 = vmatpush1.msra.mxu0 %v1724
        %4860 = vmatprep.subr.mxu0 %v1729
        %4861 = vmatpush1.msra.mxu0 %v1728
        %4862 = vmatprep.subr.mxu0 %v1733
        %4863 = vmatpush1.msra.mxu0 %v1732
        %4864 = vmatprep.subr.mxu0 %v1737
        %4865 = vmatpush1.msra.mxu0 %v1736
        %4866 = vmatprep.subr.mxu0 %v1741
        %4867 = vmatpush1.msra.mxu0 %v1740
        %4868 = vmatprep.subr.mxu0 %v1745
        %4869 = vmatpush1.msra.mxu0 %v1744
        %4870 = vmatprep.subr.mxu0 %v1749
        %4871 = vmatpush1.msra.mxu0 %v1748
        %4872 = vmatprep.subr.mxu0 %v1753
        %4873 = vmatpush1.msra.mxu0 %v1752
        %4874 = vmatprep.subr.mxu0 %v1757
        %4875 = vmatpush1.msra.mxu0 %v1756
        %4876 = vmatprep.subr.mxu0 %v1761
        %4877 = vmatpush1.msra.mxu0 %v1760
        %4878 = vmatprep.subr.mxu0 %v1765
        %4879 = vmatpush1.msra.mxu0 %v1764
        %4880 = vmatprep.subr.mxu0 %v1769
        %4881 = vmatpush1.msra.mxu0 %v1768
        %4882 = vmatprep.subr.mxu0 %v1773
        %4883 = vmatpush1.msra.mxu0 %v1772
        %4884 = vmatprep.subr.mxu0 %v1777
        %4885 = vmatpush1.msra.mxu0 %v1776
        %4886 = vmatprep.subr.mxu0 %v1781
        %4887 = vmatpush1.msra.mxu0 %v1780
        %4888 = vmatprep.subr.mxu0 %v1785
        %4889 = vmatpush1.msra.mxu0 %v1784
        %4890 = vmatprep.subr.mxu0 %v1789
        %4891 = vmatpush1.msra.mxu0 %v1788
        %4892 = vmatprep.subr.mxu0 %v1793
        %4893 = vmatpush1.msra.mxu0 %v1792
        %4894 = vmatprep.subr.mxu0 %v1797
        %4895 = vmatpush1.msra.mxu0 %v1796
        %4896 = vmatprep.subr.mxu0 %v1801
        %4897 = vmatpush1.msra.mxu0 %v1800
        %4898 = vmatprep.subr.mxu0 %v1805
        %4899 = vmatpush1.msra.mxu0 %v1804
        %4900 = vmatprep.subr.mxu0 %v1809
        %4901 = vmatpush1.msra.mxu0 %v1808
        %4902 = vmatprep.subr.mxu0 %v1813
        %4903 = vmatpush1.msra.mxu0 %v1812
        %4904 = vmatprep.subr.mxu0 %v1817
        %4905 = vmatpush1.msra.mxu0 %v1816
        %4906 = vmatprep.subr.mxu0 %v1821
        %4907 = vmatpush1.msra.mxu0 %v1820
        %4908 = vmatprep.subr.mxu0 %v1825
        %4909 = vmatpush1.msra.mxu0 %v1824
        %4910 = vmatprep.subr.mxu0 %v1829
        %4911 = vmatpush1.msra.mxu0 %v1828
        %4912 = vmatprep.subr.mxu0 %v1833
        %4913 = vmatpush1.msra.mxu0 %v1832
        %4914 = vmatprep.subr.mxu0 %v1837
        %4915 = vmatpush1.msra.mxu0 %v1836
        %4916 = vmatprep.subr.mxu0 %v1841
        %4917 = vmatpush1.msra.mxu0 %v1840
        %4918 = vmatprep.mubr.f32.mxu0 %v3259
        %4919 = vmatmul.mubr.f32.gmra.mrb[0].mxu0 %v3258
        %v4920 = vpop.f32.mrb[0].mxu0
        %v4921 = vadd.f32 %v4844, %v4920
        %v4922 = vpop.f32.mrb[0].mxu0
        %v4923 = vadd.f32 %v4846, %v4922
        %4924 = vmatprep.mubr.f32.mxu0 %v3291
        %4925 = vmatmul.mubr.f32.gmra.mrb[0].mxu0 %v3290
        %v4926 = vpop.f32.mrb[0].mxu0
        %v4927 = vadd.f32 %v4850, %v4926
        %v4928 = vpop.f32.mrb[0].mxu0
        %v4929 = vadd.f32 %v4852, %v4928
        %4930 = vdwg.mxu0
        %4931 = vmatprep.subr.mxu0 %v1845
        %4932 = vmatpush1.msra.mxu0 %v1844
        %4933 = vmatprep.subr.mxu0 %v1849
        %4934 = vmatpush1.msra.mxu0 %v1848
        %4935 = vmatprep.subr.mxu0 %v1853
        %4936 = vmatpush1.msra.mxu0 %v1852
        %4937 = vmatprep.subr.mxu0 %v1857
        %4938 = vmatpush1.msra.mxu0 %v1856
        %4939 = vmatprep.subr.mxu0 %v1861
        %4940 = vmatpush1.msra.mxu0 %v1860
        %4941 = vmatprep.subr.mxu0 %v1865
        %4942 = vmatpush1.msra.mxu0 %v1864
        %4943 = vmatprep.subr.mxu0 %v1869
        %4944 = vmatpush1.msra.mxu0 %v1868
        %4945 = vmatprep.subr.mxu0 %v1873
        %4946 = vmatpush1.msra.mxu0 %v1872
        %4947 = vmatprep.subr.mxu0 %v1877
        %4948 = vmatpush1.msra.mxu0 %v1876
        %4949 = vmatprep.subr.mxu0 %v1881
        %4950 = vmatpush1.msra.mxu0 %v1880
        %4951 = vmatprep.subr.mxu0 %v1885
        %4952 = vmatpush1.msra.mxu0 %v1884
        %4953 = vmatprep.subr.mxu0 %v1889
        %4954 = vmatpush1.msra.mxu0 %v1888
        %4955 = vmatprep.subr.mxu0 %v1893
        %4956 = vmatpush1.msra.mxu0 %v1892
        %4957 = vmatprep.subr.mxu0 %v1897
        %4958 = vmatpush1.msra.mxu0 %v1896
        %4959 = vmatprep.subr.mxu0 %v1901
        %4960 = vmatpush1.msra.mxu0 %v1900
        %4961 = vmatprep.subr.mxu0 %v1905
        %4962 = vmatpush1.msra.mxu0 %v1904
        %4963 = vmatprep.subr.mxu0 %v1909
        %4964 = vmatpush1.msra.mxu0 %v1908
        %4965 = vmatprep.subr.mxu0 %v1913
        %4966 = vmatpush1.msra.mxu0 %v1912
        %4967 = vmatprep.subr.mxu0 %v1917
        %4968 = vmatpush1.msra.mxu0 %v1916
        %4969 = vmatprep.subr.mxu0 %v1921
        %4970 = vmatpush1.msra.mxu0 %v1920
        %4971 = vmatprep.subr.mxu0 %v1925
        %4972 = vmatpush1.msra.mxu0 %v1924
        %4973 = vmatprep.subr.mxu0 %v1929
        %4974 = vmatpush1.msra.mxu0 %v1928
        %4975 = vmatprep.subr.mxu0 %v1933
        %4976 = vmatpush1.msra.mxu0 %v1932
        %4977 = vmatprep.subr.mxu0 %v1937
        %4978 = vmatpush1.msra.mxu0 %v1936
        %4979 = vmatprep.subr.mxu0 %v1941
        %4980 = vmatpush1.msra.mxu0 %v1940
        %4981 = vmatprep.subr.mxu0 %v1945
        %4982 = vmatpush1.msra.mxu0 %v1944
        %4983 = vmatprep.subr.mxu0 %v1949
        %4984 = vmatpush1.msra.mxu0 %v1948
        %4985 = vmatprep.subr.mxu0 %v1953
        %4986 = vmatpush1.msra.mxu0 %v1952
        %4987 = vmatprep.subr.mxu0 %v1957
        %4988 = vmatpush1.msra.mxu0 %v1956
        %4989 = vmatprep.subr.mxu0 %v1961
        %4990 = vmatpush1.msra.mxu0 %v1960
        %4991 = vmatprep.subr.mxu0 %v1965
        %4992 = vmatpush1.msra.mxu0 %v1964
        %4993 = vmatprep.subr.mxu0 %v1969
        %4994 = vmatpush1.msra.mxu0 %v1968
        %4995 = vmatprep.mubr.f32.mxu0 %v3261
        %4996 = vmatmul.mubr.f32.gmra.mrb[0].mxu0 %v3260
        %v4997 = vpop.f32.mrb[0].mxu0
        %v4998 = vadd.f32 %v4921, %v4997
        %v4999 = vpop.f32.mrb[0].mxu0
        %v5000 = vadd.f32 %v4923, %v4999
        %5001 = vmatprep.mubr.f32.mxu0 %v3293
        %5002 = vmatmul.mubr.f32.gmra.mrb[0].mxu0 %v3292
        %v5003 = vpop.f32.mrb[0].mxu0
        %v5004 = vadd.f32 %v4927, %v5003
        %v5005 = vpop.f32.mrb[0].mxu0
        %v5006 = vadd.f32 %v4929, %v5005
        %5007 = vdwg.mxu0
        %5008 = vmatprep.subr.mxu0 %v1973
        %5009 = vmatpush1.msra.mxu0 %v1972
        %5010 = vmatprep.subr.mxu0 %v1977
        %5011 = vmatpush1.msra.mxu0 %v1976
        %5012 = vmatprep.subr.mxu0 %v1981
        %5013 = vmatpush1.msra.mxu0 %v1980
        %5014 = vmatprep.subr.mxu0 %v1985
        %5015 = vmatpush1.msra.mxu0 %v1984
        %5016 = vmatprep.subr.mxu0 %v1989
        %5017 = vmatpush1.msra.mxu0 %v1988
        %5018 = vmatprep.subr.mxu0 %v1993
        %5019 = vmatpush1.msra.mxu0 %v1992
        %5020 = vmatprep.subr.mxu0 %v1997
        %5021 = vmatpush1.msra.mxu0 %v1996
        %5022 = vmatprep.subr.mxu0 %v2001
        %5023 = vmatpush1.msra.mxu0 %v2000
        %5024 = vmatprep.subr.mxu0 %v2005
        %5025 = vmatpush1.msra.mxu0 %v2004
        %5026 = vmatprep.subr.mxu0 %v2009
        %5027 = vmatpush1.msra.mxu0 %v2008
        %5028 = vmatprep.subr.mxu0 %v2013
        %5029 = vmatpush1.msra.mxu0 %v2012
        %5030 = vmatprep.subr.mxu0 %v2017
        %5031 = vmatpush1.msra.mxu0 %v2016
        %5032 = vmatprep.subr.mxu0 %v2021
        %5033 = vmatpush1.msra.mxu0 %v2020
        %5034 = vmatprep.subr.mxu0 %v2025
        %5035 = vmatpush1.msra.mxu0 %v2024
        %5036 = vmatprep.subr.mxu0 %v2029
        %5037 = vmatpush1.msra.mxu0 %v2028
        %5038 = vmatprep.subr.mxu0 %v2033
        %5039 = vmatpush1.msra.mxu0 %v2032
        %5040 = vmatprep.subr.mxu0 %v2037
        %5041 = vmatpush1.msra.mxu0 %v2036
        %5042 = vmatprep.subr.mxu0 %v2041
        %5043 = vmatpush1.msra.mxu0 %v2040
        %5044 = vmatprep.subr.mxu0 %v2045
        %5045 = vmatpush1.msra.mxu0 %v2044
        %5046 = vmatprep.subr.mxu0 %v2049
        %5047 = vmatpush1.msra.mxu0 %v2048
        %5048 = vmatprep.subr.mxu0 %v2053
        %5049 = vmatpush1.msra.mxu0 %v2052
        %5050 = vmatprep.subr.mxu0 %v2057
        %5051 = vmatpush1.msra.mxu0 %v2056
        %5052 = vmatprep.subr.mxu0 %v2061
        %5053 = vmatpush1.msra.mxu0 %v2060
        %5054 = vmatprep.subr.mxu0 %v2065
        %5055 = vmatpush1.msra.mxu0 %v2064
        %5056 = vmatprep.subr.mxu0 %v2069
        %5057 = vmatpush1.msra.mxu0 %v2068
        %5058 = vmatprep.subr.mxu0 %v2073
        %5059 = vmatpush1.msra.mxu0 %v2072
        %5060 = vmatprep.subr.mxu0 %v2077
        %5061 = vmatpush1.msra.mxu0 %v2076
        %5062 = vmatprep.subr.mxu0 %v2081
        %5063 = vmatpush1.msra.mxu0 %v2080
        %5064 = vmatprep.subr.mxu0 %v2085
        %5065 = vmatpush1.msra.mxu0 %v2084
        %5066 = vmatprep.subr.mxu0 %v2089
        %5067 = vmatpush1.msra.mxu0 %v2088
        %5068 = vmatprep.subr.mxu0 %v2093
        %5069 = vmatpush1.msra.mxu0 %v2092
        %5070 = vmatprep.subr.mxu0 %v2097
        %5071 = vmatpush1.msra.mxu0 %v2096
        %5072 = vmatprep.mubr.f32.mxu0 %v3263
        %5073 = vmatmul.mubr.f32.gmra.mrb[0].mxu0 %v3262
        %v5074 = vpop.f32.mrb[0].mxu0
        %v5075 = vadd.f32 %v4998, %v5074
        %v5076 = vpop.f32.mrb[0].mxu0
        %v5077 = vadd.f32 %v5000, %v5076
        %5078 = vmatprep.mubr.f32.mxu0 %v3295
        %5079 = vmatmul.mubr.f32.gmra.mrb[0].mxu0 %v3294
        %v5080 = vpop.f32.mrb[0].mxu0
        %v5081 = vadd.f32 %v5004, %v5080
        %v5082 = vpop.f32.mrb[0].mxu0
        %v5083 = vadd.f32 %v5006, %v5082
        %5084 = vdwg.mxu0
        %5085 = vmatprep.subr.mxu0 %v2101
        %5086 = vmatpush1.msra.mxu0 %v2100
        %5087 = vmatprep.subr.mxu0 %v2105
        %5088 = vmatpush1.msra.mxu0 %v2104
        %5089 = vmatprep.subr.mxu0 %v2109
        %5090 = vmatpush1.msra.mxu0 %v2108
        %5091 = vmatprep.subr.mxu0 %v2113
        %5092 = vmatpush1.msra.mxu0 %v2112
        %5093 = vmatprep.subr.mxu0 %v2117
        %5094 = vmatpush1.msra.mxu0 %v2116
        %5095 = vmatprep.subr.mxu0 %v2121
        %5096 = vmatpush1.msra.mxu0 %v2120
        %5097 = vmatprep.subr.mxu0 %v2125
        %5098 = vmatpush1.msra.mxu0 %v2124
        %5099 = vmatprep.subr.mxu0 %v2129
        %5100 = vmatpush1.msra.mxu0 %v2128
        %5101 = vmatprep.subr.mxu0 %v2133
        %5102 = vmatpush1.msra.mxu0 %v2132
        %5103 = vmatprep.subr.mxu0 %v2137
        %5104 = vmatpush1.msra.mxu0 %v2136
        %5105 = vmatprep.subr.mxu0 %v2141
        %5106 = vmatpush1.msra.mxu0 %v2140
        %5107 = vmatprep.subr.mxu0 %v2145
        %5108 = vmatpush1.msra.mxu0 %v2144
        %5109 = vmatprep.subr.mxu0 %v2149
        %5110 = vmatpush1.msra.mxu0 %v2148
        %5111 = vmatprep.subr.mxu0 %v2153
        %5112 = vmatpush1.msra.mxu0 %v2152
        %5113 = vmatprep.subr.mxu0 %v2157
        %5114 = vmatpush1.msra.mxu0 %v2156
        %5115 = vmatprep.subr.mxu0 %v2161
        %5116 = vmatpush1.msra.mxu0 %v2160
        %5117 = vmatprep.subr.mxu0 %v2165
        %5118 = vmatpush1.msra.mxu0 %v2164
        %5119 = vmatprep.subr.mxu0 %v2169
        %5120 = vmatpush1.msra.mxu0 %v2168
        %5121 = vmatprep.subr.mxu0 %v2173
        %5122 = vmatpush1.msra.mxu0 %v2172
        %5123 = vmatprep.subr.mxu0 %v2177
        %5124 = vmatpush1.msra.mxu0 %v2176
        %5125 = vmatprep.subr.mxu0 %v2181
        %5126 = vmatpush1.msra.mxu0 %v2180
        %5127 = vmatprep.subr.mxu0 %v2185
        %5128 = vmatpush1.msra.mxu0 %v2184
        %5129 = vmatprep.subr.mxu0 %v2189
        %5130 = vmatpush1.msra.mxu0 %v2188
        %5131 = vmatprep.subr.mxu0 %v2193
        %5132 = vmatpush1.msra.mxu0 %v2192
        %5133 = vmatprep.subr.mxu0 %v2197
        %5134 = vmatpush1.msra.mxu0 %v2196
        %5135 = vmatprep.subr.mxu0 %v2201
        %5136 = vmatpush1.msra.mxu0 %v2200
        %5137 = vmatprep.subr.mxu0 %v2205
        %5138 = vmatpush1.msra.mxu0 %v2204
        %5139 = vmatprep.subr.mxu0 %v2209
        %5140 = vmatpush1.msra.mxu0 %v2208
        %5141 = vmatprep.subr.mxu0 %v2213
        %5142 = vmatpush1.msra.mxu0 %v2212
        %5143 = vmatprep.subr.mxu0 %v2217
        %5144 = vmatpush1.msra.mxu0 %v2216
        %5145 = vmatprep.subr.mxu0 %v2221
        %5146 = vmatpush1.msra.mxu0 %v2220
        %5147 = vmatprep.subr.mxu0 %v2225
        %5148 = vmatpush1.msra.mxu0 %v2224
        %5149 = vmatprep.mubr.f32.mxu0 %v3265
        %5150 = vmatmul.mubr.f32.gmra.mrb[0].mxu0 %v3264
        %v5151 = vpop.f32.mrb[0].mxu0
        %v5152 = vadd.f32 %v5075, %v5151
        %v5153 = vpop.f32.mrb[0].mxu0
        %v5154 = vadd.f32 %v5077, %v5153
        %5155 = vmatprep.mubr.f32.mxu0 %v3297
        %5156 = vmatmul.mubr.f32.gmra.mrb[0].mxu0 %v3296
        %v5157 = vpop.f32.mrb[0].mxu0
        %v5158 = vadd.f32 %v5081, %v5157
        %v5159 = vpop.f32.mrb[0].mxu0
        %v5160 = vadd.f32 %v5083, %v5159
        %5161 = vdwg.mxu0
        %5162 = vmatprep.subr.mxu0 %v2229
        %5163 = vmatpush1.msra.mxu0 %v2228
        %5164 = vmatprep.subr.mxu0 %v2233
        %5165 = vmatpush1.msra.mxu0 %v2232
        %5166 = vmatprep.subr.mxu0 %v2237
        %5167 = vmatpush1.msra.mxu0 %v2236
        %5168 = vmatprep.subr.mxu0 %v2241
        %5169 = vmatpush1.msra.mxu0 %v2240
        %5170 = vmatprep.subr.mxu0 %v2245
        %5171 = vmatpush1.msra.mxu0 %v2244
        %5172 = vmatprep.subr.mxu0 %v2249
        %5173 = vmatpush1.msra.mxu0 %v2248
        %5174 = vmatprep.subr.mxu0 %v2253
        %5175 = vmatpush1.msra.mxu0 %v2252
        %5176 = vmatprep.subr.mxu0 %v2257
        %5177 = vmatpush1.msra.mxu0 %v2256
        %5178 = vmatprep.subr.mxu0 %v2261
        %5179 = vmatpush1.msra.mxu0 %v2260
        %5180 = vmatprep.subr.mxu0 %v2265
        %5181 = vmatpush1.msra.mxu0 %v2264
        %5182 = vmatprep.subr.mxu0 %v2269
        %5183 = vmatpush1.msra.mxu0 %v2268
        %5184 = vmatprep.subr.mxu0 %v2273
        %5185 = vmatpush1.msra.mxu0 %v2272
        %5186 = vmatprep.subr.mxu0 %v2277
        %5187 = vmatpush1.msra.mxu0 %v2276
        %5188 = vmatprep.subr.mxu0 %v2281
        %5189 = vmatpush1.msra.mxu0 %v2280
        %5190 = vmatprep.subr.mxu0 %v2285
        %5191 = vmatpush1.msra.mxu0 %v2284
        %5192 = vmatprep.subr.mxu0 %v2289
        %5193 = vmatpush1.msra.mxu0 %v2288
        %5194 = vmatprep.subr.mxu0 %v2293
        %5195 = vmatpush1.msra.mxu0 %v2292
        %5196 = vmatprep.subr.mxu0 %v2297
        %5197 = vmatpush1.msra.mxu0 %v2296
        %5198 = vmatprep.subr.mxu0 %v2301
        %5199 = vmatpush1.msra.mxu0 %v2300
        %5200 = vmatprep.subr.mxu0 %v2305
        %5201 = vmatpush1.msra.mxu0 %v2304
        %5202 = vmatprep.subr.mxu0 %v2309
        %5203 = vmatpush1.msra.mxu0 %v2308
        %5204 = vmatprep.subr.mxu0 %v2313
        %5205 = vmatpush1.msra.mxu0 %v2312
        %5206 = vmatprep.subr.mxu0 %v2317
        %5207 = vmatpush1.msra.mxu0 %v2316
        %5208 = vmatprep.subr.mxu0 %v2321
        %5209 = vmatpush1.msra.mxu0 %v2320
        %5210 = vmatprep.subr.mxu0 %v2325
        %5211 = vmatpush1.msra.mxu0 %v2324
        %5212 = vmatprep.subr.mxu0 %v2329
        %5213 = vmatpush1.msra.mxu0 %v2328
        %5214 = vmatprep.subr.mxu0 %v2333
        %5215 = vmatpush1.msra.mxu0 %v2332
        %5216 = vmatprep.subr.mxu0 %v2337
        %5217 = vmatpush1.msra.mxu0 %v2336
        %5218 = vmatprep.subr.mxu0 %v2341
        %5219 = vmatpush1.msra.mxu0 %v2340
        %5220 = vmatprep.subr.mxu0 %v2345
        %5221 = vmatpush1.msra.mxu0 %v2344
        %5222 = vmatprep.subr.mxu0 %v2349
        %5223 = vmatpush1.msra.mxu0 %v2348
        %5224 = vmatprep.subr.mxu0 %v2353
        %5225 = vmatpush1.msra.mxu0 %v2352
        %5226 = vmatprep.mubr.f32.mxu0 %v3267
        %5227 = vmatmul.mubr.f32.gmra.mrb[0].mxu0 %v3266
        %v5228 = vpop.f32.mrb[0].mxu0
        %v5229 = vadd.f32 %v5152, %v5228
        %v5230 = vpop.f32.mrb[0].mxu0
        %v5231 = vadd.f32 %v5154, %v5230
        %5232 = vmatprep.mubr.f32.mxu0 %v3299
        %5233 = vmatmul.mubr.f32.gmra.mrb[0].mxu0 %v3298
        %v5234 = vpop.f32.mrb[0].mxu0
        %v5235 = vadd.f32 %v5158, %v5234
        %v5236 = vpop.f32.mrb[0].mxu0
        %v5237 = vadd.f32 %v5160, %v5236
        %5238 = vdwg.mxu0
        %5239 = vmatprep.subr.mxu0 %v2357
        %5240 = vmatpush1.msra.mxu0 %v2356
        %5241 = vmatprep.subr.mxu0 %v2361
        %5242 = vmatpush1.msra.mxu0 %v2360
        %5243 = vmatprep.subr.mxu0 %v2365
        %5244 = vmatpush1.msra.mxu0 %v2364
        %5245 = vmatprep.subr.mxu0 %v2369
        %5246 = vmatpush1.msra.mxu0 %v2368
        %5247 = vmatprep.subr.mxu0 %v2373
        %5248 = vmatpush1.msra.mxu0 %v2372
        %5249 = vmatprep.subr.mxu0 %v2377
        %5250 = vmatpush1.msra.mxu0 %v2376
        %5251 = vmatprep.subr.mxu0 %v2381
        %5252 = vmatpush1.msra.mxu0 %v2380
        %5253 = vmatprep.subr.mxu0 %v2385
        %5254 = vmatpush1.msra.mxu0 %v2384
        %5255 = vmatprep.subr.mxu0 %v2389
        %5256 = vmatpush1.msra.mxu0 %v2388
        %5257 = vmatprep.subr.mxu0 %v2393
        %5258 = vmatpush1.msra.mxu0 %v2392
        %5259 = vmatprep.subr.mxu0 %v2397
        %5260 = vmatpush1.msra.mxu0 %v2396
        %5261 = vmatprep.subr.mxu0 %v2401
        %5262 = vmatpush1.msra.mxu0 %v2400
        %5263 = vmatprep.subr.mxu0 %v2405
        %5264 = vmatpush1.msra.mxu0 %v2404
        %5265 = vmatprep.subr.mxu0 %v2409
        %5266 = vmatpush1.msra.mxu0 %v2408
        %5267 = vmatprep.subr.mxu0 %v2413
        %5268 = vmatpush1.msra.mxu0 %v2412
        %5269 = vmatprep.subr.mxu0 %v2417
        %5270 = vmatpush1.msra.mxu0 %v2416
        %5271 = vmatprep.subr.mxu0 %v2421
        %5272 = vmatpush1.msra.mxu0 %v2420
        %5273 = vmatprep.subr.mxu0 %v2425
        %5274 = vmatpush1.msra.mxu0 %v2424
        %5275 = vmatprep.subr.mxu0 %v2429
        %5276 = vmatpush1.msra.mxu0 %v2428
        %5277 = vmatprep.subr.mxu0 %v2433
        %5278 = vmatpush1.msra.mxu0 %v2432
        %5279 = vmatprep.subr.mxu0 %v2437
        %5280 = vmatpush1.msra.mxu0 %v2436
        %5281 = vmatprep.subr.mxu0 %v2441
        %5282 = vmatpush1.msra.mxu0 %v2440
        %5283 = vmatprep.subr.mxu0 %v2445
        %5284 = vmatpush1.msra.mxu0 %v2444
        %5285 = vmatprep.subr.mxu0 %v2449
        %5286 = vmatpush1.msra.mxu0 %v2448
        %5287 = vmatprep.subr.mxu0 %v2453
        %5288 = vmatpush1.msra.mxu0 %v2452
        %5289 = vmatprep.subr.mxu0 %v2457
        %5290 = vmatpush1.msra.mxu0 %v2456
        %5291 = vmatprep.subr.mxu0 %v2461
        %5292 = vmatpush1.msra.mxu0 %v2460
        %5293 = vmatprep.subr.mxu0 %v2465
        %5294 = vmatpush1.msra.mxu0 %v2464
        %5295 = vmatprep.subr.mxu0 %v2469
        %5296 = vmatpush1.msra.mxu0 %v2468
        %5297 = vmatprep.subr.mxu0 %v2473
        %5298 = vmatpush1.msra.mxu0 %v2472
        %5299 = vmatprep.subr.mxu0 %v2477
        %5300 = vmatpush1.msra.mxu0 %v2476
        %5301 = vmatprep.subr.mxu0 %v2481
        %5302 = vmatpush1.msra.mxu0 %v2480
        %5303 = vmatprep.mubr.f32.mxu0 %v3269
        %5304 = vmatmul.mubr.f32.gmra.mrb[0].mxu0 %v3268
        %v5305 = vpop.f32.mrb[0].mxu0
        %v5306 = vadd.f32 %v5229, %v5305
        %v5307 = vpop.f32.mrb[0].mxu0
        %v5308 = vadd.f32 %v5231, %v5307
        %5309 = vmatprep.mubr.f32.mxu0 %v3301
        %5310 = vmatmul.mubr.f32.gmra.mrb[0].mxu0 %v3300
        %v5311 = vpop.f32.mrb[0].mxu0
        %v5312 = vadd.f32 %v5235, %v5311
        %v5313 = vpop.f32.mrb[0].mxu0
        %v5314 = vadd.f32 %v5237, %v5313
        %5315 = vdwg.mxu0
        %5316 = vmatprep.subr.mxu0 %v2485
        %5317 = vmatpush1.msra.mxu0 %v2484
        %5318 = vmatprep.subr.mxu0 %v2489
        %5319 = vmatpush1.msra.mxu0 %v2488
        %5320 = vmatprep.subr.mxu0 %v2493
        %5321 = vmatpush1.msra.mxu0 %v2492
        %5322 = vmatprep.subr.mxu0 %v2497
        %5323 = vmatpush1.msra.mxu0 %v2496
        %5324 = vmatprep.subr.mxu0 %v2501
        %5325 = vmatpush1.msra.mxu0 %v2500
        %5326 = vmatprep.subr.mxu0 %v2505
        %5327 = vmatpush1.msra.mxu0 %v2504
        %5328 = vmatprep.subr.mxu0 %v2509
        %5329 = vmatpush1.msra.mxu0 %v2508
        %5330 = vmatprep.subr.mxu0 %v2513
        %5331 = vmatpush1.msra.mxu0 %v2512
        %5332 = vmatprep.subr.mxu0 %v2517
        %5333 = vmatpush1.msra.mxu0 %v2516
        %5334 = vmatprep.subr.mxu0 %v2521
        %5335 = vmatpush1.msra.mxu0 %v2520
        %5336 = vmatprep.subr.mxu0 %v2525
        %5337 = vmatpush1.msra.mxu0 %v2524
        %5338 = vmatprep.subr.mxu0 %v2529
        %5339 = vmatpush1.msra.mxu0 %v2528
        %5340 = vmatprep.subr.mxu0 %v2533
        %5341 = vmatpush1.msra.mxu0 %v2532
        %5342 = vmatprep.subr.mxu0 %v2537
        %5343 = vmatpush1.msra.mxu0 %v2536
        %5344 = vmatprep.subr.mxu0 %v2541
        %5345 = vmatpush1.msra.mxu0 %v2540
        %5346 = vmatprep.subr.mxu0 %v2545
        %5347 = vmatpush1.msra.mxu0 %v2544
        %5348 = vmatprep.subr.mxu0 %v2549
        %5349 = vmatpush1.msra.mxu0 %v2548
        %5350 = vmatprep.subr.mxu0 %v2553
        %5351 = vmatpush1.msra.mxu0 %v2552
        %5352 = vmatprep.subr.mxu0 %v2557
        %5353 = vmatpush1.msra.mxu0 %v2556
        %5354 = vmatprep.subr.mxu0 %v2561
        %5355 = vmatpush1.msra.mxu0 %v2560
        %5356 = vmatprep.subr.mxu0 %v2565
        %5357 = vmatpush1.msra.mxu0 %v2564
        %5358 = vmatprep.subr.mxu0 %v2569
        %5359 = vmatpush1.msra.mxu0 %v2568
        %5360 = vmatprep.subr.mxu0 %v2573
        %5361 = vmatpush1.msra.mxu0 %v2572
        %5362 = vmatprep.subr.mxu0 %v2577
        %5363 = vmatpush1.msra.mxu0 %v2576
        %5364 = vmatprep.subr.mxu0 %v2581
        %5365 = vmatpush1.msra.mxu0 %v2580
        %5366 = vmatprep.subr.mxu0 %v2585
        %5367 = vmatpush1.msra.mxu0 %v2584
        %5368 = vmatprep.subr.mxu0 %v2589
        %5369 = vmatpush1.msra.mxu0 %v2588
        %5370 = vmatprep.subr.mxu0 %v2593
        %5371 = vmatpush1.msra.mxu0 %v2592
        %5372 = vmatprep.subr.mxu0 %v2597
        %5373 = vmatpush1.msra.mxu0 %v2596
        %5374 = vmatprep.subr.mxu0 %v2601
        %5375 = vmatpush1.msra.mxu0 %v2600
        %5376 = vmatprep.subr.mxu0 %v2605
        %5377 = vmatpush1.msra.mxu0 %v2604
        %5378 = vmatprep.subr.mxu0 %v2609
        %5379 = vmatpush1.msra.mxu0 %v2608
        %5380 = vmatprep.mubr.f32.mxu0 %v3271
        %5381 = vmatmul.mubr.f32.gmra.mrb[0].mxu0 %v3270
        %v5382 = vpop.f32.mrb[0].mxu0
        %v5383 = vadd.f32 %v5306, %v5382
        %v5384 = vpop.f32.mrb[0].mxu0
        %v5385 = vadd.f32 %v5308, %v5384
        %5386 = vmatprep.mubr.f32.mxu0 %v3303
        %5387 = vmatmul.mubr.f32.gmra.mrb[0].mxu0 %v3302
        %v5388 = vpop.f32.mrb[0].mxu0
        %v5389 = vadd.f32 %v5312, %v5388
        %v5390 = vpop.f32.mrb[0].mxu0
        %v5391 = vadd.f32 %v5314, %v5390
        %5392 = vdwg.mxu0
        %5393 = vmatprep.subr.mxu0 %v2613
        %5394 = vmatpush1.msra.mxu0 %v2612
        %5395 = vmatprep.subr.mxu0 %v2617
        %5396 = vmatpush1.msra.mxu0 %v2616
        %5397 = vmatprep.subr.mxu0 %v2621
        %5398 = vmatpush1.msra.mxu0 %v2620
        %5399 = vmatprep.subr.mxu0 %v2625
        %5400 = vmatpush1.msra.mxu0 %v2624
        %5401 = vmatprep.subr.mxu0 %v2629
        %5402 = vmatpush1.msra.mxu0 %v2628
        %5403 = vmatprep.subr.mxu0 %v2633
        %5404 = vmatpush1.msra.mxu0 %v2632
        %5405 = vmatprep.subr.mxu0 %v2637
        %5406 = vmatpush1.msra.mxu0 %v2636
        %5407 = vmatprep.subr.mxu0 %v2641
        %5408 = vmatpush1.msra.mxu0 %v2640
        %5409 = vmatprep.subr.mxu0 %v2645
        %5410 = vmatpush1.msra.mxu0 %v2644
        %5411 = vmatprep.subr.mxu0 %v2649
        %5412 = vmatpush1.msra.mxu0 %v2648
        %5413 = vmatprep.subr.mxu0 %v2653
        %5414 = vmatpush1.msra.mxu0 %v2652
        %5415 = vmatprep.subr.mxu0 %v2657
        %5416 = vmatpush1.msra.mxu0 %v2656
        %5417 = vmatprep.subr.mxu0 %v2661
        %5418 = vmatpush1.msra.mxu0 %v2660
        %5419 = vmatprep.subr.mxu0 %v2665
        %5420 = vmatpush1.msra.mxu0 %v2664
        %5421 = vmatprep.subr.mxu0 %v2669
        %5422 = vmatpush1.msra.mxu0 %v2668
        %5423 = vmatprep.subr.mxu0 %v2673
        %5424 = vmatpush1.msra.mxu0 %v2672
        %5425 = vmatprep.subr.mxu0 %v2677
        %5426 = vmatpush1.msra.mxu0 %v2676
        %5427 = vmatprep.subr.mxu0 %v2681
        %5428 = vmatpush1.msra.mxu0 %v2680
        %5429 = vmatprep.subr.mxu0 %v2685
        %5430 = vmatpush1.msra.mxu0 %v2684
        %5431 = vmatprep.subr.mxu0 %v2689
        %5432 = vmatpush1.msra.mxu0 %v2688
        %5433 = vmatprep.subr.mxu0 %v2693
        %5434 = vmatpush1.msra.mxu0 %v2692
        %5435 = vmatprep.subr.mxu0 %v2697
        %5436 = vmatpush1.msra.mxu0 %v2696
        %5437 = vmatprep.subr.mxu0 %v2701
        %5438 = vmatpush1.msra.mxu0 %v2700
        %5439 = vmatprep.subr.mxu0 %v2705
        %5440 = vmatpush1.msra.mxu0 %v2704
        %5441 = vmatprep.subr.mxu0 %v2709
        %5442 = vmatpush1.msra.mxu0 %v2708
        %5443 = vmatprep.subr.mxu0 %v2713
        %5444 = vmatpush1.msra.mxu0 %v2712
        %5445 = vmatprep.subr.mxu0 %v2717
        %5446 = vmatpush1.msra.mxu0 %v2716
        %5447 = vmatprep.subr.mxu0 %v2721
        %5448 = vmatpush1.msra.mxu0 %v2720
        %5449 = vmatprep.subr.mxu0 %v2725
        %5450 = vmatpush1.msra.mxu0 %v2724
        %5451 = vmatprep.subr.mxu0 %v2729
        %5452 = vmatpush1.msra.mxu0 %v2728
        %5453 = vmatprep.subr.mxu0 %v2733
        %5454 = vmatpush1.msra.mxu0 %v2732
        %5455 = vmatprep.subr.mxu0 %v2737
        %5456 = vmatpush1.msra.mxu0 %v2736
        %5457 = vmatprep.mubr.f32.mxu0 %v3273
        %5458 = vmatmul.mubr.f32.gmra.mrb[0].mxu0 %v3272
        %v5459 = vpop.f32.mrb[0].mxu0
        %v5460 = vadd.f32 %v5383, %v5459
        %v5461 = vpop.f32.mrb[0].mxu0
        %v5462 = vadd.f32 %v5385, %v5461
        %5463 = vmatprep.mubr.f32.mxu0 %v3305
        %5464 = vmatmul.mubr.f32.gmra.mrb[0].mxu0 %v3304
        %v5465 = vpop.f32.mrb[0].mxu0
        %v5466 = vadd.f32 %v5389, %v5465
        %v5467 = vpop.f32.mrb[0].mxu0
        %v5468 = vadd.f32 %v5391, %v5467
        %5469 = vdwg.mxu0
        %5470 = vmatprep.subr.mxu0 %v2741
        %5471 = vmatpush1.msra.mxu0 %v2740
        %5472 = vmatprep.subr.mxu0 %v2745
        %5473 = vmatpush1.msra.mxu0 %v2744
        %5474 = vmatprep.subr.mxu0 %v2749
        %5475 = vmatpush1.msra.mxu0 %v2748
        %5476 = vmatprep.subr.mxu0 %v2753
        %5477 = vmatpush1.msra.mxu0 %v2752
        %5478 = vmatprep.subr.mxu0 %v2757
        %5479 = vmatpush1.msra.mxu0 %v2756
        %5480 = vmatprep.subr.mxu0 %v2761
        %5481 = vmatpush1.msra.mxu0 %v2760
        %5482 = vmatprep.subr.mxu0 %v2765
        %5483 = vmatpush1.msra.mxu0 %v2764
        %5484 = vmatprep.subr.mxu0 %v2769
        %5485 = vmatpush1.msra.mxu0 %v2768
        %5486 = vmatprep.subr.mxu0 %v2773
        %5487 = vmatpush1.msra.mxu0 %v2772
        %5488 = vmatprep.subr.mxu0 %v2777
        %5489 = vmatpush1.msra.mxu0 %v2776
        %5490 = vmatprep.subr.mxu0 %v2781
        %5491 = vmatpush1.msra.mxu0 %v2780
        %5492 = vmatprep.subr.mxu0 %v2785
        %5493 = vmatpush1.msra.mxu0 %v2784
        %5494 = vmatprep.subr.mxu0 %v2789
        %5495 = vmatpush1.msra.mxu0 %v2788
        %5496 = vmatprep.subr.mxu0 %v2793
        %5497 = vmatpush1.msra.mxu0 %v2792
        %5498 = vmatprep.subr.mxu0 %v2797
        %5499 = vmatpush1.msra.mxu0 %v2796
        %5500 = vmatprep.subr.mxu0 %v2801
        %5501 = vmatpush1.msra.mxu0 %v2800
        %5502 = vmatprep.subr.mxu0 %v2805
        %5503 = vmatpush1.msra.mxu0 %v2804
        %5504 = vmatprep.subr.mxu0 %v2809
        %5505 = vmatpush1.msra.mxu0 %v2808
        %5506 = vmatprep.subr.mxu0 %v2813
        %5507 = vmatpush1.msra.mxu0 %v2812
        %5508 = vmatprep.subr.mxu0 %v2817
        %5509 = vmatpush1.msra.mxu0 %v2816
        %5510 = vmatprep.subr.mxu0 %v2821
        %5511 = vmatpush1.msra.mxu0 %v2820
        %5512 = vmatprep.subr.mxu0 %v2825
        %5513 = vmatpush1.msra.mxu0 %v2824
        %5514 = vmatprep.subr.mxu0 %v2829
        %5515 = vmatpush1.msra.mxu0 %v2828
        %5516 = vmatprep.subr.mxu0 %v2833
        %5517 = vmatpush1.msra.mxu0 %v2832
        %5518 = vmatprep.subr.mxu0 %v2837
        %5519 = vmatpush1.msra.mxu0 %v2836
        %5520 = vmatprep.subr.mxu0 %v2841
        %5521 = vmatpush1.msra.mxu0 %v2840
        %5522 = vmatprep.subr.mxu0 %v2845
        %5523 = vmatpush1.msra.mxu0 %v2844
        %5524 = vmatprep.subr.mxu0 %v2849
        %5525 = vmatpush1.msra.mxu0 %v2848
        %5526 = vmatprep.subr.mxu0 %v2853
        %5527 = vmatpush1.msra.mxu0 %v2852
        %5528 = vmatprep.subr.mxu0 %v2857
        %5529 = vmatpush1.msra.mxu0 %v2856
        %5530 = vmatprep.subr.mxu0 %v2861
        %5531 = vmatpush1.msra.mxu0 %v2860
        %5532 = vmatprep.subr.mxu0 %v2865
        %5533 = vmatpush1.msra.mxu0 %v2864
        %5534 = vmatprep.mubr.f32.mxu0 %v3275
        %5535 = vmatmul.mubr.f32.gmra.mrb[0].mxu0 %v3274
        %v5536 = vpop.f32.mrb[0].mxu0
        %v5537 = vadd.f32 %v5460, %v5536
        %v5538 = vpop.f32.mrb[0].mxu0
        %v5539 = vadd.f32 %v5462, %v5538
        %5540 = vmatprep.mubr.f32.mxu0 %v3307
        %5541 = vmatmul.mubr.f32.gmra.mrb[0].mxu0 %v3306
        %v5542 = vpop.f32.mrb[0].mxu0
        %v5543 = vadd.f32 %v5466, %v5542
        %v5544 = vpop.f32.mrb[0].mxu0
        %v5545 = vadd.f32 %v5468, %v5544
        %5546 = vdwg.mxu0
        %5547 = vmatprep.subr.mxu0 %v2869
        %5548 = vmatpush1.msra.mxu0 %v2868
        %5549 = vmatprep.subr.mxu0 %v2873
        %5550 = vmatpush1.msra.mxu0 %v2872
        %5551 = vmatprep.subr.mxu0 %v2877
        %5552 = vmatpush1.msra.mxu0 %v2876
        %5553 = vmatprep.subr.mxu0 %v2881
        %5554 = vmatpush1.msra.mxu0 %v2880
        %5555 = vmatprep.subr.mxu0 %v2885
        %5556 = vmatpush1.msra.mxu0 %v2884
        %5557 = vmatprep.subr.mxu0 %v2889
        %5558 = vmatpush1.msra.mxu0 %v2888
        %5559 = vmatprep.subr.mxu0 %v2893
        %5560 = vmatpush1.msra.mxu0 %v2892
        %5561 = vmatprep.subr.mxu0 %v2897
        %5562 = vmatpush1.msra.mxu0 %v2896
        %5563 = vmatprep.subr.mxu0 %v2901
        %5564 = vmatpush1.msra.mxu0 %v2900
        %5565 = vmatprep.subr.mxu0 %v2905
        %5566 = vmatpush1.msra.mxu0 %v2904
        %5567 = vmatprep.subr.mxu0 %v2909
        %5568 = vmatpush1.msra.mxu0 %v2908
        %5569 = vmatprep.subr.mxu0 %v2913
        %5570 = vmatpush1.msra.mxu0 %v2912
        %5571 = vmatprep.subr.mxu0 %v2917
        %5572 = vmatpush1.msra.mxu0 %v2916
        %5573 = vmatprep.subr.mxu0 %v2921
        %5574 = vmatpush1.msra.mxu0 %v2920
        %5575 = vmatprep.subr.mxu0 %v2925
        %5576 = vmatpush1.msra.mxu0 %v2924
        %5577 = vmatprep.subr.mxu0 %v2929
        %5578 = vmatpush1.msra.mxu0 %v2928
        %5579 = vmatprep.subr.mxu0 %v2933
        %5580 = vmatpush1.msra.mxu0 %v2932
        %5581 = vmatprep.subr.mxu0 %v2937
        %5582 = vmatpush1.msra.mxu0 %v2936
        %5583 = vmatprep.subr.mxu0 %v2941
        %5584 = vmatpush1.msra.mxu0 %v2940
        %5585 = vmatprep.subr.mxu0 %v2945
        %5586 = vmatpush1.msra.mxu0 %v2944
        %5587 = vmatprep.subr.mxu0 %v2949
        %5588 = vmatpush1.msra.mxu0 %v2948
        %5589 = vmatprep.subr.mxu0 %v2953
        %5590 = vmatpush1.msra.mxu0 %v2952
        %5591 = vmatprep.subr.mxu0 %v2957
        %5592 = vmatpush1.msra.mxu0 %v2956
        %5593 = vmatprep.subr.mxu0 %v2961
        %5594 = vmatpush1.msra.mxu0 %v2960
        %5595 = vmatprep.subr.mxu0 %v2965
        %5596 = vmatpush1.msra.mxu0 %v2964
        %5597 = vmatprep.subr.mxu0 %v2969
        %5598 = vmatpush1.msra.mxu0 %v2968
        %5599 = vmatprep.subr.mxu0 %v2973
        %5600 = vmatpush1.msra.mxu0 %v2972
        %5601 = vmatprep.subr.mxu0 %v2977
        %5602 = vmatpush1.msra.mxu0 %v2976
        %5603 = vmatprep.subr.mxu0 %v2981
        %5604 = vmatpush1.msra.mxu0 %v2980
        %5605 = vmatprep.subr.mxu0 %v2985
        %5606 = vmatpush1.msra.mxu0 %v2984
        %5607 = vmatprep.subr.mxu0 %v2989
        %5608 = vmatpush1.msra.mxu0 %v2988
        %5609 = vmatprep.subr.mxu0 %v2993
        %5610 = vmatpush1.msra.mxu0 %v2992
        %5611 = vmatprep.mubr.f32.mxu0 %v3277
        %5612 = vmatmul.mubr.f32.gmra.mrb[0].mxu0 %v3276
        %v5613 = vpop.f32.mrb[0].mxu0
        %v5614 = vadd.f32 %v5537, %v5613
        %v5615 = vpop.f32.mrb[0].mxu0
        %v5616 = vadd.f32 %v5539, %v5615
        %5617 = vmatprep.mubr.f32.mxu0 %v3309
        %5618 = vmatmul.mubr.f32.gmra.mrb[0].mxu0 %v3308
        %v5619 = vpop.f32.mrb[0].mxu0
        %v5620 = vadd.f32 %v5543, %v5619
        %v5621 = vpop.f32.mrb[0].mxu0
        %v5622 = vadd.f32 %v5545, %v5621
        %5623 = vdwg.mxu0
        %5624 = vmatprep.subr.mxu0 %v2997
        %5625 = vmatpush1.msra.mxu0 %v2996
        %5626 = vmatprep.subr.mxu0 %v3001
        %5627 = vmatpush1.msra.mxu0 %v3000
        %5628 = vmatprep.subr.mxu0 %v3005
        %5629 = vmatpush1.msra.mxu0 %v3004
        %5630 = vmatprep.subr.mxu0 %v3009
        %5631 = vmatpush1.msra.mxu0 %v3008
        %5632 = vmatprep.subr.mxu0 %v3013
        %5633 = vmatpush1.msra.mxu0 %v3012
        %5634 = vmatprep.subr.mxu0 %v3017
        %5635 = vmatpush1.msra.mxu0 %v3016
        %5636 = vmatprep.subr.mxu0 %v3021
        %5637 = vmatpush1.msra.mxu0 %v3020
        %5638 = vmatprep.subr.mxu0 %v3025
        %5639 = vmatpush1.msra.mxu0 %v3024
        %5640 = vmatprep.subr.mxu0 %v3029
        %5641 = vmatpush1.msra.mxu0 %v3028
        %5642 = vmatprep.subr.mxu0 %v3033
        %5643 = vmatpush1.msra.mxu0 %v3032
        %5644 = vmatprep.subr.mxu0 %v3037
        %5645 = vmatpush1.msra.mxu0 %v3036
        %5646 = vmatprep.subr.mxu0 %v3041
        %5647 = vmatpush1.msra.mxu0 %v3040
        %5648 = vmatprep.subr.mxu0 %v3045
        %5649 = vmatpush1.msra.mxu0 %v3044
        %5650 = vmatprep.subr.mxu0 %v3049
        %5651 = vmatpush1.msra.mxu0 %v3048
        %5652 = vmatprep.subr.mxu0 %v3053
        %5653 = vmatpush1.msra.mxu0 %v3052
        %5654 = vmatprep.subr.mxu0 %v3057
        %5655 = vmatpush1.msra.mxu0 %v3056
        %5656 = vmatprep.subr.mxu0 %v3061
        %5657 = vmatpush1.msra.mxu0 %v3060
        %5658 = vmatprep.subr.mxu0 %v3065
        %5659 = vmatpush1.msra.mxu0 %v3064
        %5660 = vmatprep.subr.mxu0 %v3069
        %5661 = vmatpush1.msra.mxu0 %v3068
        %5662 = vmatprep.subr.mxu0 %v3073
        %5663 = vmatpush1.msra.mxu0 %v3072
        %5664 = vmatprep.subr.mxu0 %v3077
        %5665 = vmatpush1.msra.mxu0 %v3076
        %5666 = vmatprep.subr.mxu0 %v3081
        %5667 = vmatpush1.msra.mxu0 %v3080
        %5668 = vmatprep.subr.mxu0 %v3085
        %5669 = vmatpush1.msra.mxu0 %v3084
        %5670 = vmatprep.subr.mxu0 %v3089
        %5671 = vmatpush1.msra.mxu0 %v3088
        %5672 = vmatprep.subr.mxu0 %v3093
        %5673 = vmatpush1.msra.mxu0 %v3092
        %5674 = vmatprep.subr.mxu0 %v3097
        %5675 = vmatpush1.msra.mxu0 %v3096
        %5676 = vmatprep.subr.mxu0 %v3101
        %5677 = vmatpush1.msra.mxu0 %v3100
        %5678 = vmatprep.subr.mxu0 %v3105
        %5679 = vmatpush1.msra.mxu0 %v3104
        %5680 = vmatprep.subr.mxu0 %v3109
        %5681 = vmatpush1.msra.mxu0 %v3108
        %5682 = vmatprep.subr.mxu0 %v3113
        %5683 = vmatpush1.msra.mxu0 %v3112
        %5684 = vmatprep.subr.mxu0 %v3117
        %5685 = vmatpush1.msra.mxu0 %v3116
        %5686 = vmatprep.subr.mxu0 %v3121
        %5687 = vmatpush1.msra.mxu0 %v3120
        %5688 = vmatprep.mubr.f32.mxu0 %v3279
        %5689 = vmatmul.mubr.f32.gmra.mrb[0].mxu0 %v3278
        %v5690 = vpop.f32.mrb[0].mxu0
        %v5691 = vadd.f32 %v5614, %v5690
        %v5692 = vpop.f32.mrb[0].mxu0
        %v5693 = vadd.f32 %v5616, %v5692
        %5694 = vmatprep.mubr.f32.mxu0 %v3311
        %5695 = vmatmul.mubr.f32.gmra.mrb[0].mxu0 %v3310
        %v5696 = vpop.f32.mrb[0].mxu0
        %v5697 = vadd.f32 %v5620, %v5696
        %v5698 = vpop.f32.mrb[0].mxu0
        %v5699 = vadd.f32 %v5622, %v5698
        %5700 = vdwg.mxu0
        %5701 = vmatprep.subr.mxu0 %v3125
        %5702 = vmatpush1.msra.mxu0 %v3124
        %5703 = vmatprep.subr.mxu0 %v3129
        %5704 = vmatpush1.msra.mxu0 %v3128
        %5705 = vmatprep.subr.mxu0 %v3133
        %5706 = vmatpush1.msra.mxu0 %v3132
        %5707 = vmatprep.subr.mxu0 %v3137
        %5708 = vmatpush1.msra.mxu0 %v3136
        %5709 = vmatprep.subr.mxu0 %v3141
        %5710 = vmatpush1.msra.mxu0 %v3140
        %5711 = vmatprep.subr.mxu0 %v3145
        %5712 = vmatpush1.msra.mxu0 %v3144
        %5713 = vmatprep.subr.mxu0 %v3149
        %5714 = vmatpush1.msra.mxu0 %v3148
        %5715 = vmatprep.subr.mxu0 %v3153
        %5716 = vmatpush1.msra.mxu0 %v3152
        %5717 = vmatprep.subr.mxu0 %v3157
        %5718 = vmatpush1.msra.mxu0 %v3156
        %5719 = vmatprep.subr.mxu0 %v3161
        %5720 = vmatpush1.msra.mxu0 %v3160
        %5721 = vmatprep.subr.mxu0 %v3165
        %5722 = vmatpush1.msra.mxu0 %v3164
        %5723 = vmatprep.subr.mxu0 %v3169
        %5724 = vmatpush1.msra.mxu0 %v3168
        %5725 = vmatprep.subr.mxu0 %v3173
        %5726 = vmatpush1.msra.mxu0 %v3172
        %5727 = vmatprep.subr.mxu0 %v3177
        %5728 = vmatpush1.msra.mxu0 %v3176
        %5729 = vmatprep.subr.mxu0 %v3181
        %5730 = vmatpush1.msra.mxu0 %v3180
        %5731 = vmatprep.subr.mxu0 %v3185
        %5732 = vmatpush1.msra.mxu0 %v3184
        %5733 = vmatprep.subr.mxu0 %v3189
        %5734 = vmatpush1.msra.mxu0 %v3188
        %5735 = vmatprep.subr.mxu0 %v3193
        %5736 = vmatpush1.msra.mxu0 %v3192
        %5737 = vmatprep.subr.mxu0 %v3197
        %5738 = vmatpush1.msra.mxu0 %v3196
        %5739 = vmatprep.subr.mxu0 %v3201
        %5740 = vmatpush1.msra.mxu0 %v3200
        %5741 = vmatprep.subr.mxu0 %v3205
        %5742 = vmatpush1.msra.mxu0 %v3204
        %5743 = vmatprep.subr.mxu0 %v3209
        %5744 = vmatpush1.msra.mxu0 %v3208
        %5745 = vmatprep.subr.mxu0 %v3213
        %5746 = vmatpush1.msra.mxu0 %v3212
        %5747 = vmatprep.subr.mxu0 %v3217
        %5748 = vmatpush1.msra.mxu0 %v3216
        %5749 = vmatprep.subr.mxu0 %v3221
        %5750 = vmatpush1.msra.mxu0 %v3220
        %5751 = vmatprep.subr.mxu0 %v3225
        %5752 = vmatpush1.msra.mxu0 %v3224
        %5753 = vmatprep.subr.mxu0 %v3229
        %5754 = vmatpush1.msra.mxu0 %v3228
        %5755 = vmatprep.subr.mxu0 %v3233
        %5756 = vmatpush1.msra.mxu0 %v3232
        %5757 = vmatprep.subr.mxu0 %v3237
        %5758 = vmatpush1.msra.mxu0 %v3236
        %5759 = vmatprep.subr.mxu0 %v3241
        %5760 = vmatpush1.msra.mxu0 %v3240
        %5761 = vmatprep.subr.mxu0 %v3245
        %5762 = vmatpush1.msra.mxu0 %v3244
        %5763 = vmatprep.subr.mxu0 %v3249
        %5764 = vmatpush1.msra.mxu0 %v3248
        %5765 = vmatprep.mubr.f32.mxu0 %v3281
        %5766 = vmatmul.mubr.f32.gmra.mrb[0].mxu0 %v3280
        %v5767 = vpop.f32.mrb[0].mxu0
        %v5768 = vadd.f32 %v5691, %v5767
        %v5769 = vpop.f32.mrb[0].mxu0
        %v5770 = vadd.f32 %v5693, %v5769
        %5771 = vmatprep.mubr.f32.mxu0 %v3313
        %5772 = vmatmul.mubr.f32.gmra.mrb[0].mxu0 %v3312
        %v5773 = vpop.f32.mrb[0].mxu0
        %v5774 = vadd.f32 %v5697, %v5773
        %v5775 = vpop.f32.mrb[0].mxu0
        %v5776 = vadd.f32 %v5699, %v5775
        %5777 = vdwg.mxu0
        %v5778 = vmax.f32 %v4536, 0.0
        %v5779 = vmax.f32 %v4538, 0.0
        %v5780 = vmax.f32 %v5768, 0.0
        %v5781 = vmax.f32 %v5770, 0.0
        %v5782 = vmax.f32 %v4542, 0.0
        %v5783 = vmax.f32 %v4544, 0.0
        %v5784 = vmax.f32 %v5774, 0.0
        %v5785 = vmax.f32 %v5776, 0.0
        %5786 = vst [vmem:[%s176] sm:$0xff] %v5778
        %5787 = vst [vmem:[%s176 + $0x8] sm:$0xff] %v5779
        %5788 = vst [vmem:[%s176 + $0x10] sm:$0xff] %v5780
        %5789 = vst [vmem:[%s176 + $0x18] sm:$0xff] %v5781
        %5790 = vst [vmem:[%s176 + $0x20] sm:$0xff] %v5782
        %5791 = vst [vmem:[%s176 + $0x28] sm:$0xff] %v5783
        %5792 = vst [vmem:[%s176 + $0x30] sm:$0xff] %v5784
        %5793 = vst [vmem:[%s176 + $0x38] sm:$0xff] %v5785
        %s5794 = sand.u32 %s75, 1
        %s5795 = scalar_lea.sflag [#allocation4], %s5794
        %s5796 = sand.u32 %s75, 1
        %s5797 = smul.addr %s5796, 64
        %s5798 = scalar_lea.vmem [#allocation7], %s5797
        // Predicated region
        $region37: #{tpu_custom_call.1} parent=27 // pred_check
          %p5799 = pneg %p85
        $region38: #{tpu_custom_call.1} parent=27 // pred_check_branch
          %5801 = sbr.rel (%p5799) target = $region40
        $region39: #{tpu_custom_call.1} parent=27 // pred_region
          %s5802 = smul.u32 4, %s20
          %s5804 = ssub.s32 1024, 1024
          %5805 = vsyncadd %s5795, %s5804
          %s5806 = smul.addr %s5802, 128
          %s5807 = scalar_lea.hbm %s2, %s5806
          %s5808 = sshll.u32 %s5798, 4
          %s5809 = int_to_ptr.vmem [resolvable:$true] %s5808
          %5814 = dma.vmem_to_hbm [thread:$0]  %s5809, 1024, %s5807, %s5795, 512, 4096, 32
        $region40: #{tpu_custom_call.1} parent=27 // pred_fallthru
          _
      $region28: #{tpu_custom_call.1} parent=5 // pred_fallthru
        _
      %p5815 = scmp.le.s32.totalorder 2, %s15
      // Predicated region
      $region41: #{tpu_custom_call.1} parent=5 // pred_check
        %p5816 = pneg %p5815
      $region42: #{tpu_custom_call.1} parent=5 // pred_check_branch
        %5818 = sbr.rel (%p5816) target = $region44
      $region43: #{tpu_custom_call.1} parent=5 // pred_region
        %s5819 = ssub.s32 %s15, 2
        // Predicated region
        $region45: #{tpu_custom_call.1} parent=43 // pred_check
          %p5820 = pneg %p91
        $region46: #{tpu_custom_call.1} parent=43 // pred_check_branch
          %5822 = sbr.rel (%p5820) target = $region48
        $region47: #{tpu_custom_call.1} parent=43 // pred_region
          %s5823 = sand.u32 %s76, 1
          %s5824 = scalar_lea.sflag [#allocation4], %s5823
          %s5825 = sand.u32 %s76, 1
          %s5826 = smul.addr %s5825, 64
          %s5827 = scalar_lea.vmem [#allocation7], %s5826
          %5828 = dma.done %s5824, 1024
        $region48: #{tpu_custom_call.1} parent=43 // pred_fallthru
          _
      $region44: #{tpu_custom_call.1} parent=5 // pred_fallthru
        _
    $region6: #{tpu_custom_call.1} parent=1 // loop_footer
      %s19 = sadd.s32 1, %s15
    $region7: #{tpu_custom_call.1} parent=1 // loop_footer_branch
      %14 = sbr.rel target = $region3
    $region8: #{tpu_custom_call.1} parent=1 // loop_exit
      _
    %5829 = vsyncpa [#allocation3], 1
    %s5830 = scalar_lea.sflag [#allocation3], 1
    %5831 = vsyncpa %s5830, 1
    %5832 = vsyncpa [#allocation6], 1
    %s5833 = scalar_lea.sflag [#allocation6], 1
    %5834 = vsyncpa %s5833, 1
    %5835 = vsyncpa [#allocation4], 1
    %s5836 = scalar_lea.sflag [#allocation4], 1
    %5837 = vsyncpa %s5836, 1

</llo_original>
